<compile_context>
chip_gen: v5e
topology: v5e:2x2
jax: 0.10.0
libtpu: 0.0.40
codegen_flags: <defaults>
</compile_context>

<pallas_src>
import math

import jax
import jax.numpy as jnp
import numpy as np
from jax.experimental import pallas as pl
from jax.experimental.pallas import tpu as pltpu

D_MODEL = 32
N_HEAD = 4
DIM_FF = 64
EPS = 1e-5

# packed matrix slab column layout (per layer), everything contraction-first:
#   [ sa_qkv (D,3D) | sa_out (D,D) | ca_qkv (D,3D) | ca_out (D,D) | ffn_l1 (D,F) ]
W_COLS = 8 * D_MODEL + DIM_FF           # 320
VEC_COLS = 3 * D_MODEL                  # 96 (bias / LayerNorm rows padded to this)
N_VEC = 12                              # bias / LayerNorm rows per layer


def _decoder_kernel(tgt_ref, memcat_ref, qpos_ref, w_ref, w2_ref, vec_ref, out_ref):
    NL = w_ref.shape[0]
    B, L, D = tgt_ref.shape
    S2 = memcat_ref.shape[1]
    S = S2 // 2
    F = w2_ref.shape[1]
    H = N_HEAD
    HD = D // H
    BL = B * L

    t = tgt_ref[...]                       # (B, L, D) f32 running activation
    qpos = qpos_ref[...]                   # (B, L, D)
    # [memory+pos rows | memory rows], pre-concatenated host-side (layer-invariant).
    mc_bf = memcat_ref[...].reshape(B * S2, D).astype(jnp.bfloat16)

    def layer_norm(x, g, b):
        mu = jnp.mean(x, axis=-1, keepdims=True)
        var = jnp.mean(jnp.square(x - mu), axis=-1, keepdims=True)
        return (x - mu) * jax.lax.rsqrt(var + EPS) * g + b

    def attention(q, k, v, w_out, b_out):
        # q: (B, Lq, D) f32; k, v: (B, Lk, D) f32 -- projections with biases added
        # and the softmax scale already folded into q.  w_out: (D, D) bf16,
        # contraction-first.
        Lq = q.shape[1]
        qb = q.astype(jnp.bfloat16)
        kt = jnp.swapaxes(k, 1, 2).astype(jnp.bfloat16)   # (B, D, Lk): ONE transpose
        vb = v.astype(jnp.bfloat16)
        heads = []
        for h in range(H):                                # static unroll over heads
            c0, c1 = h * HD, (h + 1) * HD
            s = jnp.einsum('bqd,bdk->bqk', qb[:, :, c0:c1], kt[:, c0:c1, :],
                           preferred_element_type=jnp.float32)       # (B, Lq, Lk)
            s = s - jnp.max(s, axis=-1, keepdims=True)
            p = jnp.exp(s)
            p = p * pl.reciprocal(jnp.sum(p, axis=-1, keepdims=True), approx=True)
            heads.append(jnp.einsum('bqk,bkd->bqd', p.astype(jnp.bfloat16),
                                    vb[:, :, c0:c1],
                                    preferred_element_type=jnp.float32))
        o = jnp.concatenate(heads, axis=-1)               # (B, Lq, D)
        proj = jnp.dot(o.reshape(B * Lq, D).astype(jnp.bfloat16), w_out,
                       preferred_element_type=jnp.float32)  # single K=D dot
        return proj.reshape(B, Lq, D) + b_out

    for l in range(NL):        # layer l+1 depends on layer l -> sequential unroll
        w = w_ref[l]           # (D, W_COLS)       bf16 contraction-first matrices
        w2 = w2_ref[l]         # (F, D)            bf16 FFN linear2
        vec = vec_ref[l]       # (N_VEC, VEC_COLS) f32 biases + LayerNorm params

        # ---- self attention (post-norm; dropout = identity at eval) ----
        tq_bf = (t + qpos).reshape(BL, D).astype(jnp.bfloat16)
        qk = jnp.dot(tq_bf, w[:, 0:2 * D],
                     preferred_element_type=jnp.float32) + vec[0, 0:2 * D]
        v_sa = jnp.dot(t.reshape(BL, D).astype(jnp.bfloat16), w[:, 2 * D:3 * D],
                       preferred_element_type=jnp.float32) + vec[0, 2 * D:3 * D]
        sa = attention(qk[:, 0:D].reshape(B, L, D),
                       qk[:, D:2 * D].reshape(B, L, D),
                       v_sa.reshape(B, L, D),
                       w[:, 3 * D:4 * D], vec[1, :D])
        t = layer_norm(t + sa, vec[6, :D], vec[7, :D])

        # ---- cross attention (K/V fused over the [memory+pos ; memory] rows) ----
        q_ca = (jnp.dot((t + qpos).reshape(BL, D).astype(jnp.bfloat16),
                        w[:, 4 * D:5 * D], preferred_element_type=jnp.float32)
                + vec[2, 0:D]).reshape(B, L, D)
        kv = jnp.dot(mc_bf, w[:, 5 * D:7 * D],
                     preferred_element_type=jnp.float32).reshape(B, S2, 2 * D)
        k_ca = kv[:, 0:S, 0:D] + vec[2, D:2 * D]             # (memory+pos) @ Wk + bk
        v_ca = kv[:, S:S2, D:2 * D] + vec[2, 2 * D:3 * D]    # memory @ Wv + bv
        ca = attention(q_ca, k_ca, v_ca, w[:, 7 * D:8 * D], vec[3, :D])
        t = layer_norm(t + ca, vec[8, :D], vec[9, :D])

        # ---- feed forward (ReLU) ----
        hmid = jnp.maximum(
            jnp.dot(t.reshape(BL, D).astype(jnp.bfloat16), w[:, 8 * D:8 * D + F],
                    preferred_element_type=jnp.float32) + vec[4, :F], 0.0)
        ff = (jnp.dot(hmid.astype(jnp.bfloat16), w2,
                      preferred_element_type=jnp.float32)
              + vec[5, :D]).reshape(B, L, D)
        t = layer_norm(t + ff, vec[10, :D], vec[11, :D])

        out_ref[l] = t         # emit this layer's intermediate


def _pack_params(layer_params):
    """Stack per-layer params into 3 slabs (pre-transposed, bf16 matrices,
    softmax scale folded into the q projection weights/biases)."""
    D, F = D_MODEL, DIM_FF
    scale = 1.0 / math.sqrt(D // N_HEAD)

    def pad_row(v):
        v = jnp.asarray(v, jnp.float32).reshape(-1)
        return jnp.pad(v, (0, VEC_COLS - v.shape[0]))

    w_slabs, w2_slabs, vec_slabs = [], [], []
    for p in layer_params:
        sa_in = p["sa_in_w"].T                      # (D, 3D) = [Wq | Wk | Wv]
        sa_in = sa_in.at[:, :D].multiply(scale)     # fold 1/sqrt(hd) into Wq
        ca_in = p["ca_in_w"].T
        ca_in = ca_in.at[:, :D].multiply(scale)
        w_slabs.append(jnp.concatenate(
            [sa_in, p["sa_out_w"].T, ca_in, p["ca_out_w"].T, p["l1_w"].T],
            axis=1).astype(jnp.bfloat16))           # (D, W_COLS) bf16
        w2_slabs.append(p["l2_w"].T.astype(jnp.bfloat16))        # (F, D) bf16

        sa_in_b = p["sa_in_b"].reshape(-1).at[:D].multiply(scale)
        ca_in_b = p["ca_in_b"].reshape(-1).at[:D].multiply(scale)
        vec_slabs.append(jnp.stack([
            pad_row(sa_in_b), pad_row(p["sa_out_b"]),
            pad_row(ca_in_b), pad_row(p["ca_out_b"]),
            pad_row(p["l1_b"]), pad_row(p["l2_b"]),
            pad_row(p["n1_w"]), pad_row(p["n1_b"]),
            pad_row(p["n2_w"]), pad_row(p["n2_b"]),
            pad_row(p["n3_w"]), pad_row(p["n3_b"])]))   # (N_VEC, VEC_COLS) f32

    return jnp.stack(w_slabs), jnp.stack(w2_slabs), jnp.stack(vec_slabs)


def transformer_decoder(tgt_lbd, memory_sbd, pos_sbd, qpos_lbd, layer_params):
    """PyTorch-layout entry point: tgt (L,B,D), memory (S,B,D).  Returns
    (num_layers, L, B, D), matching torch.stack(intermediate)."""
    L, B, D = tgt_lbd.shape
    S = memory_sbd.shape[0]
    NL = len(layer_params)

    tgt = jnp.transpose(tgt_lbd, (1, 0, 2))               # (B, L, D)
    mem = jnp.transpose(memory_sbd, (1, 0, 2))            # (B, S, D)
    memk = mem + jnp.transpose(pos_sbd, (1, 0, 2))        # memory + pos (K input)
    qpos = jnp.transpose(qpos_lbd, (1, 0, 2))             # (B, L, D)
    mem_cat = jnp.concatenate([memk, mem], axis=1)        # (B, 2S, D) [K-in ; V-in]

    w_slab, w2_slab, vec_slab = _pack_params(layer_params)

    out = pl.pallas_call(
        _decoder_kernel,
        out_shape=jax.ShapeDtypeStruct((NL, B, L, D), jnp.float32),
        grid=(1,),                                          # single fused step
        in_specs=[
            pl.BlockSpec((B, L, D), lambda i: (0, 0, 0)),              # tgt
            pl.BlockSpec((B, 2 * S, D), lambda i: (0, 0, 0)),          # [mem+pos; mem]
            pl.BlockSpec((B, L, D), lambda i: (0, 0, 0)),              # query_pos
            pl.BlockSpec((NL, D_MODEL, W_COLS), lambda i: (0, 0, 0)),  # matrices
            pl.BlockSpec((NL, DIM_FF, D_MODEL), lambda i: (0, 0, 0)),  # FFN l2
            pl.BlockSpec((NL, N_VEC, VEC_COLS), lambda i: (0, 0, 0)),  # biases / LN
        ],
        out_specs=pl.BlockSpec((NL, B, L, D), lambda i: (0, 0, 0, 0)),
        compiler_params=pltpu.CompilerParams(
            dimension_semantics=("arbitrary",)),
    )(tgt, mem_cat, qpos, w_slab, w2_slab, vec_slab)

    # (NL, B, L, D) -> (NL, L, B, D) once, at the very end
    return jnp.transpose(out, (0, 2, 1, 3))


def init_layer_params(key):
    ks = jax.random.split(key, 12)
    D, F = D_MODEL, DIM_FF

    def n(k, shp, s=0.05):
        return jax.random.normal(k, shp, jnp.float32) * s

    return {
        "sa_in_w": n(ks[0], (3 * D, D)),
        "sa_in_b": n(ks[1], (1, 3 * D), 0.01),
        "sa_out_w": n(ks[2], (D, D)),
        "sa_out_b": n(ks[3], (1, D), 0.01),
        "ca_in_w": n(ks[4], (3 * D, D)),
        "ca_in_b": n(ks[5], (1, 3 * D), 0.01),
        "ca_out_w": n(ks[6], (D, D)),
        "ca_out_b": n(ks[7], (1, D), 0.01),
        "l1_w": n(ks[8], (F, D)),
        "l1_b": n(ks[9], (1, F), 0.01),
        "l2_w": n(ks[10], (D, F)),
        "l2_b": n(ks[11], (1, D), 0.01),
        "n1_w": jnp.ones((1, D), jnp.float32),
        "n1_b": jnp.zeros((1, D), jnp.float32),
        "n2_w": jnp.ones((1, D), jnp.float32),
        "n2_b": jnp.zeros((1, D), jnp.float32),
        "n3_w": jnp.ones((1, D), jnp.float32),
        "n3_b": jnp.zeros((1, D), jnp.float32),
    }


# ----------------- pure-JAX f32 reference (for correctness check) -----------------
def _ref_layer(tgt, mem, pos, qpos, p):
    d, h = D_MODEL, N_HEAD
    hd = d // h

    def ln(x, w, b):
        mu = x.mean(-1, keepdims=True)
        var = ((x - mu) ** 2).mean(-1, keepdims=True)
        return (x - mu) / jnp.sqrt(var + EPS) * w[0] + b[0]

    def mha(qi, ki, vi, inw, inb, ow, ob):
        q = qi @ inw[:d].T + inb[0, :d]
        k = ki @ inw[d:2 * d].T + inb[0, d:2 * d]
        v = vi @ inw[2 * d:].T + inb[0, 2 * d:]
        B, Lq, _ = q.shape
        Lk = k.shape[1]
        q = q.reshape(B, Lq, h, hd).transpose(0, 2, 1, 3) / math.sqrt(hd)
        k = k.reshape(B, Lk, h, hd).transpose(0, 2, 1, 3)
        v = v.reshape(B, Lk, h, hd).transpose(0, 2, 1, 3)
        a = jax.nn.softmax(q @ k.transpose(0, 1, 3, 2), axis=-1)
        o = (a @ v).transpose(0, 2, 1, 3).reshape(B, Lq, d)
        return o @ ow.T + ob[0]

    qk = tgt + qpos
    t = ln(tgt + mha(qk, qk, tgt, p["sa_in_w"], p["sa_in_b"],
                     p["sa_out_w"], p["sa_out_b"]), p["n1_w"], p["n1_b"])
    t = ln(t + mha(t + qpos, mem + pos, mem, p["ca_in_w"], p["ca_in_b"],
                   p["ca_out_w"], p["ca_out_b"]), p["n2_w"], p["n2_b"])
    ff = jnp.maximum(t @ p["l1_w"].T + p["l1_b"][0], 0.0) @ p["l2_w"].T + p["l2_b"][0]
    return ln(t + ff, p["n3_w"], p["n3_b"])


if __name__ == "__main__":
    B, L, S, D = 2, 8, 16, D_MODEL
    num_layers = 2

    key = jax.random.PRNGKey(0)
    kd, kl = jax.random.split(key)
    k1, k2, k3, k4 = jax.random.split(kd, 4)
    tgt = jax.random.normal(k1, (L, B, D), jnp.float32)       # object queries
    memory = jax.random.normal(k2, (S, B, D), jnp.float32)    # encoder output
    pos = jax.random.normal(k3, (S, B, D), jnp.float32)       # memory pos enc
    qpos = jax.random.normal(k4, (L, B, D), jnp.float32)      # query pos emb

    layer_params = [init_layer_params(k) for k in jax.random.split(kl, num_layers)]

    run = jax.jit(transformer_decoder)
    out = run(tgt, memory, pos, qpos, layer_params)
    out = jax.block_until_ready(out)
    assert out.shape == (num_layers, L, B, D)

    # pure-JAX f32 reference check (kernel uses bf16 matmul operands with f32
    # accumulation, so allow a slightly looser tolerance).
    o = jnp.transpose(tgt, (1, 0, 2))
    m = jnp.transpose(memory, (1, 0, 2))
    po = jnp.transpose(pos, (1, 0, 2))
    qp = jnp.transpose(qpos, (1, 0, 2))
    refs = []
    for p in layer_params:
        o = _ref_layer(o, m, po, qp, p)
        refs.append(jnp.transpose(o, (1, 0, 2)))
    ref = jnp.stack(refs)
    np.testing.assert_allclose(np.asarray(out), np.asarray(ref), rtol=5e-2, atol=5e-2)

    print("KERNEL_OK")
</pallas_src>

<mosaic_0001>
module attributes {stable_mosaic.version = 11 : i64} {
  func.func @_decoder_kernel(%arg0: i32, %arg1: memref<2x8x32xf32, #tpu.memory_space<vmem>>, %arg2: memref<2x32x32xf32, #tpu.memory_space<vmem>>, %arg3: memref<2x8x32xf32, #tpu.memory_space<vmem>>, %arg4: memref<2x32x320xbf16, #tpu.memory_space<vmem>>, %arg5: memref<2x64x32xbf16, #tpu.memory_space<vmem>>, %arg6: memref<2x12x96xf32, #tpu.memory_space<vmem>>, %arg7: memref<2x2x8x32xf32, #tpu.memory_space<vmem>>) attributes {dimension_semantics = [#tpu.dimension_semantics<arbitrary>], iteration_bounds = array<i64: 1>, scalar_prefetch = 0 : i64, scratch_operands = 0 : i64, tpu.core_type = #tpu.core_type<tc>, window_params = [{pipeline_mode = #tpu.pipeline_mode<synchronous>, transform_indices = @transform_0, window_bounds = array<i64: 2, 8, 32>}, {pipeline_mode = #tpu.pipeline_mode<synchronous>, transform_indices = @transform_1, window_bounds = array<i64: 2, 32, 32>}, {pipeline_mode = #tpu.pipeline_mode<synchronous>, transform_indices = @transform_2, window_bounds = array<i64: 2, 8, 32>}, {pipeline_mode = #tpu.pipeline_mode<synchronous>, transform_indices = @transform_3, window_bounds = array<i64: 2, 32, 320>}, {pipeline_mode = #tpu.pipeline_mode<synchronous>, transform_indices = @transform_4, window_bounds = array<i64: 2, 64, 32>}, {pipeline_mode = #tpu.pipeline_mode<synchronous>, transform_indices = @transform_5, window_bounds = array<i64: 2, 12, 96>}, {pipeline_mode = #tpu.pipeline_mode<synchronous>, transform_indices = @transform_6, window_bounds = array<i64: 2, 2, 8, 32>}]} {
    %c0 = arith.constant 0 : index
    %c0_0 = arith.constant 0 : index
    %c0_1 = arith.constant 0 : index
    %0 = vector.load %arg1[%c0, %c0_0, %c0_1] : memref<2x8x32xf32, #tpu.memory_space<vmem>>, vector<2x8x32xf32>
    %c0_2 = arith.constant 0 : index
    %c0_3 = arith.constant 0 : index
    %c0_4 = arith.constant 0 : index
    %1 = vector.load %arg3[%c0_2, %c0_3, %c0_4] : memref<2x8x32xf32, #tpu.memory_space<vmem>>, vector<2x8x32xf32>
    %c0_5 = arith.constant 0 : index
    %c0_6 = arith.constant 0 : index
    %c0_7 = arith.constant 0 : index
    %2 = vector.load %arg2[%c0_5, %c0_6, %c0_7] : memref<2x32x32xf32, #tpu.memory_space<vmem>>, vector<2x32x32xf32>
    %3 = vector.shape_cast %2 : vector<2x32x32xf32> to vector<64x32xf32>
    %4 = arith.truncf %3 : vector<64x32xf32> to vector<64x32xbf16>
    %c0_8 = arith.constant 0 : index
    %c0_9 = arith.constant 0 : index
    %c0_10 = arith.constant 0 : index
    %5 = vector.load %arg4[%c0_8, %c0_9, %c0_10] : memref<2x32x320xbf16, #tpu.memory_space<vmem>>, vector<1x32x320xbf16>
    %6 = vector.shape_cast %5 : vector<1x32x320xbf16> to vector<32x320xbf16>
    %c0_11 = arith.constant 0 : index
    %c0_12 = arith.constant 0 : index
    %c0_13 = arith.constant 0 : index
    %7 = vector.load %arg5[%c0_11, %c0_12, %c0_13] : memref<2x64x32xbf16, #tpu.memory_space<vmem>>, vector<1x64x32xbf16>
    %8 = vector.shape_cast %7 : vector<1x64x32xbf16> to vector<64x32xbf16>
    %c0_14 = arith.constant 0 : index
    %c0_15 = arith.constant 0 : index
    %c0_16 = arith.constant 0 : index
    %9 = vector.load %arg6[%c0_14, %c0_15, %c0_16] : memref<2x12x96xf32, #tpu.memory_space<vmem>>, vector<1x12x96xf32>
    %10 = vector.shape_cast %9 : vector<1x12x96xf32> to vector<12x96xf32>
    %11 = arith.addf %0, %1 : vector<2x8x32xf32>
    %12 = vector.shape_cast %11 : vector<2x8x32xf32> to vector<16x32xf32>
    %13 = arith.truncf %12 : vector<16x32xf32> to vector<16x32xbf16>
    %14 = vector.extract_strided_slice %6 {offsets = [0, 0], sizes = [32, 64], strides = [1, 1]} : vector<32x320xbf16> to vector<32x64xbf16>
    %cst = arith.constant dense<0.000000e+00> : vector<16x64xf32>
    %15 = tpu.matmul %13, %14, %cst {dimension_numbers = #tpu.dot_dimension_numbers<[1], [0], [0], [1], [0, 0, 1, 1], [], []>} : vector<16x32xbf16>, vector<32x64xbf16>, vector<16x64xf32> -> vector<16x64xf32>
    %16 = vector.extract_strided_slice %10 {offsets = [0, 0], sizes = [1, 64], strides = [1, 1]} : vector<12x96xf32> to vector<1x64xf32>
    %17 = vector.shape_cast %16 : vector<1x64xf32> to vector<64xf32>
    %18 = vector.shape_cast %17 : vector<64xf32> to vector<1x64xf32>
    %19 = vector.broadcast %18 : vector<1x64xf32> to vector<16x64xf32>
    %20 = arith.addf %15, %19 : vector<16x64xf32>
    %21 = vector.shape_cast %0 : vector<2x8x32xf32> to vector<16x32xf32>
    %22 = arith.truncf %21 : vector<16x32xf32> to vector<16x32xbf16>
    %23 = vector.extract_strided_slice %6 {offsets = [0, 64], sizes = [32, 32], strides = [1, 1]} : vector<32x320xbf16> to vector<32x32xbf16>
    %cst_17 = arith.constant dense<0.000000e+00> : vector<16x32xf32>
    %24 = tpu.matmul %22, %23, %cst_17 {dimension_numbers = #tpu.dot_dimension_numbers<[1], [0], [0], [1], [0, 0, 1, 1], [], []>} : vector<16x32xbf16>, vector<32x32xbf16>, vector<16x32xf32> -> vector<16x32xf32>
    %25 = vector.extract_strided_slice %10 {offsets = [0, 64], sizes = [1, 32], strides = [1, 1]} : vector<12x96xf32> to vector<1x32xf32>
    %26 = vector.shape_cast %25 : vector<1x32xf32> to vector<32xf32>
    %27 = vector.shape_cast %26 : vector<32xf32> to vector<1x32xf32>
    %28 = vector.broadcast %27 : vector<1x32xf32> to vector<16x32xf32>
    %29 = arith.addf %24, %28 : vector<16x32xf32>
    %30 = vector.extract_strided_slice %20 {offsets = [0, 0], sizes = [16, 32], strides = [1, 1]} : vector<16x64xf32> to vector<16x32xf32>
    %31 = vector.shape_cast %30 : vector<16x32xf32> to vector<2x8x32xf32>
    %32 = vector.extract_strided_slice %20 {offsets = [0, 32], sizes = [16, 32], strides = [1, 1]} : vector<16x64xf32> to vector<16x32xf32>
    %33 = vector.shape_cast %32 : vector<16x32xf32> to vector<2x8x32xf32>
    %34 = vector.shape_cast %29 : vector<16x32xf32> to vector<2x8x32xf32>
    %35 = vector.extract_strided_slice %6 {offsets = [0, 96], sizes = [32, 32], strides = [1, 1]} : vector<32x320xbf16> to vector<32x32xbf16>
    %36 = vector.extract_strided_slice %10 {offsets = [1, 0], sizes = [1, 32], strides = [1, 1]} : vector<12x96xf32> to vector<1x32xf32>
    %37 = vector.shape_cast %36 : vector<1x32xf32> to vector<32xf32>
    %38 = arith.truncf %31 : vector<2x8x32xf32> to vector<2x8x32xbf16>
    %39 = tpu.transpose %33, [0, 2, 1] : vector<2x8x32xf32> -> vector<2x32x8xf32>
    %40 = arith.truncf %39 : vector<2x32x8xf32> to vector<2x32x8xbf16>
    %41 = arith.truncf %34 : vector<2x8x32xf32> to vector<2x8x32xbf16>
    %42 = vector.extract_strided_slice %38 {offsets = [0, 0, 0], sizes = [2, 8, 8], strides = [1, 1, 1]} : vector<2x8x32xbf16> to vector<2x8x8xbf16>
    %43 = vector.extract_strided_slice %40 {offsets = [0, 0, 0], sizes = [2, 8, 8], strides = [1, 1, 1]} : vector<2x32x8xbf16> to vector<2x8x8xbf16>
    "tpu.trace_start"() <{level = 10 : i32, message = "bqd,bdk->bqk"}> : () -> ()
    %cst_18 = arith.constant dense<0.000000e+00> : vector<2x8x8xf32>
    %44 = tpu.matmul %42, %43, %cst_18 {dimension_numbers = #tpu.dot_dimension_numbers<[2], [1], [1], [2], [0, 0, 0, 1, 1, 2], [0], [0]>} : vector<2x8x8xbf16>, vector<2x8x8xbf16>, vector<2x8x8xf32> -> vector<2x8x8xf32>
    "tpu.trace_stop"() : () -> ()
    %cst_19 = arith.constant dense<0xFF800000> : vector<2x8xf32>
    %45 = vector.multi_reduction <maximumf>, %44, %cst_19 [2] : vector<2x8x8xf32> to vector<2x8xf32>
    %46 = vector.shape_cast %45 : vector<2x8xf32> to vector<2x8x1xf32>
    %47 = vector.broadcast %46 : vector<2x8x1xf32> to vector<2x8x8xf32>
    %48 = arith.subf %44, %47 : vector<2x8x8xf32>
    %49 = math.exp %48 : vector<2x8x8xf32>
    %cst_20 = arith.constant dense<0.000000e+00> : vector<2x8xf32>
    %50 = vector.multi_reduction <add>, %49, %cst_20 [2] : vector<2x8x8xf32> to vector<2x8xf32>
    %51 = vector.shape_cast %50 : vector<2x8xf32> to vector<2x8x1xf32>
    %52 = tpu.reciprocal %51 {approx = true} : vector<2x8x1xf32> -> vector<2x8x1xf32>
    %53 = vector.broadcast %52 : vector<2x8x1xf32> to vector<2x8x8xf32>
    %54 = arith.mulf %49, %53 : vector<2x8x8xf32>
    %55 = arith.truncf %54 : vector<2x8x8xf32> to vector<2x8x8xbf16>
    %56 = vector.extract_strided_slice %41 {offsets = [0, 0, 0], sizes = [2, 8, 8], strides = [1, 1, 1]} : vector<2x8x32xbf16> to vector<2x8x8xbf16>
    "tpu.trace_start"() <{level = 10 : i32, message = "bqk,bkd->bqd"}> : () -> ()
    %cst_21 = arith.constant dense<0.000000e+00> : vector<2x8x8xf32>
    %57 = tpu.matmul %55, %56, %cst_21 {dimension_numbers = #tpu.dot_dimension_numbers<[2], [1], [1], [2], [0, 0, 0, 1, 1, 2], [0], [0]>} : vector<2x8x8xbf16>, vector<2x8x8xbf16>, vector<2x8x8xf32> -> vector<2x8x8xf32>
    "tpu.trace_stop"() : () -> ()
    %58 = vector.extract_strided_slice %38 {offsets = [0, 0, 8], sizes = [2, 8, 8], strides = [1, 1, 1]} : vector<2x8x32xbf16> to vector<2x8x8xbf16>
    %59 = vector.extract_strided_slice %40 {offsets = [0, 8, 0], sizes = [2, 8, 8], strides = [1, 1, 1]} : vector<2x32x8xbf16> to vector<2x8x8xbf16>
    "tpu.trace_start"() <{level = 10 : i32, message = "bqd,bdk->bqk"}> : () -> ()
    %cst_22 = arith.constant dense<0.000000e+00> : vector<2x8x8xf32>
    %60 = tpu.matmul %58, %59, %cst_22 {dimension_numbers = #tpu.dot_dimension_numbers<[2], [1], [1], [2], [0, 0, 0, 1, 1, 2], [0], [0]>} : vector<2x8x8xbf16>, vector<2x8x8xbf16>, vector<2x8x8xf32> -> vector<2x8x8xf32>
    "tpu.trace_stop"() : () -> ()
    %cst_23 = arith.constant dense<0xFF800000> : vector<2x8xf32>
    %61 = vector.multi_reduction <maximumf>, %60, %cst_23 [2] : vector<2x8x8xf32> to vector<2x8xf32>
    %62 = vector.shape_cast %61 : vector<2x8xf32> to vector<2x8x1xf32>
    %63 = vector.broadcast %62 : vector<2x8x1xf32> to vector<2x8x8xf32>
    %64 = arith.subf %60, %63 : vector<2x8x8xf32>
    %65 = math.exp %64 : vector<2x8x8xf32>
    %cst_24 = arith.constant dense<0.000000e+00> : vector<2x8xf32>
    %66 = vector.multi_reduction <add>, %65, %cst_24 [2] : vector<2x8x8xf32> to vector<2x8xf32>
    %67 = vector.shape_cast %66 : vector<2x8xf32> to vector<2x8x1xf32>
    %68 = tpu.reciprocal %67 {approx = true} : vector<2x8x1xf32> -> vector<2x8x1xf32>
    %69 = vector.broadcast %68 : vector<2x8x1xf32> to vector<2x8x8xf32>
    %70 = arith.mulf %65, %69 : vector<2x8x8xf32>
    %71 = arith.truncf %70 : vector<2x8x8xf32> to vector<2x8x8xbf16>
    %72 = vector.extract_strided_slice %41 {offsets = [0, 0, 8], sizes = [2, 8, 8], strides = [1, 1, 1]} : vector<2x8x32xbf16> to vector<2x8x8xbf16>
    "tpu.trace_start"() <{level = 10 : i32, message = "bqk,bkd->bqd"}> : () -> ()
    %cst_25 = arith.constant dense<0.000000e+00> : vector<2x8x8xf32>
    %73 = tpu.matmul %71, %72, %cst_25 {dimension_numbers = #tpu.dot_dimension_numbers<[2], [1], [1], [2], [0, 0, 0, 1, 1, 2], [0], [0]>} : vector<2x8x8xbf16>, vector<2x8x8xbf16>, vector<2x8x8xf32> -> vector<2x8x8xf32>
    "tpu.trace_stop"() : () -> ()
    %74 = vector.extract_strided_slice %38 {offsets = [0, 0, 16], sizes = [2, 8, 8], strides = [1, 1, 1]} : vector<2x8x32xbf16> to vector<2x8x8xbf16>
    %75 = vector.extract_strided_slice %40 {offsets = [0, 16, 0], sizes = [2, 8, 8], strides = [1, 1, 1]} : vector<2x32x8xbf16> to vector<2x8x8xbf16>
    "tpu.trace_start"() <{level = 10 : i32, message = "bqd,bdk->bqk"}> : () -> ()
    %cst_26 = arith.constant dense<0.000000e+00> : vector<2x8x8xf32>
    %76 = tpu.matmul %74, %75, %cst_26 {dimension_numbers = #tpu.dot_dimension_numbers<[2], [1], [1], [2], [0, 0, 0, 1, 1, 2], [0], [0]>} : vector<2x8x8xbf16>, vector<2x8x8xbf16>, vector<2x8x8xf32> -> vector<2x8x8xf32>
    "tpu.trace_stop"() : () -> ()
    %cst_27 = arith.constant dense<0xFF800000> : vector<2x8xf32>
    %77 = vector.multi_reduction <maximumf>, %76, %cst_27 [2] : vector<2x8x8xf32> to vector<2x8xf32>
    %78 = vector.shape_cast %77 : vector<2x8xf32> to vector<2x8x1xf32>
    %79 = vector.broadcast %78 : vector<2x8x1xf32> to vector<2x8x8xf32>
    %80 = arith.subf %76, %79 : vector<2x8x8xf32>
    %81 = math.exp %80 : vector<2x8x8xf32>
    %cst_28 = arith.constant dense<0.000000e+00> : vector<2x8xf32>
    %82 = vector.multi_reduction <add>, %81, %cst_28 [2] : vector<2x8x8xf32> to vector<2x8xf32>
    %83 = vector.shape_cast %82 : vector<2x8xf32> to vector<2x8x1xf32>
    %84 = tpu.reciprocal %83 {approx = true} : vector<2x8x1xf32> -> vector<2x8x1xf32>
    %85 = vector.broadcast %84 : vector<2x8x1xf32> to vector<2x8x8xf32>
    %86 = arith.mulf %81, %85 : vector<2x8x8xf32>
    %87 = arith.truncf %86 : vector<2x8x8xf32> to vector<2x8x8xbf16>
    %88 = vector.extract_strided_slice %41 {offsets = [0, 0, 16], sizes = [2, 8, 8], strides = [1, 1, 1]} : vector<2x8x32xbf16> to vector<2x8x8xbf16>
    "tpu.trace_start"() <{level = 10 : i32, message = "bqk,bkd->bqd"}> : () -> ()
    %cst_29 = arith.constant dense<0.000000e+00> : vector<2x8x8xf32>
    %89 = tpu.matmul %87, %88, %cst_29 {dimension_numbers = #tpu.dot_dimension_numbers<[2], [1], [1], [2], [0, 0, 0, 1, 1, 2], [0], [0]>} : vector<2x8x8xbf16>, vector<2x8x8xbf16>, vector<2x8x8xf32> -> vector<2x8x8xf32>
    "tpu.trace_stop"() : () -> ()
    %90 = vector.extract_strided_slice %38 {offsets = [0, 0, 24], sizes = [2, 8, 8], strides = [1, 1, 1]} : vector<2x8x32xbf16> to vector<2x8x8xbf16>
    %91 = vector.extract_strided_slice %40 {offsets = [0, 24, 0], sizes = [2, 8, 8], strides = [1, 1, 1]} : vector<2x32x8xbf16> to vector<2x8x8xbf16>
    "tpu.trace_start"() <{level = 10 : i32, message = "bqd,bdk->bqk"}> : () -> ()
    %cst_30 = arith.constant dense<0.000000e+00> : vector<2x8x8xf32>
    %92 = tpu.matmul %90, %91, %cst_30 {dimension_numbers = #tpu.dot_dimension_numbers<[2], [1], [1], [2], [0, 0, 0, 1, 1, 2], [0], [0]>} : vector<2x8x8xbf16>, vector<2x8x8xbf16>, vector<2x8x8xf32> -> vector<2x8x8xf32>
    "tpu.trace_stop"() : () -> ()
    %cst_31 = arith.constant dense<0xFF800000> : vector<2x8xf32>
    %93 = vector.multi_reduction <maximumf>, %92, %cst_31 [2] : vector<2x8x8xf32> to vector<2x8xf32>
    %94 = vector.shape_cast %93 : vector<2x8xf32> to vector<2x8x1xf32>
    %95 = vector.broadcast %94 : vector<2x8x1xf32> to vector<2x8x8xf32>
    %96 = arith.subf %92, %95 : vector<2x8x8xf32>
    %97 = math.exp %96 : vector<2x8x8xf32>
    %cst_32 = arith.constant dense<0.000000e+00> : vector<2x8xf32>
    %98 = vector.multi_reduction <add>, %97, %cst_32 [2] : vector<2x8x8xf32> to vector<2x8xf32>
    %99 = vector.shape_cast %98 : vector<2x8xf32> to vector<2x8x1xf32>
    %100 = tpu.reciprocal %99 {approx = true} : vector<2x8x1xf32> -> vector<2x8x1xf32>
    %101 = vector.broadcast %100 : vector<2x8x1xf32> to vector<2x8x8xf32>
    %102 = arith.mulf %97, %101 : vector<2x8x8xf32>
    %103 = arith.truncf %102 : vector<2x8x8xf32> to vector<2x8x8xbf16>
    %104 = vector.extract_strided_slice %41 {offsets = [0, 0, 24], sizes = [2, 8, 8], strides = [1, 1, 1]} : vector<2x8x32xbf16> to vector<2x8x8xbf16>
    "tpu.trace_start"() <{level = 10 : i32, message = "bqk,bkd->bqd"}> : () -> ()
    %cst_33 = arith.constant dense<0.000000e+00> : vector<2x8x8xf32>
    %105 = tpu.matmul %103, %104, %cst_33 {dimension_numbers = #tpu.dot_dimension_numbers<[2], [1], [1], [2], [0, 0, 0, 1, 1, 2], [0], [0]>} : vector<2x8x8xbf16>, vector<2x8x8xbf16>, vector<2x8x8xf32> -> vector<2x8x8xf32>
    "tpu.trace_stop"() : () -> ()
    %106 = tpu.concatenate %57, %73, %89, %105 in 2 : vector<2x8x8xf32>, vector<2x8x8xf32>, vector<2x8x8xf32>, vector<2x8x8xf32> -> vector<2x8x32xf32>
    %107 = vector.shape_cast %106 : vector<2x8x32xf32> to vector<16x32xf32>
    %108 = arith.truncf %107 : vector<16x32xf32> to vector<16x32xbf16>
    %cst_34 = arith.constant dense<0.000000e+00> : vector<16x32xf32>
    %109 = tpu.matmul %108, %35, %cst_34 {dimension_numbers = #tpu.dot_dimension_numbers<[1], [0], [0], [1], [0, 0, 1, 1], [], []>} : vector<16x32xbf16>, vector<32x32xbf16>, vector<16x32xf32> -> vector<16x32xf32>
    %110 = vector.shape_cast %109 : vector<16x32xf32> to vector<2x8x32xf32>
    %111 = vector.shape_cast %37 : vector<32xf32> to vector<1x1x32xf32>
    %112 = vector.broadcast %111 : vector<1x1x32xf32> to vector<2x8x32xf32>
    %113 = arith.addf %110, %112 : vector<2x8x32xf32>
    %114 = arith.addf %0, %113 : vector<2x8x32xf32>
    %115 = vector.extract_strided_slice %10 {offsets = [6, 0], sizes = [1, 32], strides = [1, 1]} : vector<12x96xf32> to vector<1x32xf32>
    %116 = vector.shape_cast %115 : vector<1x32xf32> to vector<32xf32>
    %117 = vector.extract_strided_slice %10 {offsets = [7, 0], sizes = [1, 32], strides = [1, 1]} : vector<12x96xf32> to vector<1x32xf32>
    %118 = vector.shape_cast %117 : vector<1x32xf32> to vector<32xf32>
    %cst_35 = arith.constant dense<0.000000e+00> : vector<2x8xf32>
    %119 = vector.multi_reduction <add>, %114, %cst_35 [2] : vector<2x8x32xf32> to vector<2x8xf32>
    %120 = vector.shape_cast %119 : vector<2x8xf32> to vector<2x8x1xf32>
    %cst_36 = arith.constant 3.200000e+01 : f32
    %121 = vector.broadcast %cst_36 : f32 to vector<2x8x1xf32>
    %122 = arith.divf %120, %121 : vector<2x8x1xf32>
    %123 = vector.broadcast %122 : vector<2x8x1xf32> to vector<2x8x32xf32>
    %124 = arith.subf %114, %123 : vector<2x8x32xf32>
    %125 = arith.mulf %124, %124 : vector<2x8x32xf32>
    %cst_37 = arith.constant dense<0.000000e+00> : vector<2x8xf32>
    %126 = vector.multi_reduction <add>, %125, %cst_37 [2] : vector<2x8x32xf32> to vector<2x8xf32>
    %127 = vector.shape_cast %126 : vector<2x8xf32> to vector<2x8x1xf32>
    %cst_38 = arith.constant 3.200000e+01 : f32
    %128 = vector.broadcast %cst_38 : f32 to vector<2x8x1xf32>
    %129 = arith.divf %127, %128 : vector<2x8x1xf32>
    %130 = vector.broadcast %122 : vector<2x8x1xf32> to vector<2x8x32xf32>
    %131 = arith.subf %114, %130 : vector<2x8x32xf32>
    %cst_39 = arith.constant 9.99999974E-6 : f32
    %132 = vector.broadcast %cst_39 : f32 to vector<2x8x1xf32>
    %133 = arith.addf %129, %132 : vector<2x8x1xf32>
    %134 = math.rsqrt %133 : vector<2x8x1xf32>
    %135 = vector.broadcast %134 : vector<2x8x1xf32> to vector<2x8x32xf32>
    %136 = arith.mulf %131, %135 : vector<2x8x32xf32>
    %137 = vector.shape_cast %116 : vector<32xf32> to vector<1x1x32xf32>
    %138 = vector.broadcast %137 : vector<1x1x32xf32> to vector<2x8x32xf32>
    %139 = arith.mulf %136, %138 : vector<2x8x32xf32>
    %140 = vector.shape_cast %118 : vector<32xf32> to vector<1x1x32xf32>
    %141 = vector.broadcast %140 : vector<1x1x32xf32> to vector<2x8x32xf32>
    %142 = arith.addf %139, %141 : vector<2x8x32xf32>
    %143 = arith.addf %142, %1 : vector<2x8x32xf32>
    %144 = vector.shape_cast %143 : vector<2x8x32xf32> to vector<16x32xf32>
    %145 = arith.truncf %144 : vector<16x32xf32> to vector<16x32xbf16>
    %146 = vector.extract_strided_slice %6 {offsets = [0, 128], sizes = [32, 32], strides = [1, 1]} : vector<32x320xbf16> to vector<32x32xbf16>
    %cst_40 = arith.constant dense<0.000000e+00> : vector<16x32xf32>
    %147 = tpu.matmul %145, %146, %cst_40 {dimension_numbers = #tpu.dot_dimension_numbers<[1], [0], [0], [1], [0, 0, 1, 1], [], []>} : vector<16x32xbf16>, vector<32x32xbf16>, vector<16x32xf32> -> vector<16x32xf32>
    %148 = vector.extract_strided_slice %10 {offsets = [2, 0], sizes = [1, 32], strides = [1, 1]} : vector<12x96xf32> to vector<1x32xf32>
    %149 = vector.shape_cast %148 : vector<1x32xf32> to vector<32xf32>
    %150 = vector.shape_cast %149 : vector<32xf32> to vector<1x32xf32>
    %151 = vector.broadcast %150 : vector<1x32xf32> to vector<16x32xf32>
    %152 = arith.addf %147, %151 : vector<16x32xf32>
    %153 = vector.shape_cast %152 : vector<16x32xf32> to vector<2x8x32xf32>
    %154 = vector.extract_strided_slice %6 {offsets = [0, 160], sizes = [32, 64], strides = [1, 1]} : vector<32x320xbf16> to vector<32x64xbf16>
    %cst_41 = arith.constant dense<0.000000e+00> : vector<64x64xf32>
    %155 = tpu.matmul %4, %154, %cst_41 {dimension_numbers = #tpu.dot_dimension_numbers<[1], [0], [0], [1], [0, 0, 1, 1], [], []>} : vector<64x32xbf16>, vector<32x64xbf16>, vector<64x64xf32> -> vector<64x64xf32>
    %156 = vector.shape_cast %155 : vector<64x64xf32> to vector<2x32x64xf32>
    %157 = vector.extract_strided_slice %156 {offsets = [0, 0, 0], sizes = [2, 16, 32], strides = [1, 1, 1]} : vector<2x32x64xf32> to vector<2x16x32xf32>
    %158 = vector.extract_strided_slice %10 {offsets = [2, 32], sizes = [1, 32], strides = [1, 1]} : vector<12x96xf32> to vector<1x32xf32>
    %159 = vector.shape_cast %158 : vector<1x32xf32> to vector<32xf32>
    %160 = vector.shape_cast %159 : vector<32xf32> to vector<1x1x32xf32>
    %161 = vector.broadcast %160 : vector<1x1x32xf32> to vector<2x16x32xf32>
    %162 = arith.addf %157, %161 : vector<2x16x32xf32>
    %163 = vector.extract_strided_slice %156 {offsets = [0, 16, 32], sizes = [2, 16, 32], strides = [1, 1, 1]} : vector<2x32x64xf32> to vector<2x16x32xf32>
    %164 = vector.extract_strided_slice %10 {offsets = [2, 64], sizes = [1, 32], strides = [1, 1]} : vector<12x96xf32> to vector<1x32xf32>
    %165 = vector.shape_cast %164 : vector<1x32xf32> to vector<32xf32>
    %166 = vector.shape_cast %165 : vector<32xf32> to vector<1x1x32xf32>
    %167 = vector.broadcast %166 : vector<1x1x32xf32> to vector<2x16x32xf32>
    %168 = arith.addf %163, %167 : vector<2x16x32xf32>
    %169 = vector.extract_strided_slice %6 {offsets = [0, 224], sizes = [32, 32], strides = [1, 1]} : vector<32x320xbf16> to vector<32x32xbf16>
    %170 = vector.extract_strided_slice %10 {offsets = [3, 0], sizes = [1, 32], strides = [1, 1]} : vector<12x96xf32> to vector<1x32xf32>
    %171 = vector.shape_cast %170 : vector<1x32xf32> to vector<32xf32>
    %172 = arith.truncf %153 : vector<2x8x32xf32> to vector<2x8x32xbf16>
    %173 = tpu.transpose %162, [0, 2, 1] : vector<2x16x32xf32> -> vector<2x32x16xf32>
    %174 = arith.truncf %173 : vector<2x32x16xf32> to vector<2x32x16xbf16>
    %175 = arith.truncf %168 : vector<2x16x32xf32> to vector<2x16x32xbf16>
    %176 = vector.extract_strided_slice %172 {offsets = [0, 0, 0], sizes = [2, 8, 8], strides = [1, 1, 1]} : vector<2x8x32xbf16> to vector<2x8x8xbf16>
    %177 = vector.extract_strided_slice %174 {offsets = [0, 0, 0], sizes = [2, 8, 16], strides = [1, 1, 1]} : vector<2x32x16xbf16> to vector<2x8x16xbf16>
    "tpu.trace_start"() <{level = 10 : i32, message = "bqd,bdk->bqk"}> : () -> ()
    %cst_42 = arith.constant dense<0.000000e+00> : vector<2x8x16xf32>
    %178 = tpu.matmul %176, %177, %cst_42 {dimension_numbers = #tpu.dot_dimension_numbers<[2], [1], [1], [2], [0, 0, 0, 1, 1, 2], [0], [0]>} : vector<2x8x8xbf16>, vector<2x8x16xbf16>, vector<2x8x16xf32> -> vector<2x8x16xf32>
    "tpu.trace_stop"() : () -> ()
    %cst_43 = arith.constant dense<0xFF800000> : vector<2x8xf32>
    %179 = vector.multi_reduction <maximumf>, %178, %cst_43 [2] : vector<2x8x16xf32> to vector<2x8xf32>
    %180 = vector.shape_cast %179 : vector<2x8xf32> to vector<2x8x1xf32>
    %181 = vector.broadcast %180 : vector<2x8x1xf32> to vector<2x8x16xf32>
    %182 = arith.subf %178, %181 : vector<2x8x16xf32>
    %183 = math.exp %182 : vector<2x8x16xf32>
    %cst_44 = arith.constant dense<0.000000e+00> : vector<2x8xf32>
    %184 = vector.multi_reduction <add>, %183, %cst_44 [2] : vector<2x8x16xf32> to vector<2x8xf32>
    %185 = vector.shape_cast %184 : vector<2x8xf32> to vector<2x8x1xf32>
    %186 = tpu.reciprocal %185 {approx = true} : vector<2x8x1xf32> -> vector<2x8x1xf32>
    %187 = vector.broadcast %186 : vector<2x8x1xf32> to vector<2x8x16xf32>
    %188 = arith.mulf %183, %187 : vector<2x8x16xf32>
    %189 = arith.truncf %188 : vector<2x8x16xf32> to vector<2x8x16xbf16>
    %190 = vector.extract_strided_slice %175 {offsets = [0, 0, 0], sizes = [2, 16, 8], strides = [1, 1, 1]} : vector<2x16x32xbf16> to vector<2x16x8xbf16>
    "tpu.trace_start"() <{level = 10 : i32, message = "bqk,bkd->bqd"}> : () -> ()
    %cst_45 = arith.constant dense<0.000000e+00> : vector<2x8x8xf32>
    %191 = tpu.matmul %189, %190, %cst_45 {dimension_numbers = #tpu.dot_dimension_numbers<[2], [1], [1], [2], [0, 0, 0, 1, 1, 2], [0], [0]>} : vector<2x8x16xbf16>, vector<2x16x8xbf16>, vector<2x8x8xf32> -> vector<2x8x8xf32>
    "tpu.trace_stop"() : () -> ()
    %192 = vector.extract_strided_slice %172 {offsets = [0, 0, 8], sizes = [2, 8, 8], strides = [1, 1, 1]} : vector<2x8x32xbf16> to vector<2x8x8xbf16>
    %193 = vector.extract_strided_slice %174 {offsets = [0, 8, 0], sizes = [2, 8, 16], strides = [1, 1, 1]} : vector<2x32x16xbf16> to vector<2x8x16xbf16>
    "tpu.trace_start"() <{level = 10 : i32, message = "bqd,bdk->bqk"}> : () -> ()
    %cst_46 = arith.constant dense<0.000000e+00> : vector<2x8x16xf32>
    %194 = tpu.matmul %192, %193, %cst_46 {dimension_numbers = #tpu.dot_dimension_numbers<[2], [1], [1], [2], [0, 0, 0, 1, 1, 2], [0], [0]>} : vector<2x8x8xbf16>, vector<2x8x16xbf16>, vector<2x8x16xf32> -> vector<2x8x16xf32>
    "tpu.trace_stop"() : () -> ()
    %cst_47 = arith.constant dense<0xFF800000> : vector<2x8xf32>
    %195 = vector.multi_reduction <maximumf>, %194, %cst_47 [2] : vector<2x8x16xf32> to vector<2x8xf32>
    %196 = vector.shape_cast %195 : vector<2x8xf32> to vector<2x8x1xf32>
    %197 = vector.broadcast %196 : vector<2x8x1xf32> to vector<2x8x16xf32>
    %198 = arith.subf %194, %197 : vector<2x8x16xf32>
    %199 = math.exp %198 : vector<2x8x16xf32>
    %cst_48 = arith.constant dense<0.000000e+00> : vector<2x8xf32>
    %200 = vector.multi_reduction <add>, %199, %cst_48 [2] : vector<2x8x16xf32> to vector<2x8xf32>
    %201 = vector.shape_cast %200 : vector<2x8xf32> to vector<2x8x1xf32>
    %202 = tpu.reciprocal %201 {approx = true} : vector<2x8x1xf32> -> vector<2x8x1xf32>
    %203 = vector.broadcast %202 : vector<2x8x1xf32> to vector<2x8x16xf32>
    %204 = arith.mulf %199, %203 : vector<2x8x16xf32>
    %205 = arith.truncf %204 : vector<2x8x16xf32> to vector<2x8x16xbf16>
    %206 = vector.extract_strided_slice %175 {offsets = [0, 0, 8], sizes = [2, 16, 8], strides = [1, 1, 1]} : vector<2x16x32xbf16> to vector<2x16x8xbf16>
    "tpu.trace_start"() <{level = 10 : i32, message = "bqk,bkd->bqd"}> : () -> ()
    %cst_49 = arith.constant dense<0.000000e+00> : vector<2x8x8xf32>
    %207 = tpu.matmul %205, %206, %cst_49 {dimension_numbers = #tpu.dot_dimension_numbers<[2], [1], [1], [2], [0, 0, 0, 1, 1, 2], [0], [0]>} : vector<2x8x16xbf16>, vector<2x16x8xbf16>, vector<2x8x8xf32> -> vector<2x8x8xf32>
    "tpu.trace_stop"() : () -> ()
    %208 = vector.extract_strided_slice %172 {offsets = [0, 0, 16], sizes = [2, 8, 8], strides = [1, 1, 1]} : vector<2x8x32xbf16> to vector<2x8x8xbf16>
    %209 = vector.extract_strided_slice %174 {offsets = [0, 16, 0], sizes = [2, 8, 16], strides = [1, 1, 1]} : vector<2x32x16xbf16> to vector<2x8x16xbf16>
    "tpu.trace_start"() <{level = 10 : i32, message = "bqd,bdk->bqk"}> : () -> ()
    %cst_50 = arith.constant dense<0.000000e+00> : vector<2x8x16xf32>
    %210 = tpu.matmul %208, %209, %cst_50 {dimension_numbers = #tpu.dot_dimension_numbers<[2], [1], [1], [2], [0, 0, 0, 1, 1, 2], [0], [0]>} : vector<2x8x8xbf16>, vector<2x8x16xbf16>, vector<2x8x16xf32> -> vector<2x8x16xf32>
    "tpu.trace_stop"() : () -> ()
    %cst_51 = arith.constant dense<0xFF800000> : vector<2x8xf32>
    %211 = vector.multi_reduction <maximumf>, %210, %cst_51 [2] : vector<2x8x16xf32> to vector<2x8xf32>
    %212 = vector.shape_cast %211 : vector<2x8xf32> to vector<2x8x1xf32>
    %213 = vector.broadcast %212 : vector<2x8x1xf32> to vector<2x8x16xf32>
    %214 = arith.subf %210, %213 : vector<2x8x16xf32>
    %215 = math.exp %214 : vector<2x8x16xf32>
    %cst_52 = arith.constant dense<0.000000e+00> : vector<2x8xf32>
    %216 = vector.multi_reduction <add>, %215, %cst_52 [2] : vector<2x8x16xf32> to vector<2x8xf32>
    %217 = vector.shape_cast %216 : vector<2x8xf32> to vector<2x8x1xf32>
    %218 = tpu.reciprocal %217 {approx = true} : vector<2x8x1xf32> -> vector<2x8x1xf32>
    %219 = vector.broadcast %218 : vector<2x8x1xf32> to vector<2x8x16xf32>
    %220 = arith.mulf %215, %219 : vector<2x8x16xf32>
    %221 = arith.truncf %220 : vector<2x8x16xf32> to vector<2x8x16xbf16>
    %222 = vector.extract_strided_slice %175 {offsets = [0, 0, 16], sizes = [2, 16, 8], strides = [1, 1, 1]} : vector<2x16x32xbf16> to vector<2x16x8xbf16>
    "tpu.trace_start"() <{level = 10 : i32, message = "bqk,bkd->bqd"}> : () -> ()
    %cst_53 = arith.constant dense<0.000000e+00> : vector<2x8x8xf32>
    %223 = tpu.matmul %221, %222, %cst_53 {dimension_numbers = #tpu.dot_dimension_numbers<[2], [1], [1], [2], [0, 0, 0, 1, 1, 2], [0], [0]>} : vector<2x8x16xbf16>, vector<2x16x8xbf16>, vector<2x8x8xf32> -> vector<2x8x8xf32>
    "tpu.trace_stop"() : () -> ()
    %224 = vector.extract_strided_slice %172 {offsets = [0, 0, 24], sizes = [2, 8, 8], strides = [1, 1, 1]} : vector<2x8x32xbf16> to vector<2x8x8xbf16>
    %225 = vector.extract_strided_slice %174 {offsets = [0, 24, 0], sizes = [2, 8, 16], strides = [1, 1, 1]} : vector<2x32x16xbf16> to vector<2x8x16xbf16>
    "tpu.trace_start"() <{level = 10 : i32, message = "bqd,bdk->bqk"}> : () -> ()
    %cst_54 = arith.constant dense<0.000000e+00> : vector<2x8x16xf32>
    %226 = tpu.matmul %224, %225, %cst_54 {dimension_numbers = #tpu.dot_dimension_numbers<[2], [1], [1], [2], [0, 0, 0, 1, 1, 2], [0], [0]>} : vector<2x8x8xbf16>, vector<2x8x16xbf16>, vector<2x8x16xf32> -> vector<2x8x16xf32>
    "tpu.trace_stop"() : () -> ()
    %cst_55 = arith.constant dense<0xFF800000> : vector<2x8xf32>
    %227 = vector.multi_reduction <maximumf>, %226, %cst_55 [2] : vector<2x8x16xf32> to vector<2x8xf32>
    %228 = vector.shape_cast %227 : vector<2x8xf32> to vector<2x8x1xf32>
    %229 = vector.broadcast %228 : vector<2x8x1xf32> to vector<2x8x16xf32>
    %230 = arith.subf %226, %229 : vector<2x8x16xf32>
    %231 = math.exp %230 : vector<2x8x16xf32>
    %cst_56 = arith.constant dense<0.000000e+00> : vector<2x8xf32>
    %232 = vector.multi_reduction <add>, %231, %cst_56 [2] : vector<2x8x16xf32> to vector<2x8xf32>
    %233 = vector.shape_cast %232 : vector<2x8xf32> to vector<2x8x1xf32>
    %234 = tpu.reciprocal %233 {approx = true} : vector<2x8x1xf32> -> vector<2x8x1xf32>
    %235 = vector.broadcast %234 : vector<2x8x1xf32> to vector<2x8x16xf32>
    %236 = arith.mulf %231, %235 : vector<2x8x16xf32>
    %237 = arith.truncf %236 : vector<2x8x16xf32> to vector<2x8x16xbf16>
    %238 = vector.extract_strided_slice %175 {offsets = [0, 0, 24], sizes = [2, 16, 8], strides = [1, 1, 1]} : vector<2x16x32xbf16> to vector<2x16x8xbf16>
    "tpu.trace_start"() <{level = 10 : i32, message = "bqk,bkd->bqd"}> : () -> ()
    %cst_57 = arith.constant dense<0.000000e+00> : vector<2x8x8xf32>
    %239 = tpu.matmul %237, %238, %cst_57 {dimension_numbers = #tpu.dot_dimension_numbers<[2], [1], [1], [2], [0, 0, 0, 1, 1, 2], [0], [0]>} : vector<2x8x16xbf16>, vector<2x16x8xbf16>, vector<2x8x8xf32> -> vector<2x8x8xf32>
    "tpu.trace_stop"() : () -> ()
    %240 = tpu.concatenate %191, %207, %223, %239 in 2 : vector<2x8x8xf32>, vector<2x8x8xf32>, vector<2x8x8xf32>, vector<2x8x8xf32> -> vector<2x8x32xf32>
    %241 = vector.shape_cast %240 : vector<2x8x32xf32> to vector<16x32xf32>
    %242 = arith.truncf %241 : vector<16x32xf32> to vector<16x32xbf16>
    %cst_58 = arith.constant dense<0.000000e+00> : vector<16x32xf32>
    %243 = tpu.matmul %242, %169, %cst_58 {dimension_numbers = #tpu.dot_dimension_numbers<[1], [0], [0], [1], [0, 0, 1, 1], [], []>} : vector<16x32xbf16>, vector<32x32xbf16>, vector<16x32xf32> -> vector<16x32xf32>
    %244 = vector.shape_cast %243 : vector<16x32xf32> to vector<2x8x32xf32>
    %245 = vector.shape_cast %171 : vector<32xf32> to vector<1x1x32xf32>
    %246 = vector.broadcast %245 : vector<1x1x32xf32> to vector<2x8x32xf32>
    %247 = arith.addf %244, %246 : vector<2x8x32xf32>
    %248 = arith.addf %142, %247 : vector<2x8x32xf32>
    %249 = vector.extract_strided_slice %10 {offsets = [8, 0], sizes = [1, 32], strides = [1, 1]} : vector<12x96xf32> to vector<1x32xf32>
    %250 = vector.shape_cast %249 : vector<1x32xf32> to vector<32xf32>
    %251 = vector.extract_strided_slice %10 {offsets = [9, 0], sizes = [1, 32], strides = [1, 1]} : vector<12x96xf32> to vector<1x32xf32>
    %252 = vector.shape_cast %251 : vector<1x32xf32> to vector<32xf32>
    %cst_59 = arith.constant dense<0.000000e+00> : vector<2x8xf32>
    %253 = vector.multi_reduction <add>, %248, %cst_59 [2] : vector<2x8x32xf32> to vector<2x8xf32>
    %254 = vector.shape_cast %253 : vector<2x8xf32> to vector<2x8x1xf32>
    %cst_60 = arith.constant 3.200000e+01 : f32
    %255 = vector.broadcast %cst_60 : f32 to vector<2x8x1xf32>
    %256 = arith.divf %254, %255 : vector<2x8x1xf32>
    %257 = vector.broadcast %256 : vector<2x8x1xf32> to vector<2x8x32xf32>
    %258 = arith.subf %248, %257 : vector<2x8x32xf32>
    %259 = arith.mulf %258, %258 : vector<2x8x32xf32>
    %cst_61 = arith.constant dense<0.000000e+00> : vector<2x8xf32>
    %260 = vector.multi_reduction <add>, %259, %cst_61 [2] : vector<2x8x32xf32> to vector<2x8xf32>
    %261 = vector.shape_cast %260 : vector<2x8xf32> to vector<2x8x1xf32>
    %cst_62 = arith.constant 3.200000e+01 : f32
    %262 = vector.broadcast %cst_62 : f32 to vector<2x8x1xf32>
    %263 = arith.divf %261, %262 : vector<2x8x1xf32>
    %264 = vector.broadcast %256 : vector<2x8x1xf32> to vector<2x8x32xf32>
    %265 = arith.subf %248, %264 : vector<2x8x32xf32>
    %cst_63 = arith.constant 9.99999974E-6 : f32
    %266 = vector.broadcast %cst_63 : f32 to vector<2x8x1xf32>
    %267 = arith.addf %263, %266 : vector<2x8x1xf32>
    %268 = math.rsqrt %267 : vector<2x8x1xf32>
    %269 = vector.broadcast %268 : vector<2x8x1xf32> to vector<2x8x32xf32>
    %270 = arith.mulf %265, %269 : vector<2x8x32xf32>
    %271 = vector.shape_cast %250 : vector<32xf32> to vector<1x1x32xf32>
    %272 = vector.broadcast %271 : vector<1x1x32xf32> to vector<2x8x32xf32>
    %273 = arith.mulf %270, %272 : vector<2x8x32xf32>
    %274 = vector.shape_cast %252 : vector<32xf32> to vector<1x1x32xf32>
    %275 = vector.broadcast %274 : vector<1x1x32xf32> to vector<2x8x32xf32>
    %276 = arith.addf %273, %275 : vector<2x8x32xf32>
    %277 = vector.shape_cast %276 : vector<2x8x32xf32> to vector<16x32xf32>
    %278 = arith.truncf %277 : vector<16x32xf32> to vector<16x32xbf16>
    %279 = vector.extract_strided_slice %6 {offsets = [0, 256], sizes = [32, 64], strides = [1, 1]} : vector<32x320xbf16> to vector<32x64xbf16>
    %cst_64 = arith.constant dense<0.000000e+00> : vector<16x64xf32>
    %280 = tpu.matmul %278, %279, %cst_64 {dimension_numbers = #tpu.dot_dimension_numbers<[1], [0], [0], [1], [0, 0, 1, 1], [], []>} : vector<16x32xbf16>, vector<32x64xbf16>, vector<16x64xf32> -> vector<16x64xf32>
    %281 = vector.extract_strided_slice %10 {offsets = [4, 0], sizes = [1, 64], strides = [1, 1]} : vector<12x96xf32> to vector<1x64xf32>
    %282 = vector.shape_cast %281 : vector<1x64xf32> to vector<64xf32>
    %283 = vector.shape_cast %282 : vector<64xf32> to vector<1x64xf32>
    %284 = vector.broadcast %283 : vector<1x64xf32> to vector<16x64xf32>
    %285 = arith.addf %280, %284 : vector<16x64xf32>
    %cst_65 = arith.constant 0.000000e+00 : f32
    %286 = vector.broadcast %cst_65 : f32 to vector<16x64xf32>
    %287 = arith.maximumf %285, %286 : vector<16x64xf32>
    %288 = arith.truncf %287 : vector<16x64xf32> to vector<16x64xbf16>
    %cst_66 = arith.constant dense<0.000000e+00> : vector<16x32xf32>
    %289 = tpu.matmul %288, %8, %cst_66 {dimension_numbers = #tpu.dot_dimension_numbers<[1], [0], [0], [1], [0, 0, 1, 1], [], []>} : vector<16x64xbf16>, vector<64x32xbf16>, vector<16x32xf32> -> vector<16x32xf32>
    %290 = vector.extract_strided_slice %10 {offsets = [5, 0], sizes = [1, 32], strides = [1, 1]} : vector<12x96xf32> to vector<1x32xf32>
    %291 = vector.shape_cast %290 : vector<1x32xf32> to vector<32xf32>
    %292 = vector.shape_cast %291 : vector<32xf32> to vector<1x32xf32>
    %293 = vector.broadcast %292 : vector<1x32xf32> to vector<16x32xf32>
    %294 = arith.addf %289, %293 : vector<16x32xf32>
    %295 = vector.shape_cast %294 : vector<16x32xf32> to vector<2x8x32xf32>
    %296 = arith.addf %276, %295 : vector<2x8x32xf32>
    %297 = vector.extract_strided_slice %10 {offsets = [10, 0], sizes = [1, 32], strides = [1, 1]} : vector<12x96xf32> to vector<1x32xf32>
    %298 = vector.shape_cast %297 : vector<1x32xf32> to vector<32xf32>
    %299 = vector.extract_strided_slice %10 {offsets = [11, 0], sizes = [1, 32], strides = [1, 1]} : vector<12x96xf32> to vector<1x32xf32>
    %300 = vector.shape_cast %299 : vector<1x32xf32> to vector<32xf32>
    %cst_67 = arith.constant dense<0.000000e+00> : vector<2x8xf32>
    %301 = vector.multi_reduction <add>, %296, %cst_67 [2] : vector<2x8x32xf32> to vector<2x8xf32>
    %302 = vector.shape_cast %301 : vector<2x8xf32> to vector<2x8x1xf32>
    %cst_68 = arith.constant 3.200000e+01 : f32
    %303 = vector.broadcast %cst_68 : f32 to vector<2x8x1xf32>
    %304 = arith.divf %302, %303 : vector<2x8x1xf32>
    %305 = vector.broadcast %304 : vector<2x8x1xf32> to vector<2x8x32xf32>
    %306 = arith.subf %296, %305 : vector<2x8x32xf32>
    %307 = arith.mulf %306, %306 : vector<2x8x32xf32>
    %cst_69 = arith.constant dense<0.000000e+00> : vector<2x8xf32>
    %308 = vector.multi_reduction <add>, %307, %cst_69 [2] : vector<2x8x32xf32> to vector<2x8xf32>
    %309 = vector.shape_cast %308 : vector<2x8xf32> to vector<2x8x1xf32>
    %cst_70 = arith.constant 3.200000e+01 : f32
    %310 = vector.broadcast %cst_70 : f32 to vector<2x8x1xf32>
    %311 = arith.divf %309, %310 : vector<2x8x1xf32>
    %312 = vector.broadcast %304 : vector<2x8x1xf32> to vector<2x8x32xf32>
    %313 = arith.subf %296, %312 : vector<2x8x32xf32>
    %cst_71 = arith.constant 9.99999974E-6 : f32
    %314 = vector.broadcast %cst_71 : f32 to vector<2x8x1xf32>
    %315 = arith.addf %311, %314 : vector<2x8x1xf32>
    %316 = math.rsqrt %315 : vector<2x8x1xf32>
    %317 = vector.broadcast %316 : vector<2x8x1xf32> to vector<2x8x32xf32>
    %318 = arith.mulf %313, %317 : vector<2x8x32xf32>
    %319 = vector.shape_cast %298 : vector<32xf32> to vector<1x1x32xf32>
    %320 = vector.broadcast %319 : vector<1x1x32xf32> to vector<2x8x32xf32>
    %321 = arith.mulf %318, %320 : vector<2x8x32xf32>
    %322 = vector.shape_cast %300 : vector<32xf32> to vector<1x1x32xf32>
    %323 = vector.broadcast %322 : vector<1x1x32xf32> to vector<2x8x32xf32>
    %324 = arith.addf %321, %323 : vector<2x8x32xf32>
    %c0_72 = arith.constant 0 : index
    %c0_73 = arith.constant 0 : index
    %c0_74 = arith.constant 0 : index
    %c0_75 = arith.constant 0 : index
    %325 = vector.load %arg7[%c0_72, %c0_73, %c0_74, %c0_75] : memref<2x2x8x32xf32, #tpu.memory_space<vmem>>, vector<1x2x8x32xf32>
    %326 = vector.shape_cast %325 : vector<1x2x8x32xf32> to vector<2x8x32xf32>
    %327 = vector.shape_cast %324 : vector<2x8x32xf32> to vector<1x2x8x32xf32>
    tpu.vector_store %arg7[%c0_72, %c0_73, %c0_74, %c0_75], %327 {strides = array<i32>} : memref<2x2x8x32xf32, #tpu.memory_space<vmem>>, vector<1x2x8x32xf32>,
    %c1 = arith.constant 1 : index
    %c0_76 = arith.constant 0 : index
    %c0_77 = arith.constant 0 : index
    %328 = vector.load %arg4[%c1, %c0_76, %c0_77] : memref<2x32x320xbf16, #tpu.memory_space<vmem>>, vector<1x32x320xbf16>
    %329 = vector.shape_cast %328 : vector<1x32x320xbf16> to vector<32x320xbf16>
    %c1_78 = arith.constant 1 : index
    %c0_79 = arith.constant 0 : index
    %c0_80 = arith.constant 0 : index
    %330 = vector.load %arg5[%c1_78, %c0_79, %c0_80] : memref<2x64x32xbf16, #tpu.memory_space<vmem>>, vector<1x64x32xbf16>
    %331 = vector.shape_cast %330 : vector<1x64x32xbf16> to vector<64x32xbf16>
    %c1_81 = arith.constant 1 : index
    %c0_82 = arith.constant 0 : index
    %c0_83 = arith.constant 0 : index
    %332 = vector.load %arg6[%c1_81, %c0_82, %c0_83] : memref<2x12x96xf32, #tpu.memory_space<vmem>>, vector<1x12x96xf32>
    %333 = vector.shape_cast %332 : vector<1x12x96xf32> to vector<12x96xf32>
    %334 = arith.addf %324, %1 : vector<2x8x32xf32>
    %335 = vector.shape_cast %334 : vector<2x8x32xf32> to vector<16x32xf32>
    %336 = arith.truncf %335 : vector<16x32xf32> to vector<16x32xbf16>
    %337 = vector.extract_strided_slice %329 {offsets = [0, 0], sizes = [32, 64], strides = [1, 1]} : vector<32x320xbf16> to vector<32x64xbf16>
    %cst_84 = arith.constant dense<0.000000e+00> : vector<16x64xf32>
    %338 = tpu.matmul %336, %337, %cst_84 {dimension_numbers = #tpu.dot_dimension_numbers<[1], [0], [0], [1], [0, 0, 1, 1], [], []>} : vector<16x32xbf16>, vector<32x64xbf16>, vector<16x64xf32> -> vector<16x64xf32>
    %339 = vector.extract_strided_slice %333 {offsets = [0, 0], sizes = [1, 64], strides = [1, 1]} : vector<12x96xf32> to vector<1x64xf32>
    %340 = vector.shape_cast %339 : vector<1x64xf32> to vector<64xf32>
    %341 = vector.shape_cast %340 : vector<64xf32> to vector<1x64xf32>
    %342 = vector.broadcast %341 : vector<1x64xf32> to vector<16x64xf32>
    %343 = arith.addf %338, %342 : vector<16x64xf32>
    %344 = vector.shape_cast %324 : vector<2x8x32xf32> to vector<16x32xf32>
    %345 = arith.truncf %344 : vector<16x32xf32> to vector<16x32xbf16>
    %346 = vector.extract_strided_slice %329 {offsets = [0, 64], sizes = [32, 32], strides = [1, 1]} : vector<32x320xbf16> to vector<32x32xbf16>
    %cst_85 = arith.constant dense<0.000000e+00> : vector<16x32xf32>
    %347 = tpu.matmul %345, %346, %cst_85 {dimension_numbers = #tpu.dot_dimension_numbers<[1], [0], [0], [1], [0, 0, 1, 1], [], []>} : vector<16x32xbf16>, vector<32x32xbf16>, vector<16x32xf32> -> vector<16x32xf32>
    %348 = vector.extract_strided_slice %333 {offsets = [0, 64], sizes = [1, 32], strides = [1, 1]} : vector<12x96xf32> to vector<1x32xf32>
    %349 = vector.shape_cast %348 : vector<1x32xf32> to vector<32xf32>
    %350 = vector.shape_cast %349 : vector<32xf32> to vector<1x32xf32>
    %351 = vector.broadcast %350 : vector<1x32xf32> to vector<16x32xf32>
    %352 = arith.addf %347, %351 : vector<16x32xf32>
    %353 = vector.extract_strided_slice %343 {offsets = [0, 0], sizes = [16, 32], strides = [1, 1]} : vector<16x64xf32> to vector<16x32xf32>
    %354 = vector.shape_cast %353 : vector<16x32xf32> to vector<2x8x32xf32>
    %355 = vector.extract_strided_slice %343 {offsets = [0, 32], sizes = [16, 32], strides = [1, 1]} : vector<16x64xf32> to vector<16x32xf32>
    %356 = vector.shape_cast %355 : vector<16x32xf32> to vector<2x8x32xf32>
    %357 = vector.shape_cast %352 : vector<16x32xf32> to vector<2x8x32xf32>
    %358 = vector.extract_strided_slice %329 {offsets = [0, 96], sizes = [32, 32], strides = [1, 1]} : vector<32x320xbf16> to vector<32x32xbf16>
    %359 = vector.extract_strided_slice %333 {offsets = [1, 0], sizes = [1, 32], strides = [1, 1]} : vector<12x96xf32> to vector<1x32xf32>
    %360 = vector.shape_cast %359 : vector<1x32xf32> to vector<32xf32>
    %361 = arith.truncf %354 : vector<2x8x32xf32> to vector<2x8x32xbf16>
    %362 = tpu.transpose %356, [0, 2, 1] : vector<2x8x32xf32> -> vector<2x32x8xf32>
    %363 = arith.truncf %362 : vector<2x32x8xf32> to vector<2x32x8xbf16>
    %364 = arith.truncf %357 : vector<2x8x32xf32> to vector<2x8x32xbf16>
    %365 = vector.extract_strided_slice %361 {offsets = [0, 0, 0], sizes = [2, 8, 8], strides = [1, 1, 1]} : vector<2x8x32xbf16> to vector<2x8x8xbf16>
    %366 = vector.extract_strided_slice %363 {offsets = [0, 0, 0], sizes = [2, 8, 8], strides = [1, 1, 1]} : vector<2x32x8xbf16> to vector<2x8x8xbf16>
    "tpu.trace_start"() <{level = 10 : i32, message = "bqd,bdk->bqk"}> : () -> ()
    %cst_86 = arith.constant dense<0.000000e+00> : vector<2x8x8xf32>
    %367 = tpu.matmul %365, %366, %cst_86 {dimension_numbers = #tpu.dot_dimension_numbers<[2], [1], [1], [2], [0, 0, 0, 1, 1, 2], [0], [0]>} : vector<2x8x8xbf16>, vector<2x8x8xbf16>, vector<2x8x8xf32> -> vector<2x8x8xf32>
    "tpu.trace_stop"() : () -> ()
    %cst_87 = arith.constant dense<0xFF800000> : vector<2x8xf32>
    %368 = vector.multi_reduction <maximumf>, %367, %cst_87 [2] : vector<2x8x8xf32> to vector<2x8xf32>
    %369 = vector.shape_cast %368 : vector<2x8xf32> to vector<2x8x1xf32>
    %370 = vector.broadcast %369 : vector<2x8x1xf32> to vector<2x8x8xf32>
    %371 = arith.subf %367, %370 : vector<2x8x8xf32>
    %372 = math.exp %371 : vector<2x8x8xf32>
    %cst_88 = arith.constant dense<0.000000e+00> : vector<2x8xf32>
    %373 = vector.multi_reduction <add>, %372, %cst_88 [2] : vector<2x8x8xf32> to vector<2x8xf32>
    %374 = vector.shape_cast %373 : vector<2x8xf32> to vector<2x8x1xf32>
    %375 = tpu.reciprocal %374 {approx = true} : vector<2x8x1xf32> -> vector<2x8x1xf32>
    %376 = vector.broadcast %375 : vector<2x8x1xf32> to vector<2x8x8xf32>
    %377 = arith.mulf %372, %376 : vector<2x8x8xf32>
    %378 = arith.truncf %377 : vector<2x8x8xf32> to vector<2x8x8xbf16>
    %379 = vector.extract_strided_slice %364 {offsets = [0, 0, 0], sizes = [2, 8, 8], strides = [1, 1, 1]} : vector<2x8x32xbf16> to vector<2x8x8xbf16>
    "tpu.trace_start"() <{level = 10 : i32, message = "bqk,bkd->bqd"}> : () -> ()
    %cst_89 = arith.constant dense<0.000000e+00> : vector<2x8x8xf32>
    %380 = tpu.matmul %378, %379, %cst_89 {dimension_numbers = #tpu.dot_dimension_numbers<[2], [1], [1], [2], [0, 0, 0, 1, 1, 2], [0], [0]>} : vector<2x8x8xbf16>, vector<2x8x8xbf16>, vector<2x8x8xf32> -> vector<2x8x8xf32>
    "tpu.trace_stop"() : () -> ()
    %381 = vector.extract_strided_slice %361 {offsets = [0, 0, 8], sizes = [2, 8, 8], strides = [1, 1, 1]} : vector<2x8x32xbf16> to vector<2x8x8xbf16>
    %382 = vector.extract_strided_slice %363 {offsets = [0, 8, 0], sizes = [2, 8, 8], strides = [1, 1, 1]} : vector<2x32x8xbf16> to vector<2x8x8xbf16>
    "tpu.trace_start"() <{level = 10 : i32, message = "bqd,bdk->bqk"}> : () -> ()
    %cst_90 = arith.constant dense<0.000000e+00> : vector<2x8x8xf32>
    %383 = tpu.matmul %381, %382, %cst_90 {dimension_numbers = #tpu.dot_dimension_numbers<[2], [1], [1], [2], [0, 0, 0, 1, 1, 2], [0], [0]>} : vector<2x8x8xbf16>, vector<2x8x8xbf16>, vector<2x8x8xf32> -> vector<2x8x8xf32>
    "tpu.trace_stop"() : () -> ()
    %cst_91 = arith.constant dense<0xFF800000> : vector<2x8xf32>
    %384 = vector.multi_reduction <maximumf>, %383, %cst_91 [2] : vector<2x8x8xf32> to vector<2x8xf32>
    %385 = vector.shape_cast %384 : vector<2x8xf32> to vector<2x8x1xf32>
    %386 = vector.broadcast %385 : vector<2x8x1xf32> to vector<2x8x8xf32>
    %387 = arith.subf %383, %386 : vector<2x8x8xf32>
    %388 = math.exp %387 : vector<2x8x8xf32>
    %cst_92 = arith.constant dense<0.000000e+00> : vector<2x8xf32>
    %389 = vector.multi_reduction <add>, %388, %cst_92 [2] : vector<2x8x8xf32> to vector<2x8xf32>
    %390 = vector.shape_cast %389 : vector<2x8xf32> to vector<2x8x1xf32>
    %391 = tpu.reciprocal %390 {approx = true} : vector<2x8x1xf32> -> vector<2x8x1xf32>
    %392 = vector.broadcast %391 : vector<2x8x1xf32> to vector<2x8x8xf32>
    %393 = arith.mulf %388, %392 : vector<2x8x8xf32>
    %394 = arith.truncf %393 : vector<2x8x8xf32> to vector<2x8x8xbf16>
    %395 = vector.extract_strided_slice %364 {offsets = [0, 0, 8], sizes = [2, 8, 8], strides = [1, 1, 1]} : vector<2x8x32xbf16> to vector<2x8x8xbf16>
    "tpu.trace_start"() <{level = 10 : i32, message = "bqk,bkd->bqd"}> : () -> ()
    %cst_93 = arith.constant dense<0.000000e+00> : vector<2x8x8xf32>
    %396 = tpu.matmul %394, %395, %cst_93 {dimension_numbers = #tpu.dot_dimension_numbers<[2], [1], [1], [2], [0, 0, 0, 1, 1, 2], [0], [0]>} : vector<2x8x8xbf16>, vector<2x8x8xbf16>, vector<2x8x8xf32> -> vector<2x8x8xf32>
    "tpu.trace_stop"() : () -> ()
    %397 = vector.extract_strided_slice %361 {offsets = [0, 0, 16], sizes = [2, 8, 8], strides = [1, 1, 1]} : vector<2x8x32xbf16> to vector<2x8x8xbf16>
    %398 = vector.extract_strided_slice %363 {offsets = [0, 16, 0], sizes = [2, 8, 8], strides = [1, 1, 1]} : vector<2x32x8xbf16> to vector<2x8x8xbf16>
    "tpu.trace_start"() <{level = 10 : i32, message = "bqd,bdk->bqk"}> : () -> ()
    %cst_94 = arith.constant dense<0.000000e+00> : vector<2x8x8xf32>
    %399 = tpu.matmul %397, %398, %cst_94 {dimension_numbers = #tpu.dot_dimension_numbers<[2], [1], [1], [2], [0, 0, 0, 1, 1, 2], [0], [0]>} : vector<2x8x8xbf16>, vector<2x8x8xbf16>, vector<2x8x8xf32> -> vector<2x8x8xf32>
    "tpu.trace_stop"() : () -> ()
    %cst_95 = arith.constant dense<0xFF800000> : vector<2x8xf32>
    %400 = vector.multi_reduction <maximumf>, %399, %cst_95 [2] : vector<2x8x8xf32> to vector<2x8xf32>
    %401 = vector.shape_cast %400 : vector<2x8xf32> to vector<2x8x1xf32>
    %402 = vector.broadcast %401 : vector<2x8x1xf32> to vector<2x8x8xf32>
    %403 = arith.subf %399, %402 : vector<2x8x8xf32>
    %404 = math.exp %403 : vector<2x8x8xf32>
    %cst_96 = arith.constant dense<0.000000e+00> : vector<2x8xf32>
    %405 = vector.multi_reduction <add>, %404, %cst_96 [2] : vector<2x8x8xf32> to vector<2x8xf32>
    %406 = vector.shape_cast %405 : vector<2x8xf32> to vector<2x8x1xf32>
    %407 = tpu.reciprocal %406 {approx = true} : vector<2x8x1xf32> -> vector<2x8x1xf32>
    %408 = vector.broadcast %407 : vector<2x8x1xf32> to vector<2x8x8xf32>
    %409 = arith.mulf %404, %408 : vector<2x8x8xf32>
    %410 = arith.truncf %409 : vector<2x8x8xf32> to vector<2x8x8xbf16>
    %411 = vector.extract_strided_slice %364 {offsets = [0, 0, 16], sizes = [2, 8, 8], strides = [1, 1, 1]} : vector<2x8x32xbf16> to vector<2x8x8xbf16>
    "tpu.trace_start"() <{level = 10 : i32, message = "bqk,bkd->bqd"}> : () -> ()
    %cst_97 = arith.constant dense<0.000000e+00> : vector<2x8x8xf32>
    %412 = tpu.matmul %410, %411, %cst_97 {dimension_numbers = #tpu.dot_dimension_numbers<[2], [1], [1], [2], [0, 0, 0, 1, 1, 2], [0], [0]>} : vector<2x8x8xbf16>, vector<2x8x8xbf16>, vector<2x8x8xf32> -> vector<2x8x8xf32>
    "tpu.trace_stop"() : () -> ()
    %413 = vector.extract_strided_slice %361 {offsets = [0, 0, 24], sizes = [2, 8, 8], strides = [1, 1, 1]} : vector<2x8x32xbf16> to vector<2x8x8xbf16>
    %414 = vector.extract_strided_slice %363 {offsets = [0, 24, 0], sizes = [2, 8, 8], strides = [1, 1, 1]} : vector<2x32x8xbf16> to vector<2x8x8xbf16>
    "tpu.trace_start"() <{level = 10 : i32, message = "bqd,bdk->bqk"}> : () -> ()
    %cst_98 = arith.constant dense<0.000000e+00> : vector<2x8x8xf32>
    %415 = tpu.matmul %413, %414, %cst_98 {dimension_numbers = #tpu.dot_dimension_numbers<[2], [1], [1], [2], [0, 0, 0, 1, 1, 2], [0], [0]>} : vector<2x8x8xbf16>, vector<2x8x8xbf16>, vector<2x8x8xf32> -> vector<2x8x8xf32>
    "tpu.trace_stop"() : () -> ()
    %cst_99 = arith.constant dense<0xFF800000> : vector<2x8xf32>
    %416 = vector.multi_reduction <maximumf>, %415, %cst_99 [2] : vector<2x8x8xf32> to vector<2x8xf32>
    %417 = vector.shape_cast %416 : vector<2x8xf32> to vector<2x8x1xf32>
    %418 = vector.broadcast %417 : vector<2x8x1xf32> to vector<2x8x8xf32>
    %419 = arith.subf %415, %418 : vector<2x8x8xf32>
    %420 = math.exp %419 : vector<2x8x8xf32>
    %cst_100 = arith.constant dense<0.000000e+00> : vector<2x8xf32>
    %421 = vector.multi_reduction <add>, %420, %cst_100 [2] : vector<2x8x8xf32> to vector<2x8xf32>
    %422 = vector.shape_cast %421 : vector<2x8xf32> to vector<2x8x1xf32>
    %423 = tpu.reciprocal %422 {approx = true} : vector<2x8x1xf32> -> vector<2x8x1xf32>
    %424 = vector.broadcast %423 : vector<2x8x1xf32> to vector<2x8x8xf32>
    %425 = arith.mulf %420, %424 : vector<2x8x8xf32>
    %426 = arith.truncf %425 : vector<2x8x8xf32> to vector<2x8x8xbf16>
    %427 = vector.extract_strided_slice %364 {offsets = [0, 0, 24], sizes = [2, 8, 8], strides = [1, 1, 1]} : vector<2x8x32xbf16> to vector<2x8x8xbf16>
    "tpu.trace_start"() <{level = 10 : i32, message = "bqk,bkd->bqd"}> : () -> ()
    %cst_101 = arith.constant dense<0.000000e+00> : vector<2x8x8xf32>
    %428 = tpu.matmul %426, %427, %cst_101 {dimension_numbers = #tpu.dot_dimension_numbers<[2], [1], [1], [2], [0, 0, 0, 1, 1, 2], [0], [0]>} : vector<2x8x8xbf16>, vector<2x8x8xbf16>, vector<2x8x8xf32> -> vector<2x8x8xf32>
    "tpu.trace_stop"() : () -> ()
    %429 = tpu.concatenate %380, %396, %412, %428 in 2 : vector<2x8x8xf32>, vector<2x8x8xf32>, vector<2x8x8xf32>, vector<2x8x8xf32> -> vector<2x8x32xf32>
    %430 = vector.shape_cast %429 : vector<2x8x32xf32> to vector<16x32xf32>
    %431 = arith.truncf %430 : vector<16x32xf32> to vector<16x32xbf16>
    %cst_102 = arith.constant dense<0.000000e+00> : vector<16x32xf32>
    %432 = tpu.matmul %431, %358, %cst_102 {dimension_numbers = #tpu.dot_dimension_numbers<[1], [0], [0], [1], [0, 0, 1, 1], [], []>} : vector<16x32xbf16>, vector<32x32xbf16>, vector<16x32xf32> -> vector<16x32xf32>
    %433 = vector.shape_cast %432 : vector<16x32xf32> to vector<2x8x32xf32>
    %434 = vector.shape_cast %360 : vector<32xf32> to vector<1x1x32xf32>
    %435 = vector.broadcast %434 : vector<1x1x32xf32> to vector<2x8x32xf32>
    %436 = arith.addf %433, %435 : vector<2x8x32xf32>
    %437 = arith.addf %324, %436 : vector<2x8x32xf32>
    %438 = vector.extract_strided_slice %333 {offsets = [6, 0], sizes = [1, 32], strides = [1, 1]} : vector<12x96xf32> to vector<1x32xf32>
    %439 = vector.shape_cast %438 : vector<1x32xf32> to vector<32xf32>
    %440 = vector.extract_strided_slice %333 {offsets = [7, 0], sizes = [1, 32], strides = [1, 1]} : vector<12x96xf32> to vector<1x32xf32>
    %441 = vector.shape_cast %440 : vector<1x32xf32> to vector<32xf32>
    %cst_103 = arith.constant dense<0.000000e+00> : vector<2x8xf32>
    %442 = vector.multi_reduction <add>, %437, %cst_103 [2] : vector<2x8x32xf32> to vector<2x8xf32>
    %443 = vector.shape_cast %442 : vector<2x8xf32> to vector<2x8x1xf32>
    %cst_104 = arith.constant 3.200000e+01 : f32
    %444 = vector.broadcast %cst_104 : f32 to vector<2x8x1xf32>
    %445 = arith.divf %443, %444 : vector<2x8x1xf32>
    %446 = vector.broadcast %445 : vector<2x8x1xf32> to vector<2x8x32xf32>
    %447 = arith.subf %437, %446 : vector<2x8x32xf32>
    %448 = arith.mulf %447, %447 : vector<2x8x32xf32>
    %cst_105 = arith.constant dense<0.000000e+00> : vector<2x8xf32>
    %449 = vector.multi_reduction <add>, %448, %cst_105 [2] : vector<2x8x32xf32> to vector<2x8xf32>
    %450 = vector.shape_cast %449 : vector<2x8xf32> to vector<2x8x1xf32>
    %cst_106 = arith.constant 3.200000e+01 : f32
    %451 = vector.broadcast %cst_106 : f32 to vector<2x8x1xf32>
    %452 = arith.divf %450, %451 : vector<2x8x1xf32>
    %453 = vector.broadcast %445 : vector<2x8x1xf32> to vector<2x8x32xf32>
    %454 = arith.subf %437, %453 : vector<2x8x32xf32>
    %cst_107 = arith.constant 9.99999974E-6 : f32
    %455 = vector.broadcast %cst_107 : f32 to vector<2x8x1xf32>
    %456 = arith.addf %452, %455 : vector<2x8x1xf32>
    %457 = math.rsqrt %456 : vector<2x8x1xf32>
    %458 = vector.broadcast %457 : vector<2x8x1xf32> to vector<2x8x32xf32>
    %459 = arith.mulf %454, %458 : vector<2x8x32xf32>
    %460 = vector.shape_cast %439 : vector<32xf32> to vector<1x1x32xf32>
    %461 = vector.broadcast %460 : vector<1x1x32xf32> to vector<2x8x32xf32>
    %462 = arith.mulf %459, %461 : vector<2x8x32xf32>
    %463 = vector.shape_cast %441 : vector<32xf32> to vector<1x1x32xf32>
    %464 = vector.broadcast %463 : vector<1x1x32xf32> to vector<2x8x32xf32>
    %465 = arith.addf %462, %464 : vector<2x8x32xf32>
    %466 = arith.addf %465, %1 : vector<2x8x32xf32>
    %467 = vector.shape_cast %466 : vector<2x8x32xf32> to vector<16x32xf32>
    %468 = arith.truncf %467 : vector<16x32xf32> to vector<16x32xbf16>
    %469 = vector.extract_strided_slice %329 {offsets = [0, 128], sizes = [32, 32], strides = [1, 1]} : vector<32x320xbf16> to vector<32x32xbf16>
    %cst_108 = arith.constant dense<0.000000e+00> : vector<16x32xf32>
    %470 = tpu.matmul %468, %469, %cst_108 {dimension_numbers = #tpu.dot_dimension_numbers<[1], [0], [0], [1], [0, 0, 1, 1], [], []>} : vector<16x32xbf16>, vector<32x32xbf16>, vector<16x32xf32> -> vector<16x32xf32>
    %471 = vector.extract_strided_slice %333 {offsets = [2, 0], sizes = [1, 32], strides = [1, 1]} : vector<12x96xf32> to vector<1x32xf32>
    %472 = vector.shape_cast %471 : vector<1x32xf32> to vector<32xf32>
    %473 = vector.shape_cast %472 : vector<32xf32> to vector<1x32xf32>
    %474 = vector.broadcast %473 : vector<1x32xf32> to vector<16x32xf32>
    %475 = arith.addf %470, %474 : vector<16x32xf32>
    %476 = vector.shape_cast %475 : vector<16x32xf32> to vector<2x8x32xf32>
    %477 = vector.extract_strided_slice %329 {offsets = [0, 160], sizes = [32, 64], strides = [1, 1]} : vector<32x320xbf16> to vector<32x64xbf16>
    %cst_109 = arith.constant dense<0.000000e+00> : vector<64x64xf32>
    %478 = tpu.matmul %4, %477, %cst_109 {dimension_numbers = #tpu.dot_dimension_numbers<[1], [0], [0], [1], [0, 0, 1, 1], [], []>} : vector<64x32xbf16>, vector<32x64xbf16>, vector<64x64xf32> -> vector<64x64xf32>
    %479 = vector.shape_cast %478 : vector<64x64xf32> to vector<2x32x64xf32>
    %480 = vector.extract_strided_slice %479 {offsets = [0, 0, 0], sizes = [2, 16, 32], strides = [1, 1, 1]} : vector<2x32x64xf32> to vector<2x16x32xf32>
    %481 = vector.extract_strided_slice %333 {offsets = [2, 32], sizes = [1, 32], strides = [1, 1]} : vector<12x96xf32> to vector<1x32xf32>
    %482 = vector.shape_cast %481 : vector<1x32xf32> to vector<32xf32>
    %483 = vector.shape_cast %482 : vector<32xf32> to vector<1x1x32xf32>
    %484 = vector.broadcast %483 : vector<1x1x32xf32> to vector<2x16x32xf32>
    %485 = arith.addf %480, %484 : vector<2x16x32xf32>
    %486 = vector.extract_strided_slice %479 {offsets = [0, 16, 32], sizes = [2, 16, 32], strides = [1, 1, 1]} : vector<2x32x64xf32> to vector<2x16x32xf32>
    %487 = vector.extract_strided_slice %333 {offsets = [2, 64], sizes = [1, 32], strides = [1, 1]} : vector<12x96xf32> to vector<1x32xf32>
    %488 = vector.shape_cast %487 : vector<1x32xf32> to vector<32xf32>
    %489 = vector.shape_cast %488 : vector<32xf32> to vector<1x1x32xf32>
    %490 = vector.broadcast %489 : vector<1x1x32xf32> to vector<2x16x32xf32>
    %491 = arith.addf %486, %490 : vector<2x16x32xf32>
    %492 = vector.extract_strided_slice %329 {offsets = [0, 224], sizes = [32, 32], strides = [1, 1]} : vector<32x320xbf16> to vector<32x32xbf16>
    %493 = vector.extract_strided_slice %333 {offsets = [3, 0], sizes = [1, 32], strides = [1, 1]} : vector<12x96xf32> to vector<1x32xf32>
    %494 = vector.shape_cast %493 : vector<1x32xf32> to vector<32xf32>
    %495 = arith.truncf %476 : vector<2x8x32xf32> to vector<2x8x32xbf16>
    %496 = tpu.transpose %485, [0, 2, 1] : vector<2x16x32xf32> -> vector<2x32x16xf32>
    %497 = arith.truncf %496 : vector<2x32x16xf32> to vector<2x32x16xbf16>
    %498 = arith.truncf %491 : vector<2x16x32xf32> to vector<2x16x32xbf16>
    %499 = vector.extract_strided_slice %495 {offsets = [0, 0, 0], sizes = [2, 8, 8], strides = [1, 1, 1]} : vector<2x8x32xbf16> to vector<2x8x8xbf16>
    %500 = vector.extract_strided_slice %497 {offsets = [0, 0, 0], sizes = [2, 8, 16], strides = [1, 1, 1]} : vector<2x32x16xbf16> to vector<2x8x16xbf16>
    "tpu.trace_start"() <{level = 10 : i32, message = "bqd,bdk->bqk"}> : () -> ()
    %cst_110 = arith.constant dense<0.000000e+00> : vector<2x8x16xf32>
    %501 = tpu.matmul %499, %500, %cst_110 {dimension_numbers = #tpu.dot_dimension_numbers<[2], [1], [1], [2], [0, 0, 0, 1, 1, 2], [0], [0]>} : vector<2x8x8xbf16>, vector<2x8x16xbf16>, vector<2x8x16xf32> -> vector<2x8x16xf32>
    "tpu.trace_stop"() : () -> ()
    %cst_111 = arith.constant dense<0xFF800000> : vector<2x8xf32>
    %502 = vector.multi_reduction <maximumf>, %501, %cst_111 [2] : vector<2x8x16xf32> to vector<2x8xf32>
    %503 = vector.shape_cast %502 : vector<2x8xf32> to vector<2x8x1xf32>
    %504 = vector.broadcast %503 : vector<2x8x1xf32> to vector<2x8x16xf32>
    %505 = arith.subf %501, %504 : vector<2x8x16xf32>
    %506 = math.exp %505 : vector<2x8x16xf32>
    %cst_112 = arith.constant dense<0.000000e+00> : vector<2x8xf32>
    %507 = vector.multi_reduction <add>, %506, %cst_112 [2] : vector<2x8x16xf32> to vector<2x8xf32>
    %508 = vector.shape_cast %507 : vector<2x8xf32> to vector<2x8x1xf32>
    %509 = tpu.reciprocal %508 {approx = true} : vector<2x8x1xf32> -> vector<2x8x1xf32>
    %510 = vector.broadcast %509 : vector<2x8x1xf32> to vector<2x8x16xf32>
    %511 = arith.mulf %506, %510 : vector<2x8x16xf32>
    %512 = arith.truncf %511 : vector<2x8x16xf32> to vector<2x8x16xbf16>
    %513 = vector.extract_strided_slice %498 {offsets = [0, 0, 0], sizes = [2, 16, 8], strides = [1, 1, 1]} : vector<2x16x32xbf16> to vector<2x16x8xbf16>
    "tpu.trace_start"() <{level = 10 : i32, message = "bqk,bkd->bqd"}> : () -> ()
    %cst_113 = arith.constant dense<0.000000e+00> : vector<2x8x8xf32>
    %514 = tpu.matmul %512, %513, %cst_113 {dimension_numbers = #tpu.dot_dimension_numbers<[2], [1], [1], [2], [0, 0, 0, 1, 1, 2], [0], [0]>} : vector<2x8x16xbf16>, vector<2x16x8xbf16>, vector<2x8x8xf32> -> vector<2x8x8xf32>
    "tpu.trace_stop"() : () -> ()
    %515 = vector.extract_strided_slice %495 {offsets = [0, 0, 8], sizes = [2, 8, 8], strides = [1, 1, 1]} : vector<2x8x32xbf16> to vector<2x8x8xbf16>
    %516 = vector.extract_strided_slice %497 {offsets = [0, 8, 0], sizes = [2, 8, 16], strides = [1, 1, 1]} : vector<2x32x16xbf16> to vector<2x8x16xbf16>
    "tpu.trace_start"() <{level = 10 : i32, message = "bqd,bdk->bqk"}> : () -> ()
    %cst_114 = arith.constant dense<0.000000e+00> : vector<2x8x16xf32>
    %517 = tpu.matmul %515, %516, %cst_114 {dimension_numbers = #tpu.dot_dimension_numbers<[2], [1], [1], [2], [0, 0, 0, 1, 1, 2], [0], [0]>} : vector<2x8x8xbf16>, vector<2x8x16xbf16>, vector<2x8x16xf32> -> vector<2x8x16xf32>
    "tpu.trace_stop"() : () -> ()
    %cst_115 = arith.constant dense<0xFF800000> : vector<2x8xf32>
    %518 = vector.multi_reduction <maximumf>, %517, %cst_115 [2] : vector<2x8x16xf32> to vector<2x8xf32>
    %519 = vector.shape_cast %518 : vector<2x8xf32> to vector<2x8x1xf32>
    %520 = vector.broadcast %519 : vector<2x8x1xf32> to vector<2x8x16xf32>
    %521 = arith.subf %517, %520 : vector<2x8x16xf32>
    %522 = math.exp %521 : vector<2x8x16xf32>
    %cst_116 = arith.constant dense<0.000000e+00> : vector<2x8xf32>
    %523 = vector.multi_reduction <add>, %522, %cst_116 [2] : vector<2x8x16xf32> to vector<2x8xf32>
    %524 = vector.shape_cast %523 : vector<2x8xf32> to vector<2x8x1xf32>
    %525 = tpu.reciprocal %524 {approx = true} : vector<2x8x1xf32> -> vector<2x8x1xf32>
    %526 = vector.broadcast %525 : vector<2x8x1xf32> to vector<2x8x16xf32>
    %527 = arith.mulf %522, %526 : vector<2x8x16xf32>
    %528 = arith.truncf %527 : vector<2x8x16xf32> to vector<2x8x16xbf16>
    %529 = vector.extract_strided_slice %498 {offsets = [0, 0, 8], sizes = [2, 16, 8], strides = [1, 1, 1]} : vector<2x16x32xbf16> to vector<2x16x8xbf16>
    "tpu.trace_start"() <{level = 10 : i32, message = "bqk,bkd->bqd"}> : () -> ()
    %cst_117 = arith.constant dense<0.000000e+00> : vector<2x8x8xf32>
    %530 = tpu.matmul %528, %529, %cst_117 {dimension_numbers = #tpu.dot_dimension_numbers<[2], [1], [1], [2], [0, 0, 0, 1, 1, 2], [0], [0]>} : vector<2x8x16xbf16>, vector<2x16x8xbf16>, vector<2x8x8xf32> -> vector<2x8x8xf32>
    "tpu.trace_stop"() : () -> ()
    %531 = vector.extract_strided_slice %495 {offsets = [0, 0, 16], sizes = [2, 8, 8], strides = [1, 1, 1]} : vector<2x8x32xbf16> to vector<2x8x8xbf16>
    %532 = vector.extract_strided_slice %497 {offsets = [0, 16, 0], sizes = [2, 8, 16], strides = [1, 1, 1]} : vector<2x32x16xbf16> to vector<2x8x16xbf16>
    "tpu.trace_start"() <{level = 10 : i32, message = "bqd,bdk->bqk"}> : () -> ()
    %cst_118 = arith.constant dense<0.000000e+00> : vector<2x8x16xf32>
    %533 = tpu.matmul %531, %532, %cst_118 {dimension_numbers = #tpu.dot_dimension_numbers<[2], [1], [1], [2], [0, 0, 0, 1, 1, 2], [0], [0]>} : vector<2x8x8xbf16>, vector<2x8x16xbf16>, vector<2x8x16xf32> -> vector<2x8x16xf32>
    "tpu.trace_stop"() : () -> ()
    %cst_119 = arith.constant dense<0xFF800000> : vector<2x8xf32>
    %534 = vector.multi_reduction <maximumf>, %533, %cst_119 [2] : vector<2x8x16xf32> to vector<2x8xf32>
    %535 = vector.shape_cast %534 : vector<2x8xf32> to vector<2x8x1xf32>
    %536 = vector.broadcast %535 : vector<2x8x1xf32> to vector<2x8x16xf32>
    %537 = arith.subf %533, %536 : vector<2x8x16xf32>
    %538 = math.exp %537 : vector<2x8x16xf32>
    %cst_120 = arith.constant dense<0.000000e+00> : vector<2x8xf32>
    %539 = vector.multi_reduction <add>, %538, %cst_120 [2] : vector<2x8x16xf32> to vector<2x8xf32>
    %540 = vector.shape_cast %539 : vector<2x8xf32> to vector<2x8x1xf32>
    %541 = tpu.reciprocal %540 {approx = true} : vector<2x8x1xf32> -> vector<2x8x1xf32>
    %542 = vector.broadcast %541 : vector<2x8x1xf32> to vector<2x8x16xf32>
    %543 = arith.mulf %538, %542 : vector<2x8x16xf32>
    %544 = arith.truncf %543 : vector<2x8x16xf32> to vector<2x8x16xbf16>
    %545 = vector.extract_strided_slice %498 {offsets = [0, 0, 16], sizes = [2, 16, 8], strides = [1, 1, 1]} : vector<2x16x32xbf16> to vector<2x16x8xbf16>
    "tpu.trace_start"() <{level = 10 : i32, message = "bqk,bkd->bqd"}> : () -> ()
    %cst_121 = arith.constant dense<0.000000e+00> : vector<2x8x8xf32>
    %546 = tpu.matmul %544, %545, %cst_121 {dimension_numbers = #tpu.dot_dimension_numbers<[2], [1], [1], [2], [0, 0, 0, 1, 1, 2], [0], [0]>} : vector<2x8x16xbf16>, vector<2x16x8xbf16>, vector<2x8x8xf32> -> vector<2x8x8xf32>
    "tpu.trace_stop"() : () -> ()
    %547 = vector.extract_strided_slice %495 {offsets = [0, 0, 24], sizes = [2, 8, 8], strides = [1, 1, 1]} : vector<2x8x32xbf16> to vector<2x8x8xbf16>
    %548 = vector.extract_strided_slice %497 {offsets = [0, 24, 0], sizes = [2, 8, 16], strides = [1, 1, 1]} : vector<2x32x16xbf16> to vector<2x8x16xbf16>
    "tpu.trace_start"() <{level = 10 : i32, message = "bqd,bdk->bqk"}> : () -> ()
    %cst_122 = arith.constant dense<0.000000e+00> : vector<2x8x16xf32>
    %549 = tpu.matmul %547, %548, %cst_122 {dimension_numbers = #tpu.dot_dimension_numbers<[2], [1], [1], [2], [0, 0, 0, 1, 1, 2], [0], [0]>} : vector<2x8x8xbf16>, vector<2x8x16xbf16>, vector<2x8x16xf32> -> vector<2x8x16xf32>
    "tpu.trace_stop"() : () -> ()
    %cst_123 = arith.constant dense<0xFF800000> : vector<2x8xf32>
    %550 = vector.multi_reduction <maximumf>, %549, %cst_123 [2] : vector<2x8x16xf32> to vector<2x8xf32>
    %551 = vector.shape_cast %550 : vector<2x8xf32> to vector<2x8x1xf32>
    %552 = vector.broadcast %551 : vector<2x8x1xf32> to vector<2x8x16xf32>
    %553 = arith.subf %549, %552 : vector<2x8x16xf32>
    %554 = math.exp %553 : vector<2x8x16xf32>
    %cst_124 = arith.constant dense<0.000000e+00> : vector<2x8xf32>
    %555 = vector.multi_reduction <add>, %554, %cst_124 [2] : vector<2x8x16xf32> to vector<2x8xf32>
    %556 = vector.shape_cast %555 : vector<2x8xf32> to vector<2x8x1xf32>
    %557 = tpu.reciprocal %556 {approx = true} : vector<2x8x1xf32> -> vector<2x8x1xf32>
    %558 = vector.broadcast %557 : vector<2x8x1xf32> to vector<2x8x16xf32>
    %559 = arith.mulf %554, %558 : vector<2x8x16xf32>
    %560 = arith.truncf %559 : vector<2x8x16xf32> to vector<2x8x16xbf16>
    %561 = vector.extract_strided_slice %498 {offsets = [0, 0, 24], sizes = [2, 16, 8], strides = [1, 1, 1]} : vector<2x16x32xbf16> to vector<2x16x8xbf16>
    "tpu.trace_start"() <{level = 10 : i32, message = "bqk,bkd->bqd"}> : () -> ()
    %cst_125 = arith.constant dense<0.000000e+00> : vector<2x8x8xf32>
    %562 = tpu.matmul %560, %561, %cst_125 {dimension_numbers = #tpu.dot_dimension_numbers<[2], [1], [1], [2], [0, 0, 0, 1, 1, 2], [0], [0]>} : vector<2x8x16xbf16>, vector<2x16x8xbf16>, vector<2x8x8xf32> -> vector<2x8x8xf32>
    "tpu.trace_stop"() : () -> ()
    %563 = tpu.concatenate %514, %530, %546, %562 in 2 : vector<2x8x8xf32>, vector<2x8x8xf32>, vector<2x8x8xf32>, vector<2x8x8xf32> -> vector<2x8x32xf32>
    %564 = vector.shape_cast %563 : vector<2x8x32xf32> to vector<16x32xf32>
    %565 = arith.truncf %564 : vector<16x32xf32> to vector<16x32xbf16>
    %cst_126 = arith.constant dense<0.000000e+00> : vector<16x32xf32>
    %566 = tpu.matmul %565, %492, %cst_126 {dimension_numbers = #tpu.dot_dimension_numbers<[1], [0], [0], [1], [0, 0, 1, 1], [], []>} : vector<16x32xbf16>, vector<32x32xbf16>, vector<16x32xf32> -> vector<16x32xf32>
    %567 = vector.shape_cast %566 : vector<16x32xf32> to vector<2x8x32xf32>
    %568 = vector.shape_cast %494 : vector<32xf32> to vector<1x1x32xf32>
    %569 = vector.broadcast %568 : vector<1x1x32xf32> to vector<2x8x32xf32>
    %570 = arith.addf %567, %569 : vector<2x8x32xf32>
    %571 = arith.addf %465, %570 : vector<2x8x32xf32>
    %572 = vector.extract_strided_slice %333 {offsets = [8, 0], sizes = [1, 32], strides = [1, 1]} : vector<12x96xf32> to vector<1x32xf32>
    %573 = vector.shape_cast %572 : vector<1x32xf32> to vector<32xf32>
    %574 = vector.extract_strided_slice %333 {offsets = [9, 0], sizes = [1, 32], strides = [1, 1]} : vector<12x96xf32> to vector<1x32xf32>
    %575 = vector.shape_cast %574 : vector<1x32xf32> to vector<32xf32>
    %cst_127 = arith.constant dense<0.000000e+00> : vector<2x8xf32>
    %576 = vector.multi_reduction <add>, %571, %cst_127 [2] : vector<2x8x32xf32> to vector<2x8xf32>
    %577 = vector.shape_cast %576 : vector<2x8xf32> to vector<2x8x1xf32>
    %cst_128 = arith.constant 3.200000e+01 : f32
    %578 = vector.broadcast %cst_128 : f32 to vector<2x8x1xf32>
    %579 = arith.divf %577, %578 : vector<2x8x1xf32>
    %580 = vector.broadcast %579 : vector<2x8x1xf32> to vector<2x8x32xf32>
    %581 = arith.subf %571, %580 : vector<2x8x32xf32>
    %582 = arith.mulf %581, %581 : vector<2x8x32xf32>
    %cst_129 = arith.constant dense<0.000000e+00> : vector<2x8xf32>
    %583 = vector.multi_reduction <add>, %582, %cst_129 [2] : vector<2x8x32xf32> to vector<2x8xf32>
    %584 = vector.shape_cast %583 : vector<2x8xf32> to vector<2x8x1xf32>
    %cst_130 = arith.constant 3.200000e+01 : f32
    %585 = vector.broadcast %cst_130 : f32 to vector<2x8x1xf32>
    %586 = arith.divf %584, %585 : vector<2x8x1xf32>
    %587 = vector.broadcast %579 : vector<2x8x1xf32> to vector<2x8x32xf32>
    %588 = arith.subf %571, %587 : vector<2x8x32xf32>
    %cst_131 = arith.constant 9.99999974E-6 : f32
    %589 = vector.broadcast %cst_131 : f32 to vector<2x8x1xf32>
    %590 = arith.addf %586, %589 : vector<2x8x1xf32>
    %591 = math.rsqrt %590 : vector<2x8x1xf32>
    %592 = vector.broadcast %591 : vector<2x8x1xf32> to vector<2x8x32xf32>
    %593 = arith.mulf %588, %592 : vector<2x8x32xf32>
    %594 = vector.shape_cast %573 : vector<32xf32> to vector<1x1x32xf32>
    %595 = vector.broadcast %594 : vector<1x1x32xf32> to vector<2x8x32xf32>
    %596 = arith.mulf %593, %595 : vector<2x8x32xf32>
    %597 = vector.shape_cast %575 : vector<32xf32> to vector<1x1x32xf32>
    %598 = vector.broadcast %597 : vector<1x1x32xf32> to vector<2x8x32xf32>
    %599 = arith.addf %596, %598 : vector<2x8x32xf32>
    %600 = vector.shape_cast %599 : vector<2x8x32xf32> to vector<16x32xf32>
    %601 = arith.truncf %600 : vector<16x32xf32> to vector<16x32xbf16>
    %602 = vector.extract_strided_slice %329 {offsets = [0, 256], sizes = [32, 64], strides = [1, 1]} : vector<32x320xbf16> to vector<32x64xbf16>
    %cst_132 = arith.constant dense<0.000000e+00> : vector<16x64xf32>
    %603 = tpu.matmul %601, %602, %cst_132 {dimension_numbers = #tpu.dot_dimension_numbers<[1], [0], [0], [1], [0, 0, 1, 1], [], []>} : vector<16x32xbf16>, vector<32x64xbf16>, vector<16x64xf32> -> vector<16x64xf32>
    %604 = vector.extract_strided_slice %333 {offsets = [4, 0], sizes = [1, 64], strides = [1, 1]} : vector<12x96xf32> to vector<1x64xf32>
    %605 = vector.shape_cast %604 : vector<1x64xf32> to vector<64xf32>
    %606 = vector.shape_cast %605 : vector<64xf32> to vector<1x64xf32>
    %607 = vector.broadcast %606 : vector<1x64xf32> to vector<16x64xf32>
    %608 = arith.addf %603, %607 : vector<16x64xf32>
    %cst_133 = arith.constant 0.000000e+00 : f32
    %609 = vector.broadcast %cst_133 : f32 to vector<16x64xf32>
    %610 = arith.maximumf %608, %609 : vector<16x64xf32>
    %611 = arith.truncf %610 : vector<16x64xf32> to vector<16x64xbf16>
    %cst_134 = arith.constant dense<0.000000e+00> : vector<16x32xf32>
    %612 = tpu.matmul %611, %331, %cst_134 {dimension_numbers = #tpu.dot_dimension_numbers<[1], [0], [0], [1], [0, 0, 1, 1], [], []>} : vector<16x64xbf16>, vector<64x32xbf16>, vector<16x32xf32> -> vector<16x32xf32>
    %613 = vector.extract_strided_slice %333 {offsets = [5, 0], sizes = [1, 32], strides = [1, 1]} : vector<12x96xf32> to vector<1x32xf32>
    %614 = vector.shape_cast %613 : vector<1x32xf32> to vector<32xf32>
    %615 = vector.shape_cast %614 : vector<32xf32> to vector<1x32xf32>
    %616 = vector.broadcast %615 : vector<1x32xf32> to vector<16x32xf32>
    %617 = arith.addf %612, %616 : vector<16x32xf32>
    %618 = vector.shape_cast %617 : vector<16x32xf32> to vector<2x8x32xf32>
    %619 = arith.addf %599, %618 : vector<2x8x32xf32>
    %620 = vector.extract_strided_slice %333 {offsets = [10, 0], sizes = [1, 32], strides = [1, 1]} : vector<12x96xf32> to vector<1x32xf32>
    %621 = vector.shape_cast %620 : vector<1x32xf32> to vector<32xf32>
    %622 = vector.extract_strided_slice %333 {offsets = [11, 0], sizes = [1, 32], strides = [1, 1]} : vector<12x96xf32> to vector<1x32xf32>
    %623 = vector.shape_cast %622 : vector<1x32xf32> to vector<32xf32>
    %cst_135 = arith.constant dense<0.000000e+00> : vector<2x8xf32>
    %624 = vector.multi_reduction <add>, %619, %cst_135 [2] : vector<2x8x32xf32> to vector<2x8xf32>
    %625 = vector.shape_cast %624 : vector<2x8xf32> to vector<2x8x1xf32>
    %cst_136 = arith.constant 3.200000e+01 : f32
    %626 = vector.broadcast %cst_136 : f32 to vector<2x8x1xf32>
    %627 = arith.divf %625, %626 : vector<2x8x1xf32>
    %628 = vector.broadcast %627 : vector<2x8x1xf32> to vector<2x8x32xf32>
    %629 = arith.subf %619, %628 : vector<2x8x32xf32>
    %630 = arith.mulf %629, %629 : vector<2x8x32xf32>
    %cst_137 = arith.constant dense<0.000000e+00> : vector<2x8xf32>
    %631 = vector.multi_reduction <add>, %630, %cst_137 [2] : vector<2x8x32xf32> to vector<2x8xf32>
    %632 = vector.shape_cast %631 : vector<2x8xf32> to vector<2x8x1xf32>
    %cst_138 = arith.constant 3.200000e+01 : f32
    %633 = vector.broadcast %cst_138 : f32 to vector<2x8x1xf32>
    %634 = arith.divf %632, %633 : vector<2x8x1xf32>
    %635 = vector.broadcast %627 : vector<2x8x1xf32> to vector<2x8x32xf32>
    %636 = arith.subf %619, %635 : vector<2x8x32xf32>
    %cst_139 = arith.constant 9.99999974E-6 : f32
    %637 = vector.broadcast %cst_139 : f32 to vector<2x8x1xf32>
    %638 = arith.addf %634, %637 : vector<2x8x1xf32>
    %639 = math.rsqrt %638 : vector<2x8x1xf32>
    %640 = vector.broadcast %639 : vector<2x8x1xf32> to vector<2x8x32xf32>
    %641 = arith.mulf %636, %640 : vector<2x8x32xf32>
    %642 = vector.shape_cast %621 : vector<32xf32> to vector<1x1x32xf32>
    %643 = vector.broadcast %642 : vector<1x1x32xf32> to vector<2x8x32xf32>
    %644 = arith.mulf %641, %643 : vector<2x8x32xf32>
    %645 = vector.shape_cast %623 : vector<32xf32> to vector<1x1x32xf32>
    %646 = vector.broadcast %645 : vector<1x1x32xf32> to vector<2x8x32xf32>
    %647 = arith.addf %644, %646 : vector<2x8x32xf32>
    %c1_140 = arith.constant 1 : index
    %c0_141 = arith.constant 0 : index
    %c0_142 = arith.constant 0 : index
    %c0_143 = arith.constant 0 : index
    %648 = vector.load %arg7[%c1_140, %c0_141, %c0_142, %c0_143] : memref<2x2x8x32xf32, #tpu.memory_space<vmem>>, vector<1x2x8x32xf32>
    %649 = vector.shape_cast %648 : vector<1x2x8x32xf32> to vector<2x8x32xf32>
    %650 = vector.shape_cast %647 : vector<2x8x32xf32> to vector<1x2x8x32xf32>
    tpu.vector_store %arg7[%c1_140, %c0_141, %c0_142, %c0_143], %650 {strides = array<i32>} : memref<2x2x8x32xf32, #tpu.memory_space<vmem>>, vector<1x2x8x32xf32>,
    return
  }
  func.func @transform_0(%arg0: i32) -> (i32, i32, i32) {
    %c0_i32 = arith.constant 0 : i32
    %c0_i32_0 = arith.constant 0 : i32
    %c0_i32_1 = arith.constant 0 : i32
    %c0_i32_2 = arith.constant 0 : i32
    return %c0_i32, %c0_i32_0, %c0_i32_1 : i32, i32, i32
  }
  func.func @transform_1(%arg0: i32) -> (i32, i32, i32) {
    %c0_i32 = arith.constant 0 : i32
    %c0_i32_0 = arith.constant 0 : i32
    %c0_i32_1 = arith.constant 0 : i32
    %c0_i32_2 = arith.constant 0 : i32
    return %c0_i32, %c0_i32_0, %c0_i32_1 : i32, i32, i32
  }
  func.func @transform_2(%arg0: i32) -> (i32, i32, i32) {
    %c0_i32 = arith.constant 0 : i32
    %c0_i32_0 = arith.constant 0 : i32
    %c0_i32_1 = arith.constant 0 : i32
    %c0_i32_2 = arith.constant 0 : i32
    return %c0_i32, %c0_i32_0, %c0_i32_1 : i32, i32, i32
  }
  func.func @transform_3(%arg0: i32) -> (i32, i32, i32) {
    %c0_i32 = arith.constant 0 : i32
    %c0_i32_0 = arith.constant 0 : i32
    %c0_i32_1 = arith.constant 0 : i32
    %c0_i32_2 = arith.constant 0 : i32
    return %c0_i32, %c0_i32_0, %c0_i32_1 : i32, i32, i32
  }
  func.func @transform_4(%arg0: i32) -> (i32, i32, i32) {
    %c0_i32 = arith.constant 0 : i32
    %c0_i32_0 = arith.constant 0 : i32
    %c0_i32_1 = arith.constant 0 : i32
    %c0_i32_2 = arith.constant 0 : i32
    return %c0_i32, %c0_i32_0, %c0_i32_1 : i32, i32, i32
  }
  func.func @transform_5(%arg0: i32) -> (i32, i32, i32) {
    %c0_i32 = arith.constant 0 : i32
    %c0_i32_0 = arith.constant 0 : i32
    %c0_i32_1 = arith.constant 0 : i32
    %c0_i32_2 = arith.constant 0 : i32
    return %c0_i32, %c0_i32_0, %c0_i32_1 : i32, i32, i32
  }
  func.func @transform_6(%arg0: i32) -> (i32, i32, i32, i32) {
    %c0_i32 = arith.constant 0 : i32
    %c0_i32_0 = arith.constant 0 : i32
    %c0_i32_1 = arith.constant 0 : i32
    %c0_i32_2 = arith.constant 0 : i32
    %c0_i32_3 = arith.constant 0 : i32
    return %c0_i32, %c0_i32_0, %c0_i32_1, %c0_i32_2 : i32, i32, i32, i32
  }
}

</mosaic_0001>

<llo_original>
// kernel: transformer_decoder.1
$region0: #{transformer_decoder.1}
  #allocation0 [shape = 'u32[]', space=smem, size = 0x4, offset = 0x4, fixed_abs, tag = 'smem constant byte address 0x4 - core index']
  #allocation1 [shape = 'u32[72,128]{1,0:T(1,128)}', space=vmem, size = 0x9000, scoped, tag = 'internal scratch']
  %s0 = inlined_call_operand.vmem [shape: f32[2,8,32], index: 0, kind: input, shape index: {}]
  %s1 = inlined_call_operand.vmem [shape: f32[2,32,32], index: 1, kind: input, shape index: {}]
  %s2 = inlined_call_operand.vmem [shape: f32[2,8,32], index: 2, kind: input, shape index: {}]
  %s3 = inlined_call_operand.vmem [shape: bf16[2,32,320], index: 3, kind: input, shape index: {}]
  %s4 = inlined_call_operand.vmem [shape: bf16[2,64,32], index: 4, kind: input, shape index: {}]
  %s5 = inlined_call_operand.vmem [shape: f32[2,12,96], index: 5, kind: input, shape index: {}]
  %s6 = inlined_call_operand.vmem [shape: f32[2,2,8,32], index: 6, kind: output, shape index: {}]
  %s7 = sld [smem:[#allocation0]]
  $region34: #{transformer_decoder.1} parent=0
    _
  %s9 = ssub.s32 1, %s7
  %s10 = scalar_select 0, %s9, %s7
  // Predicated region
  $region2: #{transformer_decoder.1} parent=0 // pred_check
    _
  $region3: #{transformer_decoder.1} parent=0 // pred_check_branch
    %12 = sbr.rel (0) target = $region5
  $region4: #{transformer_decoder.1} parent=0 // pred_region
    _
  $region5: #{transformer_decoder.1} parent=0 // pred_fallthru
    _
  // Predicated region
  $region6: #{transformer_decoder.1} parent=0 // pred_check
    _
  $region7: #{transformer_decoder.1} parent=0 // pred_check_branch
    %14 = sbr.rel (0) target = $region9
  $region8: #{transformer_decoder.1} parent=0 // pred_region
    _
  $region9: #{transformer_decoder.1} parent=0 // pred_fallthru
    _
  // Predicated region
  $region10: #{transformer_decoder.1} parent=0 // pred_check
    _
  $region11: #{transformer_decoder.1} parent=0 // pred_check_branch
    %16 = sbr.rel (0) target = $region13
  $region12: #{transformer_decoder.1} parent=0 // pred_region
    _
  $region13: #{transformer_decoder.1} parent=0 // pred_fallthru
    _
  // Predicated region
  $region14: #{transformer_decoder.1} parent=0 // pred_check
    _
  $region15: #{transformer_decoder.1} parent=0 // pred_check_branch
    %18 = sbr.rel (0) target = $region17
  $region16: #{transformer_decoder.1} parent=0 // pred_region
    _
  $region17: #{transformer_decoder.1} parent=0 // pred_fallthru
    _
  // Predicated region
  $region18: #{transformer_decoder.1} parent=0 // pred_check
    _
  $region19: #{transformer_decoder.1} parent=0 // pred_check_branch
    %20 = sbr.rel (0) target = $region21
  $region20: #{transformer_decoder.1} parent=0 // pred_region
    _
  $region21: #{transformer_decoder.1} parent=0 // pred_fallthru
    _
  // Predicated region
  $region22: #{transformer_decoder.1} parent=0 // pred_check
    _
  $region23: #{transformer_decoder.1} parent=0 // pred_check_branch
    %22 = sbr.rel (0) target = $region25
  $region24: #{transformer_decoder.1} parent=0 // pred_region
    _
  $region25: #{transformer_decoder.1} parent=0 // pred_fallthru
    _
  %v24 = vld [vmem:[%s0] sm:$0xff]
  %v25 = vld [vmem:[%s0 + $0x8] sm:$0xff]
  %v26 = vld [vmem:[%s2] sm:$0xff]
  %v27 = vld [vmem:[%s2 + $0x8] sm:$0xff]
  %v28 = vld [vmem:[%s1] sm:$0xff]
  %v29 = vld [vmem:[%s1 + $0x8] sm:$0xff]
  %v30 = vld [vmem:[%s1 + $0x10] sm:$0xff]
  %v31 = vld [vmem:[%s1 + $0x18] sm:$0xff]
  %v32 = vld [vmem:[%s1 + $0x20] sm:$0xff]
  %v33 = vld [vmem:[%s1 + $0x28] sm:$0xff]
  %v34 = vld [vmem:[%s1 + $0x30] sm:$0xff]
  %v35 = vld [vmem:[%s1 + $0x38] sm:$0xff]
  %v36 = vpack.c.bf16 %v29, %v28
  %v37 = vpack.c.bf16 %v31, %v30
  %v38 = vpack.c.bf16 %v33, %v32
  %v39 = vpack.c.bf16 %v35, %v34
  %v40 = vld [vmem:[%s3] sm:$0xff]
  %v41 = vld [vmem:[%s3 + $0x8] sm:$0xf]
  %v42 = vld [vmem:[%s3 + $0xc] sm:$0xff]
  %v43 = vld [vmem:[%s3 + $0x14] sm:$0xf]
  %v44 = vld [vmem:[%s3 + $0x18] sm:$0xff]
  %v45 = vld [vmem:[%s3 + $0x20] sm:$0xf]
  %v46 = vld [vmem:[%s3 + $0x24] sm:$0xff]
  %v47 = vld [vmem:[%s3 + $0x2c] sm:$0xf]
  %v48 = vld [vmem:[%s4] sm:$0xf]
  %v49 = vld [vmem:[%s4 + $0x4] sm:$0xf]
  %v50 = vld [vmem:[%s4 + $0x8] sm:$0xf]
  %v51 = vld [vmem:[%s4 + $0xc] sm:$0xf]
  %v52 = vld [vmem:[%s4 + $0x10] sm:$0xf]
  %v53 = vld [vmem:[%s4 + $0x14] sm:$0xf]
  %v54 = vld [vmem:[%s4 + $0x18] sm:$0xf]
  %v55 = vld [vmem:[%s4 + $0x1c] sm:$0xf]
  %v56 = vld [vmem:[%s5] sm:$0xff]
  %v57 = vld [vmem:[%s5 + $0x8] sm:$0xf]
  %v58 = vadd.f32 %v24, %v26
  %v59 = vadd.f32 %v25, %v27
  %v60 = vpack.c.bf16 %v59, %v58
  %v61 = vperm.slane %v56, 0
  %v66 = vunpack.c.l.b16 %v40
  %v67 = vunpack.c.l.b16 %v42
  %v68 = vunpack.c.l.b16 %v44
  %v69 = vunpack.c.l.b16 %v46
  %v70 = vpack.c.b16 %v67, %v66
  %v71 = vpack.c.b16 %v69, %v68
  %vm74 = vcmask 261120
  %v76 = vsel %vm74, %v60, 0
  %78 = vmatpush.bf16.msra.mxu0 0
  %79 = vmatpush.bf16.msra.mxu0 0
  %80 = vmatpush.bf16.msra.mxu0 0
  %81 = vmatpush.bf16.msra.mxu0 0
  %82 = vmatpush.bf16.msra.mxu0 0
  %83 = vmatpush.bf16.msra.mxu0 0
  %84 = vmatpush.bf16.msra.mxu0 %v71
  %85 = vmatpush.bf16.msra.mxu0 %v70
  %86 = vmatmul.bf16.gmra.mxu0 %v76
  %v87 = vpop.f32.mrf.mxu0
  %v88 = vadd.f32 %v61, %v87
  %v89 = vpop.f32.mrf.mxu0
  %v90 = vadd.f32 %v61, %v89
  %91 = vdwg.mxu0
  %v92 = vpack.c.bf16 %v25, %v24
  %93 = vrot.lane.b32.xlu0 %v70, 64
  %v94 = vpop.permute.xlu0 %93
  %95 = vrot.lane.b32.xlu0 %v71, 64
  %v96 = vpop.permute.xlu0 %95
  %100 = vrot.lane.b32.xlu0 %v61, 64
  %v101 = vpop.permute.xlu0 %100
  %v104 = vsel %vm74, %v92, 0
  %106 = vmatpush.bf16.msra.mxu0 0
  %107 = vmatpush.bf16.msra.mxu0 0
  %108 = vmatpush.bf16.msra.mxu0 0
  %109 = vmatpush.bf16.msra.mxu0 0
  %110 = vmatpush.bf16.msra.mxu0 0
  %111 = vmatpush.bf16.msra.mxu0 0
  %112 = vmatpush.bf16.msra.mxu0 %v96
  %113 = vmatpush.bf16.msra.mxu0 %v94
  %114 = vmatmul.bf16.gmra.mxu0 %v104
  %v115 = vpop.f32.mrf.mxu0
  %v116 = vadd.f32 %v101, %v115
  %v117 = vpop.f32.mrf.mxu0
  %v118 = vadd.f32 %v101, %v117
  %119 = vdwg.mxu0
  %v120 = vpack.c.bf16 %v88, %v88
  %v121 = vpack.c.bf16 %v90, %v90
  %124 = vrot.lane.b32.xlu0 %v88, 96
  %v125 = vpop.permute.xlu0 %124
  %126 = vrot.lane.b32.xlu0 %v90, 96
  %v127 = vpop.permute.xlu0 %126
  %130 = vxpose.xlu0.b32.start [1/16] %v125, 128
  %131 = vxpose.xlu0.b32.cont [2/16] 0.0, 128
  %132 = vxpose.xlu0.b32.cont [3/16] 0.0, 128
  %133 = vxpose.xlu0.b32.cont [4/16] 0.0, 128
  %134 = vxpose.xlu0.b32.cont [5/16] 0.0, 128
  %135 = vxpose.xlu0.b32.cont [6/16] 0.0, 128
  %136 = vxpose.xlu0.b32.cont [7/16] 0.0, 128
  %137 = vxpose.xlu0.b32.cont [8/16] 0.0, 128
  %138 = vxpose.xlu0.b32.cont [9/16] 0.0, 128
  %139 = vxpose.xlu0.b32.cont [10/16] 0.0, 128
  %140 = vxpose.xlu0.b32.cont [11/16] 0.0, 128
  %141 = vxpose.xlu0.b32.cont [12/16] 0.0, 128
  %142 = vxpose.xlu0.b32.cont [13/16] 0.0, 128
  %143 = vxpose.xlu0.b32.cont [14/16] 0.0, 128
  %144 = vxpose.xlu0.b32.cont [15/16] 0.0, 128
  %145 = vxpose.xlu0.b32.end [16/16] 0.0, 128
  %v146 = vpop.trf.xlu0
  %v147 = vpop.trf.xlu0
  %v148 = vpop.trf.xlu0
  %v149 = vpop.trf.xlu0
  %v150 = vpop.trf.xlu0
  %v151 = vpop.trf.xlu0
  %v152 = vpop.trf.xlu0
  %v153 = vpop.trf.xlu0
  %v154 = vpop.trf.xlu0
  %v155 = vpop.trf.xlu0
  %v156 = vpop.trf.xlu0
  %v157 = vpop.trf.xlu0
  %v158 = vpop.trf.xlu0
  %v159 = vpop.trf.xlu0
  %v160 = vpop.trf.xlu0
  %v161 = vpop.trf.xlu0
  %162 = vxpose.xlu0.b32.start [1/16] %v127, 128
  %163 = vxpose.xlu0.b32.cont [2/16] 0.0, 128
  %164 = vxpose.xlu0.b32.cont [3/16] 0.0, 128
  %165 = vxpose.xlu0.b32.cont [4/16] 0.0, 128
  %166 = vxpose.xlu0.b32.cont [5/16] 0.0, 128
  %167 = vxpose.xlu0.b32.cont [6/16] 0.0, 128
  %168 = vxpose.xlu0.b32.cont [7/16] 0.0, 128
  %169 = vxpose.xlu0.b32.cont [8/16] 0.0, 128
  %170 = vxpose.xlu0.b32.cont [9/16] 0.0, 128
  %171 = vxpose.xlu0.b32.cont [10/16] 0.0, 128
  %172 = vxpose.xlu0.b32.cont [11/16] 0.0, 128
  %173 = vxpose.xlu0.b32.cont [12/16] 0.0, 128
  %174 = vxpose.xlu0.b32.cont [13/16] 0.0, 128
  %175 = vxpose.xlu0.b32.cont [14/16] 0.0, 128
  %176 = vxpose.xlu0.b32.cont [15/16] 0.0, 128
  %177 = vxpose.xlu0.b32.end [16/16] 0.0, 128
  %v178 = vpop.trf.xlu0
  %v179 = vpop.trf.xlu0
  %v180 = vpop.trf.xlu0
  %v181 = vpop.trf.xlu0
  %v182 = vpop.trf.xlu0
  %v183 = vpop.trf.xlu0
  %v184 = vpop.trf.xlu0
  %v185 = vpop.trf.xlu0
  %v186 = vpop.trf.xlu0
  %v187 = vpop.trf.xlu0
  %v188 = vpop.trf.xlu0
  %v189 = vpop.trf.xlu0
  %v190 = vpop.trf.xlu0
  %v191 = vpop.trf.xlu0
  %v192 = vpop.trf.xlu0
  %v193 = vpop.trf.xlu0
  %v194 = vpack.c.bf16 %v146, %v146
  %v195 = vpack.c.bf16 %v147, %v147
  %v196 = vpack.c.bf16 %v148, %v148
  %v197 = vpack.c.bf16 %v149, %v149
  %v198 = vpack.c.bf16 %v178, %v178
  %v199 = vpack.c.bf16 %v179, %v179
  %v200 = vpack.c.bf16 %v180, %v180
  %v201 = vpack.c.bf16 %v181, %v181
  %v202 = vpack.c.bf16 %v116, %v116
  %v203 = vpack.c.bf16 %v118, %v118
  %vm204 = vcmask 64512
  %v206 = vsel %vm204, %v120, 0
  %vm208 = vcmask 1043456
  %v210 = vsel %vm208, %v194, 0
  %212 = vmatpush.bf16.msra.mxu0 0
  %213 = vmatpush.bf16.msra.mxu0 0
  %214 = vmatpush.bf16.msra.mxu0 0
  %215 = vmatpush.bf16.msra.mxu0 0
  %216 = vmatpush.bf16.msra.mxu0 0
  %217 = vmatpush.bf16.msra.mxu0 0
  %218 = vmatpush.bf16.msra.mxu0 0
  %219 = vmatpush.bf16.msra.mxu0 %v210
  %220 = vmatmul.bf16.gmra.mxu0 %v206
  %v221 = vpop.f32.mrf.mxu0
  %v222 = vadd.f32 0.0, %v221
  %v223 = vpop.f32.mrf.mxu0
  %224 = vdwg.mxu0
  %v226 = vsel %vm204, %v121, 0
  %v229 = vsel %vm208, %v198, 0
  %231 = vmatpush.bf16.msra.mxu0 0
  %232 = vmatpush.bf16.msra.mxu0 0
  %233 = vmatpush.bf16.msra.mxu0 0
  %234 = vmatpush.bf16.msra.mxu0 0
  %235 = vmatpush.bf16.msra.mxu0 0
  %236 = vmatpush.bf16.msra.mxu0 0
  %237 = vmatpush.bf16.msra.mxu0 0
  %238 = vmatpush.bf16.msra.mxu0 %v229
  %239 = vmatmul.bf16.gmra.mxu0 %v226
  %v240 = vpop.f32.mrf.mxu0
  %v241 = vadd.f32 0.0, %v240
  %v242 = vpop.f32.mrf.mxu0
  %243 = vdwg.mxu0
  %v244 = vsel %vm204, %v222, -inf
  %245 = vmax.xlane.f32.xlu0 %v244
  %v246 = vpop.xlane.xlu0 %245
  %v247 = vsel %vm204, %v241, -inf
  %248 = vmax.xlane.f32.xlu0 %v247
  %v249 = vpop.xlane.xlu0 %248
  %v250 = vsub.f32 %v222, %v246
  %v251 = vsub.f32 %v241, %v249
  %v252 = vmul.f32 %v250, 1.442695
  %v253 = vpow.pop %v252
  %v254 = vmul.f32 %v251, 1.442695
  %v255 = vpow.pop %v254
  %v256 = vsel %vm204, %v253, 0.0
  %257 = vadd.xlane.f32.xlu0 %v256
  %v258 = vpop.xlane.xlu0 %257
  %v259 = vsel %vm204, %v255, 0.0
  %260 = vadd.xlane.f32.xlu0 %v259
  %v261 = vpop.xlane.xlu0 %260
  %v262 = vrcp.pop %v258
  %v263 = vrcp.pop %v261
  %v264 = vmul.f32 %v253, %v262
  %v265 = vmul.f32 %v255, %v263
  %v266 = vpack.c.bf16 %v264, %v264
  %v267 = vpack.c.bf16 %v265, %v265
  %v269 = vsel %vm204, %v266, 0
  %v272 = vsel %vm208, %v202, 0
  %274 = vmatpush.bf16.msra.mxu0 0
  %275 = vmatpush.bf16.msra.mxu0 0
  %276 = vmatpush.bf16.msra.mxu0 0
  %277 = vmatpush.bf16.msra.mxu0 0
  %278 = vmatpush.bf16.msra.mxu0 0
  %279 = vmatpush.bf16.msra.mxu0 0
  %280 = vmatpush.bf16.msra.mxu0 0
  %281 = vmatpush.bf16.msra.mxu0 %v272
  %282 = vmatmul.bf16.gmra.mxu0 %v269
  %v283 = vpop.f32.mrf.mxu0
  %v284 = vadd.f32 0.0, %v283
  %v285 = vpop.f32.mrf.mxu0
  %286 = vdwg.mxu0
  %v288 = vsel %vm204, %v267, 0
  %v291 = vsel %vm208, %v203, 0
  %293 = vmatpush.bf16.msra.mxu0 0
  %294 = vmatpush.bf16.msra.mxu0 0
  %295 = vmatpush.bf16.msra.mxu0 0
  %296 = vmatpush.bf16.msra.mxu0 0
  %297 = vmatpush.bf16.msra.mxu0 0
  %298 = vmatpush.bf16.msra.mxu0 0
  %299 = vmatpush.bf16.msra.mxu0 0
  %300 = vmatpush.bf16.msra.mxu0 %v291
  %301 = vmatmul.bf16.gmra.mxu0 %v288
  %v302 = vpop.f32.mrf.mxu0
  %v303 = vadd.f32 0.0, %v302
  %v304 = vpop.f32.mrf.mxu0
  %305 = vdwg.mxu0
  %v307 = vunpack.c.l.b16 %v120
  %v308 = vpack.c.b16 %v307, %v307
  %309 = vrot.lane.b32.xlu0 %v308, 120
  %v310 = vpop.permute.xlu0 %309
  %v312 = vsel %vm204, %v310, 0
  %v315 = vsel %vm208, %v195, 0
  %317 = vmatpush.bf16.msra.mxu0 0
  %318 = vmatpush.bf16.msra.mxu0 0
  %319 = vmatpush.bf16.msra.mxu0 0
  %320 = vmatpush.bf16.msra.mxu0 0
  %321 = vmatpush.bf16.msra.mxu0 0
  %322 = vmatpush.bf16.msra.mxu0 0
  %323 = vmatpush.bf16.msra.mxu0 0
  %324 = vmatpush.bf16.msra.mxu0 %v315
  %325 = vmatmul.bf16.gmra.mxu0 %v312
  %v326 = vpop.f32.mrf.mxu0
  %v327 = vadd.f32 0.0, %v326
  %v328 = vpop.f32.mrf.mxu0
  %329 = vdwg.mxu0
  %v331 = vunpack.c.l.b16 %v121
  %v332 = vpack.c.b16 %v331, %v331
  %333 = vrot.lane.b32.xlu0 %v332, 120
  %v334 = vpop.permute.xlu0 %333
  %v336 = vsel %vm204, %v334, 0
  %v339 = vsel %vm208, %v199, 0
  %341 = vmatpush.bf16.msra.mxu0 0
  %342 = vmatpush.bf16.msra.mxu0 0
  %343 = vmatpush.bf16.msra.mxu0 0
  %344 = vmatpush.bf16.msra.mxu0 0
  %345 = vmatpush.bf16.msra.mxu0 0
  %346 = vmatpush.bf16.msra.mxu0 0
  %347 = vmatpush.bf16.msra.mxu0 0
  %348 = vmatpush.bf16.msra.mxu0 %v339
  %349 = vmatmul.bf16.gmra.mxu0 %v336
  %v350 = vpop.f32.mrf.mxu0
  %v351 = vadd.f32 0.0, %v350
  %v352 = vpop.f32.mrf.mxu0
  %353 = vdwg.mxu0
  %v354 = vsel %vm204, %v327, -inf
  %355 = vmax.xlane.f32.xlu0 %v354
  %v356 = vpop.xlane.xlu0 %355
  %v357 = vsel %vm204, %v351, -inf
  %358 = vmax.xlane.f32.xlu0 %v357
  %v359 = vpop.xlane.xlu0 %358
  %v360 = vsub.f32 %v327, %v356
  %v361 = vsub.f32 %v351, %v359
  %v362 = vmul.f32 %v360, 1.442695
  %v363 = vpow.pop %v362
  %v364 = vmul.f32 %v361, 1.442695
  %v365 = vpow.pop %v364
  %v366 = vsel %vm204, %v363, 0.0
  %367 = vadd.xlane.f32.xlu0 %v366
  %v368 = vpop.xlane.xlu0 %367
  %v369 = vsel %vm204, %v365, 0.0
  %370 = vadd.xlane.f32.xlu0 %v369
  %v371 = vpop.xlane.xlu0 %370
  %v372 = vrcp.pop %v368
  %v373 = vrcp.pop %v371
  %v374 = vmul.f32 %v363, %v372
  %v375 = vmul.f32 %v365, %v373
  %v376 = vpack.c.bf16 %v374, %v374
  %v377 = vpack.c.bf16 %v375, %v375
  %v379 = vunpack.c.l.b16 %v202
  %v380 = vpack.c.b16 %v379, %v379
  %381 = vrot.lane.b32.xlu0 %v380, 120
  %v382 = vpop.permute.xlu0 %381
  %v384 = vsel %vm204, %v376, 0
  %v387 = vsel %vm208, %v382, 0
  %389 = vmatpush.bf16.msra.mxu0 0
  %390 = vmatpush.bf16.msra.mxu0 0
  %391 = vmatpush.bf16.msra.mxu0 0
  %392 = vmatpush.bf16.msra.mxu0 0
  %393 = vmatpush.bf16.msra.mxu0 0
  %394 = vmatpush.bf16.msra.mxu0 0
  %395 = vmatpush.bf16.msra.mxu0 0
  %396 = vmatpush.bf16.msra.mxu0 %v387
  %397 = vmatmul.bf16.gmra.mxu0 %v384
  %v398 = vpop.f32.mrf.mxu0
  %v399 = vadd.f32 0.0, %v398
  %v400 = vpop.f32.mrf.mxu0
  %401 = vdwg.mxu0
  %v403 = vunpack.c.l.b16 %v203
  %v404 = vpack.c.b16 %v403, %v403
  %405 = vrot.lane.b32.xlu0 %v404, 120
  %v406 = vpop.permute.xlu0 %405
  %v408 = vsel %vm204, %v377, 0
  %v411 = vsel %vm208, %v406, 0
  %413 = vmatpush.bf16.msra.mxu0 0
  %414 = vmatpush.bf16.msra.mxu0 0
  %415 = vmatpush.bf16.msra.mxu0 0
  %416 = vmatpush.bf16.msra.mxu0 0
  %417 = vmatpush.bf16.msra.mxu0 0
  %418 = vmatpush.bf16.msra.mxu0 0
  %419 = vmatpush.bf16.msra.mxu0 0
  %420 = vmatpush.bf16.msra.mxu0 %v411
  %421 = vmatmul.bf16.gmra.mxu0 %v408
  %v422 = vpop.f32.mrf.mxu0
  %v423 = vadd.f32 0.0, %v422
  %v424 = vpop.f32.mrf.mxu0
  %425 = vdwg.mxu0
  %426 = vrot.lane.b32.xlu0 %v308, 112
  %v427 = vpop.permute.xlu0 %426
  %v429 = vsel %vm204, %v427, 0
  %v432 = vsel %vm208, %v196, 0
  %434 = vmatpush.bf16.msra.mxu0 0
  %435 = vmatpush.bf16.msra.mxu0 0
  %436 = vmatpush.bf16.msra.mxu0 0
  %437 = vmatpush.bf16.msra.mxu0 0
  %438 = vmatpush.bf16.msra.mxu0 0
  %439 = vmatpush.bf16.msra.mxu0 0
  %440 = vmatpush.bf16.msra.mxu0 0
  %441 = vmatpush.bf16.msra.mxu0 %v432
  %442 = vmatmul.bf16.gmra.mxu0 %v429
  %v443 = vpop.f32.mrf.mxu0
  %v444 = vadd.f32 0.0, %v443
  %v445 = vpop.f32.mrf.mxu0
  %446 = vdwg.mxu0
  %447 = vrot.lane.b32.xlu0 %v332, 112
  %v448 = vpop.permute.xlu0 %447
  %v450 = vsel %vm204, %v448, 0
  %v453 = vsel %vm208, %v200, 0
  %455 = vmatpush.bf16.msra.mxu0 0
  %456 = vmatpush.bf16.msra.mxu0 0
  %457 = vmatpush.bf16.msra.mxu0 0
  %458 = vmatpush.bf16.msra.mxu0 0
  %459 = vmatpush.bf16.msra.mxu0 0
  %460 = vmatpush.bf16.msra.mxu0 0
  %461 = vmatpush.bf16.msra.mxu0 0
  %462 = vmatpush.bf16.msra.mxu0 %v453
  %463 = vmatmul.bf16.gmra.mxu0 %v450
  %v464 = vpop.f32.mrf.mxu0
  %v465 = vadd.f32 0.0, %v464
  %v466 = vpop.f32.mrf.mxu0
  %467 = vdwg.mxu0
  %v468 = vsel %vm204, %v444, -inf
  %469 = vmax.xlane.f32.xlu0 %v468
  %v470 = vpop.xlane.xlu0 %469
  %v471 = vsel %vm204, %v465, -inf
  %472 = vmax.xlane.f32.xlu0 %v471
  %v473 = vpop.xlane.xlu0 %472
  %v474 = vsub.f32 %v444, %v470
  %v475 = vsub.f32 %v465, %v473
  %v476 = vmul.f32 %v474, 1.442695
  %v477 = vpow.pop %v476
  %v478 = vmul.f32 %v475, 1.442695
  %v479 = vpow.pop %v478
  %v480 = vsel %vm204, %v477, 0.0
  %481 = vadd.xlane.f32.xlu0 %v480
  %v482 = vpop.xlane.xlu0 %481
  %v483 = vsel %vm204, %v479, 0.0
  %484 = vadd.xlane.f32.xlu0 %v483
  %v485 = vpop.xlane.xlu0 %484
  %v486 = vrcp.pop %v482
  %v487 = vrcp.pop %v485
  %v488 = vmul.f32 %v477, %v486
  %v489 = vmul.f32 %v479, %v487
  %v490 = vpack.c.bf16 %v488, %v488
  %v491 = vpack.c.bf16 %v489, %v489
  %492 = vrot.lane.b32.xlu0 %v380, 112
  %v493 = vpop.permute.xlu0 %492
  %v495 = vsel %vm204, %v490, 0
  %v498 = vsel %vm208, %v493, 0
  %500 = vmatpush.bf16.msra.mxu0 0
  %501 = vmatpush.bf16.msra.mxu0 0
  %502 = vmatpush.bf16.msra.mxu0 0
  %503 = vmatpush.bf16.msra.mxu0 0
  %504 = vmatpush.bf16.msra.mxu0 0
  %505 = vmatpush.bf16.msra.mxu0 0
  %506 = vmatpush.bf16.msra.mxu0 0
  %507 = vmatpush.bf16.msra.mxu0 %v498
  %508 = vmatmul.bf16.gmra.mxu0 %v495
  %v509 = vpop.f32.mrf.mxu0
  %v510 = vadd.f32 0.0, %v509
  %v511 = vpop.f32.mrf.mxu0
  %512 = vdwg.mxu0
  %513 = vrot.lane.b32.xlu0 %v404, 112
  %v514 = vpop.permute.xlu0 %513
  %v516 = vsel %vm204, %v491, 0
  %v519 = vsel %vm208, %v514, 0
  %521 = vmatpush.bf16.msra.mxu0 0
  %522 = vmatpush.bf16.msra.mxu0 0
  %523 = vmatpush.bf16.msra.mxu0 0
  %524 = vmatpush.bf16.msra.mxu0 0
  %525 = vmatpush.bf16.msra.mxu0 0
  %526 = vmatpush.bf16.msra.mxu0 0
  %527 = vmatpush.bf16.msra.mxu0 0
  %528 = vmatpush.bf16.msra.mxu0 %v519
  %529 = vmatmul.bf16.gmra.mxu0 %v516
  %v530 = vpop.f32.mrf.mxu0
  %v531 = vadd.f32 0.0, %v530
  %v532 = vpop.f32.mrf.mxu0
  %533 = vdwg.mxu0
  %534 = vrot.lane.b32.xlu0 %v308, 104
  %v535 = vpop.permute.xlu0 %534
  %v537 = vsel %vm204, %v535, 0
  %v540 = vsel %vm208, %v197, 0
  %542 = vmatpush.bf16.msra.mxu0 0
  %543 = vmatpush.bf16.msra.mxu0 0
  %544 = vmatpush.bf16.msra.mxu0 0
  %545 = vmatpush.bf16.msra.mxu0 0
  %546 = vmatpush.bf16.msra.mxu0 0
  %547 = vmatpush.bf16.msra.mxu0 0
  %548 = vmatpush.bf16.msra.mxu0 0
  %549 = vmatpush.bf16.msra.mxu0 %v540
  %550 = vmatmul.bf16.gmra.mxu0 %v537
  %v551 = vpop.f32.mrf.mxu0
  %v552 = vadd.f32 0.0, %v551
  %v553 = vpop.f32.mrf.mxu0
  %554 = vdwg.mxu0
  %555 = vrot.lane.b32.xlu0 %v332, 104
  %v556 = vpop.permute.xlu0 %555
  %v558 = vsel %vm204, %v556, 0
  %v561 = vsel %vm208, %v201, 0
  %563 = vmatpush.bf16.msra.mxu0 0
  %564 = vmatpush.bf16.msra.mxu0 0
  %565 = vmatpush.bf16.msra.mxu0 0
  %566 = vmatpush.bf16.msra.mxu0 0
  %567 = vmatpush.bf16.msra.mxu0 0
  %568 = vmatpush.bf16.msra.mxu0 0
  %569 = vmatpush.bf16.msra.mxu0 0
  %570 = vmatpush.bf16.msra.mxu0 %v561
  %571 = vmatmul.bf16.gmra.mxu0 %v558
  %v572 = vpop.f32.mrf.mxu0
  %v573 = vadd.f32 0.0, %v572
  %v574 = vpop.f32.mrf.mxu0
  %575 = vdwg.mxu0
  %v576 = vsel %vm204, %v552, -inf
  %577 = vmax.xlane.f32.xlu0 %v576
  %v578 = vpop.xlane.xlu0 %577
  %v579 = vsel %vm204, %v573, -inf
  %580 = vmax.xlane.f32.xlu0 %v579
  %v581 = vpop.xlane.xlu0 %580
  %v582 = vsub.f32 %v552, %v578
  %v583 = vsub.f32 %v573, %v581
  %v584 = vmul.f32 %v582, 1.442695
  %v585 = vpow.pop %v584
  %v586 = vmul.f32 %v583, 1.442695
  %v587 = vpow.pop %v586
  %v588 = vsel %vm204, %v585, 0.0
  %589 = vadd.xlane.f32.xlu0 %v588
  %v590 = vpop.xlane.xlu0 %589
  %v591 = vsel %vm204, %v587, 0.0
  %592 = vadd.xlane.f32.xlu0 %v591
  %v593 = vpop.xlane.xlu0 %592
  %v594 = vrcp.pop %v590
  %v595 = vrcp.pop %v593
  %v596 = vmul.f32 %v585, %v594
  %v597 = vmul.f32 %v587, %v595
  %v598 = vpack.c.bf16 %v596, %v596
  %v599 = vpack.c.bf16 %v597, %v597
  %600 = vrot.lane.b32.xlu0 %v380, 104
  %v601 = vpop.permute.xlu0 %600
  %v603 = vsel %vm204, %v598, 0
  %v606 = vsel %vm208, %v601, 0
  %608 = vmatpush.bf16.msra.mxu0 0
  %609 = vmatpush.bf16.msra.mxu0 0
  %610 = vmatpush.bf16.msra.mxu0 0
  %611 = vmatpush.bf16.msra.mxu0 0
  %612 = vmatpush.bf16.msra.mxu0 0
  %613 = vmatpush.bf16.msra.mxu0 0
  %614 = vmatpush.bf16.msra.mxu0 0
  %615 = vmatpush.bf16.msra.mxu0 %v606
  %616 = vmatmul.bf16.gmra.mxu0 %v603
  %v617 = vpop.f32.mrf.mxu0
  %v618 = vadd.f32 0.0, %v617
  %v619 = vpop.f32.mrf.mxu0
  %620 = vdwg.mxu0
  %621 = vrot.lane.b32.xlu0 %v404, 104
  %v622 = vpop.permute.xlu0 %621
  %v624 = vsel %vm204, %v599, 0
  %v627 = vsel %vm208, %v622, 0
  %629 = vmatpush.bf16.msra.mxu0 0
  %630 = vmatpush.bf16.msra.mxu0 0
  %631 = vmatpush.bf16.msra.mxu0 0
  %632 = vmatpush.bf16.msra.mxu0 0
  %633 = vmatpush.bf16.msra.mxu0 0
  %634 = vmatpush.bf16.msra.mxu0 0
  %635 = vmatpush.bf16.msra.mxu0 0
  %636 = vmatpush.bf16.msra.mxu0 %v627
  %637 = vmatmul.bf16.gmra.mxu0 %v624
  %v638 = vpop.f32.mrf.mxu0
  %v639 = vadd.f32 0.0, %v638
  %v640 = vpop.f32.mrf.mxu0
  %641 = vdwg.mxu0
  %644 = vrot.lane.b32.xlu0 %v399, 8
  %v645 = vpop.permute.xlu0 %644
  %646 = vrot.lane.b32.xlu0 %v423, 8
  %v647 = vpop.permute.xlu0 %646
  %652 = vrot.lane.b32.xlu0 %v510, 16
  %v653 = vpop.permute.xlu0 %652
  %654 = vrot.lane.b32.xlu0 %v531, 16
  %v655 = vpop.permute.xlu0 %654
  %660 = vrot.lane.b32.xlu0 %v618, 24
  %v661 = vpop.permute.xlu0 %660
  %662 = vrot.lane.b32.xlu0 %v639, 24
  %v663 = vpop.permute.xlu0 %662
  %v666 = vsel %vm204, %v284, %v645
  %v667 = vsel %vm204, %v303, %v647
  %vm668 = vcmask 130048
  %v669 = vsel %vm668, %v666, %v653
  %v670 = vsel %vm668, %v667, %v655
  %vm671 = vcmask 195584
  %v672 = vsel %vm671, %v669, %v661
  %v673 = vsel %vm671, %v670, %v663
  %v674 = vpack.c.bf16 %v673, %v672
  %675 = vrot.lane.b32.xlu0 %v70, 32
  %v676 = vpop.permute.xlu0 %675
  %677 = vrot.lane.b32.xlu0 %v71, 32
  %v678 = vpop.permute.xlu0 %677
  %v682 = vsel %vm74, %v674, 0
  %684 = vmatpush.bf16.msra.mxu0 0
  %685 = vmatpush.bf16.msra.mxu0 0
  %686 = vmatpush.bf16.msra.mxu0 0
  %687 = vmatpush.bf16.msra.mxu0 0
  %688 = vmatpush.bf16.msra.mxu0 0
  %689 = vmatpush.bf16.msra.mxu0 0
  %690 = vmatpush.bf16.msra.mxu0 %v678
  %691 = vmatpush.bf16.msra.mxu0 %v676
  %692 = vmatmul.bf16.gmra.mxu0 %v682
  %v693 = vpop.f32.mrf.mxu0
  %v694 = vadd.f32 0.0, %v693
  %v695 = vpop.f32.mrf.mxu0
  %v696 = vadd.f32 0.0, %v695
  %697 = vdwg.mxu0
  %v698 = vperm.slane %v56, 1
  %v699 = vadd.f32 %v694, %v698
  %v700 = vadd.f32 %v696, %v698
  %v701 = vadd.f32 %v24, %v699
  %v702 = vadd.f32 %v25, %v700
  %v703 = vsel %vm74, %v701, 0.0
  %704 = vadd.xlane.f32.xlu0 %v703
  %v705 = vpop.xlane.xlu0 %704
  %v706 = vsel %vm74, %v702, 0.0
  %707 = vadd.xlane.f32.xlu0 %v706
  %v708 = vpop.xlane.xlu0 %707
  %v709 = vrcp.pop 32.0
  %v710 = vmul.f32 32.0, %v709
  %v711 = vsub.f32 1.0, %v710
  %v712 = vmul.f32 %v709, %v711
  %v713 = vadd.f32 %v709, %v712
  %vm714 = vweird.f32 %v709
  %v715 = vsel %vm714, %v709, %v713
  %v716 = vmul.f32 %v705, %v715
  %v717 = vmul.f32 %v708, %v715
  %v718 = vsub.f32 %v701, %v716
  %v719 = vsub.f32 %v702, %v717
  %v720 = vmul.f32 %v718, %v718
  %v721 = vmul.f32 %v719, %v719
  %v722 = vsel %vm74, %v720, 0.0
  %723 = vadd.xlane.f32.xlu0 %v722
  %v724 = vpop.xlane.xlu0 %723
  %v725 = vsel %vm74, %v721, 0.0
  %726 = vadd.xlane.f32.xlu0 %v725
  %v727 = vpop.xlane.xlu0 %726
  %v728 = vmul.f32 %v724, %v715
  %v729 = vmul.f32 %v727, %v715
  %v730 = vadd.f32 %v728, 1e-05
  %v731 = vadd.f32 %v729, 1e-05
  %v732 = vrsqrt.pop %v730
  %v733 = vmul.f32 %v732, %v730
  %v734 = vmul.f32 %v733, %v732
  %v735 = vmul.f32 0.5, %v734
  %v736 = vsub.f32 1.5, %v735
  %v737 = vmul.f32 %v732, %v736
  %vm738 = vweird.f32 %v730
  %vm739 = vweird.f32 %v732
  %vm740 = vmor %vm738, %vm739
  %v741 = vsel %vm740, %v732, %v737
  %v742 = vrsqrt.pop %v731
  %v743 = vmul.f32 %v742, %v731
  %v744 = vmul.f32 %v743, %v742
  %v745 = vmul.f32 0.5, %v744
  %v746 = vsub.f32 1.5, %v745
  %v747 = vmul.f32 %v742, %v746
  %vm748 = vweird.f32 %v731
  %vm749 = vweird.f32 %v742
  %vm750 = vmor %vm748, %vm749
  %v751 = vsel %vm750, %v742, %v747
  %v752 = vmul.f32 %v718, %v741
  %v753 = vmul.f32 %v719, %v751
  %v754 = vperm.slane %v56, 6
  %v755 = vmul.f32 %v752, %v754
  %v756 = vmul.f32 %v753, %v754
  %v757 = vperm.slane %v56, 7
  %v758 = vadd.f32 %v755, %v757
  %v759 = vadd.f32 %v756, %v757
  %v760 = vadd.f32 %v758, %v26
  %v761 = vadd.f32 %v759, %v27
  %v762 = vpack.c.bf16 %v761, %v760
  %v763 = vperm.slane %v56, 2
  %v764 = vunpack.c.h.b16 %v40
  %v765 = vunpack.c.h.b16 %v42
  %v766 = vunpack.c.h.b16 %v44
  %v767 = vunpack.c.h.b16 %v46
  %v768 = vpack.c.b16 %v765, %v764
  %v769 = vpack.c.b16 %v767, %v766
  %v773 = vsel %vm74, %v762, 0
  %775 = vmatpush.bf16.msra.mxu0 0
  %776 = vmatpush.bf16.msra.mxu0 0
  %777 = vmatpush.bf16.msra.mxu0 0
  %778 = vmatpush.bf16.msra.mxu0 0
  %779 = vmatpush.bf16.msra.mxu0 0
  %780 = vmatpush.bf16.msra.mxu0 0
  %781 = vmatpush.bf16.msra.mxu0 %v769
  %782 = vmatpush.bf16.msra.mxu0 %v768
  %783 = vmatmul.bf16.gmra.mxu0 %v773
  %v784 = vpop.f32.mrf.mxu0
  %v785 = vadd.f32 %v763, %v784
  %v786 = vpop.f32.mrf.mxu0
  %v787 = vadd.f32 %v763, %v786
  %788 = vdwg.mxu0
  %789 = vrot.lane.b32.xlu0 %v768, 96
  %v790 = vpop.permute.xlu0 %789
  %791 = vrot.lane.b32.xlu0 %v769, 96
  %v792 = vpop.permute.xlu0 %791
  %v796 = vsel %vm74, %v36, 0
  %v799 = vsel %vm74, %v37, 0
  %v802 = vsel %vm74, %v38, 0
  %v805 = vsel %vm74, %v39, 0
  %807 = vmatpush.bf16.msra.mxu0 0
  %808 = vmatpush.bf16.msra.mxu0 0
  %809 = vmatpush.bf16.msra.mxu0 0
  %810 = vmatpush.bf16.msra.mxu0 0
  %811 = vmatpush.bf16.msra.mxu0 0
  %812 = vmatpush.bf16.msra.mxu0 0
  %813 = vmatpush.bf16.msra.mxu0 %v792
  %814 = vmatpush.bf16.msra.mxu0 %v790
  %815 = vmatmul.bf16.gmra.mxu0 %v796
  %v816 = vpop.f32.mrf.mxu0
  %v817 = vadd.f32 0.0, %v816
  %v818 = vpop.f32.mrf.mxu0
  %v819 = vadd.f32 0.0, %v818
  %820 = vmatmul.bf16.gmra.mxu0 %v799
  %v821 = vpop.f32.mrf.mxu0
  %v822 = vadd.f32 0.0, %v821
  %v823 = vpop.f32.mrf.mxu0
  %v824 = vadd.f32 0.0, %v823
  %825 = vmatmul.bf16.gmra.mxu0 %v802
  %v826 = vpop.f32.mrf.mxu0
  %v827 = vadd.f32 0.0, %v826
  %v828 = vpop.f32.mrf.mxu0
  %v829 = vadd.f32 0.0, %v828
  %830 = vmatmul.bf16.gmra.mxu0 %v805
  %v831 = vpop.f32.mrf.mxu0
  %v832 = vadd.f32 0.0, %v831
  %v833 = vpop.f32.mrf.mxu0
  %v834 = vadd.f32 0.0, %v833
  %835 = vdwg.mxu0
  %837 = vrot.lane.b32.xlu0 %v763, 96
  %v838 = vpop.permute.xlu0 %837
  %v840 = vadd.f32 %v817, %v838
  %v841 = vadd.f32 %v819, %v838
  %v842 = vadd.f32 %v827, %v838
  %v843 = vadd.f32 %v829, %v838
  %v844 = vadd.f32 %v822, %v838
  %v845 = vadd.f32 %v824, %v838
  %v846 = vadd.f32 %v832, %v838
  %v847 = vadd.f32 %v834, %v838
  %v848 = vpack.c.bf16 %v785, %v785
  %v849 = vpack.c.bf16 %v787, %v787
  %850 = vxpose.xlu0.b32.start [1/16] %v840, 128
  %851 = vxpose.xlu0.b32.cont [2/16] %v841, 128
  %852 = vxpose.xlu0.b32.cont [3/16] 0.0, 128
  %853 = vxpose.xlu0.b32.cont [4/16] 0.0, 128
  %854 = vxpose.xlu0.b32.cont [5/16] 0.0, 128
  %855 = vxpose.xlu0.b32.cont [6/16] 0.0, 128
  %856 = vxpose.xlu0.b32.cont [7/16] 0.0, 128
  %857 = vxpose.xlu0.b32.cont [8/16] 0.0, 128
  %858 = vxpose.xlu0.b32.cont [9/16] 0.0, 128
  %859 = vxpose.xlu0.b32.cont [10/16] 0.0, 128
  %860 = vxpose.xlu0.b32.cont [11/16] 0.0, 128
  %861 = vxpose.xlu0.b32.cont [12/16] 0.0, 128
  %862 = vxpose.xlu0.b32.cont [13/16] 0.0, 128
  %863 = vxpose.xlu0.b32.cont [14/16] 0.0, 128
  %864 = vxpose.xlu0.b32.cont [15/16] 0.0, 128
  %865 = vxpose.xlu0.b32.end [16/16] 0.0, 128
  %v866 = vpop.trf.xlu0
  %v867 = vpop.trf.xlu0
  %v868 = vpop.trf.xlu0
  %v869 = vpop.trf.xlu0
  %v870 = vpop.trf.xlu0
  %v871 = vpop.trf.xlu0
  %v872 = vpop.trf.xlu0
  %v873 = vpop.trf.xlu0
  %v874 = vpop.trf.xlu0
  %v875 = vpop.trf.xlu0
  %v876 = vpop.trf.xlu0
  %v877 = vpop.trf.xlu0
  %v878 = vpop.trf.xlu0
  %v879 = vpop.trf.xlu0
  %v880 = vpop.trf.xlu0
  %v881 = vpop.trf.xlu0
  %882 = vxpose.xlu0.b32.start [1/16] %v842, 128
  %883 = vxpose.xlu0.b32.cont [2/16] %v843, 128
  %884 = vxpose.xlu0.b32.cont [3/16] 0.0, 128
  %885 = vxpose.xlu0.b32.cont [4/16] 0.0, 128
  %886 = vxpose.xlu0.b32.cont [5/16] 0.0, 128
  %887 = vxpose.xlu0.b32.cont [6/16] 0.0, 128
  %888 = vxpose.xlu0.b32.cont [7/16] 0.0, 128
  %889 = vxpose.xlu0.b32.cont [8/16] 0.0, 128
  %890 = vxpose.xlu0.b32.cont [9/16] 0.0, 128
  %891 = vxpose.xlu0.b32.cont [10/16] 0.0, 128
  %892 = vxpose.xlu0.b32.cont [11/16] 0.0, 128
  %893 = vxpose.xlu0.b32.cont [12/16] 0.0, 128
  %894 = vxpose.xlu0.b32.cont [13/16] 0.0, 128
  %895 = vxpose.xlu0.b32.cont [14/16] 0.0, 128
  %896 = vxpose.xlu0.b32.cont [15/16] 0.0, 128
  %897 = vxpose.xlu0.b32.end [16/16] 0.0, 128
  %v898 = vpop.trf.xlu0
  %v899 = vpop.trf.xlu0
  %v900 = vpop.trf.xlu0
  %v901 = vpop.trf.xlu0
  %v902 = vpop.trf.xlu0
  %v903 = vpop.trf.xlu0
  %v904 = vpop.trf.xlu0
  %v905 = vpop.trf.xlu0
  %v906 = vpop.trf.xlu0
  %v907 = vpop.trf.xlu0
  %v908 = vpop.trf.xlu0
  %v909 = vpop.trf.xlu0
  %v910 = vpop.trf.xlu0
  %v911 = vpop.trf.xlu0
  %v912 = vpop.trf.xlu0
  %v913 = vpop.trf.xlu0
  %v914 = vpack.c.bf16 %v866, %v866
  %v915 = vpack.c.bf16 %v867, %v867
  %v916 = vpack.c.bf16 %v868, %v868
  %v917 = vpack.c.bf16 %v869, %v869
  %v918 = vpack.c.bf16 %v898, %v898
  %v919 = vpack.c.bf16 %v899, %v899
  %v920 = vpack.c.bf16 %v900, %v900
  %v921 = vpack.c.bf16 %v901, %v901
  %v922 = vpack.c.bf16 %v844, %v844
  %v923 = vpack.c.bf16 %v845, %v845
  %v924 = vpack.c.bf16 %v846, %v846
  %v925 = vpack.c.bf16 %v847, %v847
  %v927 = vsel %vm204, %v848, 0
  %v930 = vsel %vm208, %v914, 0
  %932 = vmatpush.bf16.msra.mxu0 0
  %933 = vmatpush.bf16.msra.mxu0 0
  %934 = vmatpush.bf16.msra.mxu0 0
  %935 = vmatpush.bf16.msra.mxu0 0
  %936 = vmatpush.bf16.msra.mxu0 0
  %937 = vmatpush.bf16.msra.mxu0 0
  %938 = vmatpush.bf16.msra.mxu0 0
  %939 = vmatpush.bf16.msra.mxu0 %v930
  %940 = vmatmul.bf16.gmra.mxu0 %v927
  %v941 = vpop.f32.mrf.mxu0
  %v942 = vadd.f32 0.0, %v941
  %v943 = vpop.f32.mrf.mxu0
  %944 = vdwg.mxu0
  %v946 = vsel %vm204, %v849, 0
  %v949 = vsel %vm208, %v918, 0
  %951 = vmatpush.bf16.msra.mxu0 0
  %952 = vmatpush.bf16.msra.mxu0 0
  %953 = vmatpush.bf16.msra.mxu0 0
  %954 = vmatpush.bf16.msra.mxu0 0
  %955 = vmatpush.bf16.msra.mxu0 0
  %956 = vmatpush.bf16.msra.mxu0 0
  %957 = vmatpush.bf16.msra.mxu0 0
  %958 = vmatpush.bf16.msra.mxu0 %v949
  %959 = vmatmul.bf16.gmra.mxu0 %v946
  %v960 = vpop.f32.mrf.mxu0
  %v961 = vadd.f32 0.0, %v960
  %v962 = vpop.f32.mrf.mxu0
  %963 = vdwg.mxu0
  %v964 = vsel %vm668, %v942, -inf
  %965 = vmax.xlane.f32.xlu0 %v964
  %v966 = vpop.xlane.xlu0 %965
  %v967 = vsel %vm668, %v961, -inf
  %968 = vmax.xlane.f32.xlu0 %v967
  %v969 = vpop.xlane.xlu0 %968
  %v970 = vsub.f32 %v942, %v966
  %v971 = vsub.f32 %v961, %v969
  %v972 = vmul.f32 %v970, 1.442695
  %v973 = vpow.pop %v972
  %v974 = vmul.f32 %v971, 1.442695
  %v975 = vpow.pop %v974
  %v976 = vsel %vm668, %v973, 0.0
  %977 = vadd.xlane.f32.xlu0 %v976
  %v978 = vpop.xlane.xlu0 %977
  %v979 = vsel %vm668, %v975, 0.0
  %980 = vadd.xlane.f32.xlu0 %v979
  %v981 = vpop.xlane.xlu0 %980
  %v982 = vrcp.pop %v978
  %v983 = vrcp.pop %v981
  %v984 = vmul.f32 %v973, %v982
  %v985 = vmul.f32 %v975, %v983
  %v986 = vpack.c.bf16 %v984, %v984
  %v987 = vpack.c.bf16 %v985, %v985
  %v990 = vunpack.c.l.b16 %v922
  %v991 = vunpack.c.l.b16 %v923
  %v992 = vpack.c.b16 %v991, %v990
  %993 = vrot.lane.b32.xlu0 %v992, 96
  %v994 = vpop.permute.xlu0 %993
  %v997 = vsel %vm668, %v986, 0
  %999 = vmatpush.bf16.msra.mxu0 0
  %1000 = vmatpush.bf16.msra.mxu0 0
  %1001 = vmatpush.bf16.msra.mxu0 0
  %1002 = vmatpush.bf16.msra.mxu0 0
  %1003 = vmatpush.bf16.msra.mxu0 0
  %1004 = vmatpush.bf16.msra.mxu0 0
  %1005 = vmatpush.bf16.msra.mxu0 0
  %1006 = vmatpush.bf16.msra.mxu0 %v994
  %1007 = vmatmul.bf16.gmra.mxu0 %v997
  %v1008 = vpop.f32.mrf.mxu0
  %v1009 = vadd.f32 0.0, %v1008
  %v1010 = vpop.f32.mrf.mxu0
  %1011 = vdwg.mxu0
  %v1014 = vunpack.c.l.b16 %v924
  %v1015 = vunpack.c.l.b16 %v925
  %v1016 = vpack.c.b16 %v1015, %v1014
  %1017 = vrot.lane.b32.xlu0 %v1016, 96
  %v1018 = vpop.permute.xlu0 %1017
  %v1021 = vsel %vm668, %v987, 0
  %1023 = vmatpush.bf16.msra.mxu0 0
  %1024 = vmatpush.bf16.msra.mxu0 0
  %1025 = vmatpush.bf16.msra.mxu0 0
  %1026 = vmatpush.bf16.msra.mxu0 0
  %1027 = vmatpush.bf16.msra.mxu0 0
  %1028 = vmatpush.bf16.msra.mxu0 0
  %1029 = vmatpush.bf16.msra.mxu0 0
  %1030 = vmatpush.bf16.msra.mxu0 %v1018
  %1031 = vmatmul.bf16.gmra.mxu0 %v1021
  %v1032 = vpop.f32.mrf.mxu0
  %v1033 = vadd.f32 0.0, %v1032
  %v1034 = vpop.f32.mrf.mxu0
  %1035 = vdwg.mxu0
  %v1037 = vunpack.c.l.b16 %v848
  %v1038 = vpack.c.b16 %v1037, %v1037
  %1039 = vrot.lane.b32.xlu0 %v1038, 120
  %v1040 = vpop.permute.xlu0 %1039
  %v1042 = vsel %vm204, %v1040, 0
  %v1045 = vsel %vm208, %v915, 0
  %1047 = vmatpush.bf16.msra.mxu0 0
  %1048 = vmatpush.bf16.msra.mxu0 0
  %1049 = vmatpush.bf16.msra.mxu0 0
  %1050 = vmatpush.bf16.msra.mxu0 0
  %1051 = vmatpush.bf16.msra.mxu0 0
  %1052 = vmatpush.bf16.msra.mxu0 0
  %1053 = vmatpush.bf16.msra.mxu0 0
  %1054 = vmatpush.bf16.msra.mxu0 %v1045
  %1055 = vmatmul.bf16.gmra.mxu0 %v1042
  %v1056 = vpop.f32.mrf.mxu0
  %v1057 = vadd.f32 0.0, %v1056
  %v1058 = vpop.f32.mrf.mxu0
  %1059 = vdwg.mxu0
  %v1061 = vunpack.c.l.b16 %v849
  %v1062 = vpack.c.b16 %v1061, %v1061
  %1063 = vrot.lane.b32.xlu0 %v1062, 120
  %v1064 = vpop.permute.xlu0 %1063
  %v1066 = vsel %vm204, %v1064, 0
  %v1069 = vsel %vm208, %v919, 0
  %1071 = vmatpush.bf16.msra.mxu0 0
  %1072 = vmatpush.bf16.msra.mxu0 0
  %1073 = vmatpush.bf16.msra.mxu0 0
  %1074 = vmatpush.bf16.msra.mxu0 0
  %1075 = vmatpush.bf16.msra.mxu0 0
  %1076 = vmatpush.bf16.msra.mxu0 0
  %1077 = vmatpush.bf16.msra.mxu0 0
  %1078 = vmatpush.bf16.msra.mxu0 %v1069
  %1079 = vmatmul.bf16.gmra.mxu0 %v1066
  %v1080 = vpop.f32.mrf.mxu0
  %v1081 = vadd.f32 0.0, %v1080
  %v1082 = vpop.f32.mrf.mxu0
  %1083 = vdwg.mxu0
  %v1084 = vsel %vm668, %v1057, -inf
  %1085 = vmax.xlane.f32.xlu0 %v1084
  %v1086 = vpop.xlane.xlu0 %1085
  %v1087 = vsel %vm668, %v1081, -inf
  %1088 = vmax.xlane.f32.xlu0 %v1087
  %v1089 = vpop.xlane.xlu0 %1088
  %v1090 = vsub.f32 %v1057, %v1086
  %v1091 = vsub.f32 %v1081, %v1089
  %v1092 = vmul.f32 %v1090, 1.442695
  %v1093 = vpow.pop %v1092
  %v1094 = vmul.f32 %v1091, 1.442695
  %v1095 = vpow.pop %v1094
  %v1096 = vsel %vm668, %v1093, 0.0
  %1097 = vadd.xlane.f32.xlu0 %v1096
  %v1098 = vpop.xlane.xlu0 %1097
  %v1099 = vsel %vm668, %v1095, 0.0
  %1100 = vadd.xlane.f32.xlu0 %v1099
  %v1101 = vpop.xlane.xlu0 %1100
  %v1102 = vrcp.pop %v1098
  %v1103 = vrcp.pop %v1101
  %v1104 = vmul.f32 %v1093, %v1102
  %v1105 = vmul.f32 %v1095, %v1103
  %v1106 = vpack.c.bf16 %v1104, %v1104
  %v1107 = vpack.c.bf16 %v1105, %v1105
  %1108 = vrot.lane.b32.xlu0 %v992, 88
  %v1109 = vpop.permute.xlu0 %1108
  %v1112 = vsel %vm668, %v1106, 0
  %1114 = vmatpush.bf16.msra.mxu0 0
  %1115 = vmatpush.bf16.msra.mxu0 0
  %1116 = vmatpush.bf16.msra.mxu0 0
  %1117 = vmatpush.bf16.msra.mxu0 0
  %1118 = vmatpush.bf16.msra.mxu0 0
  %1119 = vmatpush.bf16.msra.mxu0 0
  %1120 = vmatpush.bf16.msra.mxu0 0
  %1121 = vmatpush.bf16.msra.mxu0 %v1109
  %1122 = vmatmul.bf16.gmra.mxu0 %v1112
  %v1123 = vpop.f32.mrf.mxu0
  %v1124 = vadd.f32 0.0, %v1123
  %v1125 = vpop.f32.mrf.mxu0
  %1126 = vdwg.mxu0
  %1127 = vrot.lane.b32.xlu0 %v1016, 88
  %v1128 = vpop.permute.xlu0 %1127
  %v1131 = vsel %vm668, %v1107, 0
  %1133 = vmatpush.bf16.msra.mxu0 0
  %1134 = vmatpush.bf16.msra.mxu0 0
  %1135 = vmatpush.bf16.msra.mxu0 0
  %1136 = vmatpush.bf16.msra.mxu0 0
  %1137 = vmatpush.bf16.msra.mxu0 0
  %1138 = vmatpush.bf16.msra.mxu0 0
  %1139 = vmatpush.bf16.msra.mxu0 0
  %1140 = vmatpush.bf16.msra.mxu0 %v1128
  %1141 = vmatmul.bf16.gmra.mxu0 %v1131
  %v1142 = vpop.f32.mrf.mxu0
  %v1143 = vadd.f32 0.0, %v1142
  %v1144 = vpop.f32.mrf.mxu0
  %1145 = vdwg.mxu0
  %1146 = vrot.lane.b32.xlu0 %v1038, 112
  %v1147 = vpop.permute.xlu0 %1146
  %v1149 = vsel %vm204, %v1147, 0
  %v1152 = vsel %vm208, %v916, 0
  %1154 = vmatpush.bf16.msra.mxu0 0
  %1155 = vmatpush.bf16.msra.mxu0 0
  %1156 = vmatpush.bf16.msra.mxu0 0
  %1157 = vmatpush.bf16.msra.mxu0 0
  %1158 = vmatpush.bf16.msra.mxu0 0
  %1159 = vmatpush.bf16.msra.mxu0 0
  %1160 = vmatpush.bf16.msra.mxu0 0
  %1161 = vmatpush.bf16.msra.mxu0 %v1152
  %1162 = vmatmul.bf16.gmra.mxu0 %v1149
  %v1163 = vpop.f32.mrf.mxu0
  %v1164 = vadd.f32 0.0, %v1163
  %v1165 = vpop.f32.mrf.mxu0
  %1166 = vdwg.mxu0
  %1167 = vrot.lane.b32.xlu0 %v1062, 112
  %v1168 = vpop.permute.xlu0 %1167
  %v1170 = vsel %vm204, %v1168, 0
  %v1173 = vsel %vm208, %v920, 0
  %1175 = vmatpush.bf16.msra.mxu0 0
  %1176 = vmatpush.bf16.msra.mxu0 0
  %1177 = vmatpush.bf16.msra.mxu0 0
  %1178 = vmatpush.bf16.msra.mxu0 0
  %1179 = vmatpush.bf16.msra.mxu0 0
  %1180 = vmatpush.bf16.msra.mxu0 0
  %1181 = vmatpush.bf16.msra.mxu0 0
  %1182 = vmatpush.bf16.msra.mxu0 %v1173
  %1183 = vmatmul.bf16.gmra.mxu0 %v1170
  %v1184 = vpop.f32.mrf.mxu0
  %v1185 = vadd.f32 0.0, %v1184
  %v1186 = vpop.f32.mrf.mxu0
  %1187 = vdwg.mxu0
  %v1188 = vsel %vm668, %v1164, -inf
  %1189 = vmax.xlane.f32.xlu0 %v1188
  %v1190 = vpop.xlane.xlu0 %1189
  %v1191 = vsel %vm668, %v1185, -inf
  %1192 = vmax.xlane.f32.xlu0 %v1191
  %v1193 = vpop.xlane.xlu0 %1192
  %v1194 = vsub.f32 %v1164, %v1190
  %v1195 = vsub.f32 %v1185, %v1193
  %v1196 = vmul.f32 %v1194, 1.442695
  %v1197 = vpow.pop %v1196
  %v1198 = vmul.f32 %v1195, 1.442695
  %v1199 = vpow.pop %v1198
  %v1200 = vsel %vm668, %v1197, 0.0
  %1201 = vadd.xlane.f32.xlu0 %v1200
  %v1202 = vpop.xlane.xlu0 %1201
  %v1203 = vsel %vm668, %v1199, 0.0
  %1204 = vadd.xlane.f32.xlu0 %v1203
  %v1205 = vpop.xlane.xlu0 %1204
  %v1206 = vrcp.pop %v1202
  %v1207 = vrcp.pop %v1205
  %v1208 = vmul.f32 %v1197, %v1206
  %v1209 = vmul.f32 %v1199, %v1207
  %v1210 = vpack.c.bf16 %v1208, %v1208
  %v1211 = vpack.c.bf16 %v1209, %v1209
  %1212 = vrot.lane.b32.xlu0 %v992, 80
  %v1213 = vpop.permute.xlu0 %1212
  %v1216 = vsel %vm668, %v1210, 0
  %1218 = vmatpush.bf16.msra.mxu0 0
  %1219 = vmatpush.bf16.msra.mxu0 0
  %1220 = vmatpush.bf16.msra.mxu0 0
  %1221 = vmatpush.bf16.msra.mxu0 0
  %1222 = vmatpush.bf16.msra.mxu0 0
  %1223 = vmatpush.bf16.msra.mxu0 0
  %1224 = vmatpush.bf16.msra.mxu0 0
  %1225 = vmatpush.bf16.msra.mxu0 %v1213
  %1226 = vmatmul.bf16.gmra.mxu0 %v1216
  %v1227 = vpop.f32.mrf.mxu0
  %v1228 = vadd.f32 0.0, %v1227
  %v1229 = vpop.f32.mrf.mxu0
  %1230 = vdwg.mxu0
  %1231 = vrot.lane.b32.xlu0 %v1016, 80
  %v1232 = vpop.permute.xlu0 %1231
  %v1235 = vsel %vm668, %v1211, 0
  %1237 = vmatpush.bf16.msra.mxu0 0
  %1238 = vmatpush.bf16.msra.mxu0 0
  %1239 = vmatpush.bf16.msra.mxu0 0
  %1240 = vmatpush.bf16.msra.mxu0 0
  %1241 = vmatpush.bf16.msra.mxu0 0
  %1242 = vmatpush.bf16.msra.mxu0 0
  %1243 = vmatpush.bf16.msra.mxu0 0
  %1244 = vmatpush.bf16.msra.mxu0 %v1232
  %1245 = vmatmul.bf16.gmra.mxu0 %v1235
  %v1246 = vpop.f32.mrf.mxu0
  %v1247 = vadd.f32 0.0, %v1246
  %v1248 = vpop.f32.mrf.mxu0
  %1249 = vdwg.mxu0
  %1250 = vrot.lane.b32.xlu0 %v1038, 104
  %v1251 = vpop.permute.xlu0 %1250
  %v1253 = vsel %vm204, %v1251, 0
  %v1256 = vsel %vm208, %v917, 0
  %1258 = vmatpush.bf16.msra.mxu0 0
  %1259 = vmatpush.bf16.msra.mxu0 0
  %1260 = vmatpush.bf16.msra.mxu0 0
  %1261 = vmatpush.bf16.msra.mxu0 0
  %1262 = vmatpush.bf16.msra.mxu0 0
  %1263 = vmatpush.bf16.msra.mxu0 0
  %1264 = vmatpush.bf16.msra.mxu0 0
  %1265 = vmatpush.bf16.msra.mxu0 %v1256
  %1266 = vmatmul.bf16.gmra.mxu0 %v1253
  %v1267 = vpop.f32.mrf.mxu0
  %v1268 = vadd.f32 0.0, %v1267
  %v1269 = vpop.f32.mrf.mxu0
  %1270 = vdwg.mxu0
  %1271 = vrot.lane.b32.xlu0 %v1062, 104
  %v1272 = vpop.permute.xlu0 %1271
  %v1274 = vsel %vm204, %v1272, 0
  %v1277 = vsel %vm208, %v921, 0
  %1279 = vmatpush.bf16.msra.mxu0 0
  %1280 = vmatpush.bf16.msra.mxu0 0
  %1281 = vmatpush.bf16.msra.mxu0 0
  %1282 = vmatpush.bf16.msra.mxu0 0
  %1283 = vmatpush.bf16.msra.mxu0 0
  %1284 = vmatpush.bf16.msra.mxu0 0
  %1285 = vmatpush.bf16.msra.mxu0 0
  %1286 = vmatpush.bf16.msra.mxu0 %v1277
  %1287 = vmatmul.bf16.gmra.mxu0 %v1274
  %v1288 = vpop.f32.mrf.mxu0
  %v1289 = vadd.f32 0.0, %v1288
  %v1290 = vpop.f32.mrf.mxu0
  %1291 = vdwg.mxu0
  %v1292 = vsel %vm668, %v1268, -inf
  %1293 = vmax.xlane.f32.xlu0 %v1292
  %v1294 = vpop.xlane.xlu0 %1293
  %v1295 = vsel %vm668, %v1289, -inf
  %1296 = vmax.xlane.f32.xlu0 %v1295
  %v1297 = vpop.xlane.xlu0 %1296
  %v1298 = vsub.f32 %v1268, %v1294
  %v1299 = vsub.f32 %v1289, %v1297
  %v1300 = vmul.f32 %v1298, 1.442695
  %v1301 = vpow.pop %v1300
  %v1302 = vmul.f32 %v1299, 1.442695
  %v1303 = vpow.pop %v1302
  %v1304 = vsel %vm668, %v1301, 0.0
  %1305 = vadd.xlane.f32.xlu0 %v1304
  %v1306 = vpop.xlane.xlu0 %1305
  %v1307 = vsel %vm668, %v1303, 0.0
  %1308 = vadd.xlane.f32.xlu0 %v1307
  %v1309 = vpop.xlane.xlu0 %1308
  %v1310 = vrcp.pop %v1306
  %v1311 = vrcp.pop %v1309
  %v1312 = vmul.f32 %v1301, %v1310
  %v1313 = vmul.f32 %v1303, %v1311
  %v1314 = vpack.c.bf16 %v1312, %v1312
  %v1315 = vpack.c.bf16 %v1313, %v1313
  %1316 = vrot.lane.b32.xlu0 %v992, 72
  %v1317 = vpop.permute.xlu0 %1316
  %v1320 = vsel %vm668, %v1314, 0
  %1322 = vmatpush.bf16.msra.mxu0 0
  %1323 = vmatpush.bf16.msra.mxu0 0
  %1324 = vmatpush.bf16.msra.mxu0 0
  %1325 = vmatpush.bf16.msra.mxu0 0
  %1326 = vmatpush.bf16.msra.mxu0 0
  %1327 = vmatpush.bf16.msra.mxu0 0
  %1328 = vmatpush.bf16.msra.mxu0 0
  %1329 = vmatpush.bf16.msra.mxu0 %v1317
  %1330 = vmatmul.bf16.gmra.mxu0 %v1320
  %v1331 = vpop.f32.mrf.mxu0
  %v1332 = vadd.f32 0.0, %v1331
  %v1333 = vpop.f32.mrf.mxu0
  %1334 = vdwg.mxu0
  %1335 = vrot.lane.b32.xlu0 %v1016, 72
  %v1336 = vpop.permute.xlu0 %1335
  %v1339 = vsel %vm668, %v1315, 0
  %1341 = vmatpush.bf16.msra.mxu0 0
  %1342 = vmatpush.bf16.msra.mxu0 0
  %1343 = vmatpush.bf16.msra.mxu0 0
  %1344 = vmatpush.bf16.msra.mxu0 0
  %1345 = vmatpush.bf16.msra.mxu0 0
  %1346 = vmatpush.bf16.msra.mxu0 0
  %1347 = vmatpush.bf16.msra.mxu0 0
  %1348 = vmatpush.bf16.msra.mxu0 %v1336
  %1349 = vmatmul.bf16.gmra.mxu0 %v1339
  %v1350 = vpop.f32.mrf.mxu0
  %v1351 = vadd.f32 0.0, %v1350
  %v1352 = vpop.f32.mrf.mxu0
  %1353 = vdwg.mxu0
  %1356 = vrot.lane.b32.xlu0 %v1124, 8
  %v1357 = vpop.permute.xlu0 %1356
  %1358 = vrot.lane.b32.xlu0 %v1143, 8
  %v1359 = vpop.permute.xlu0 %1358
  %1364 = vrot.lane.b32.xlu0 %v1228, 16
  %v1365 = vpop.permute.xlu0 %1364
  %1366 = vrot.lane.b32.xlu0 %v1247, 16
  %v1367 = vpop.permute.xlu0 %1366
  %1372 = vrot.lane.b32.xlu0 %v1332, 24
  %v1373 = vpop.permute.xlu0 %1372
  %1374 = vrot.lane.b32.xlu0 %v1351, 24
  %v1375 = vpop.permute.xlu0 %1374
  %v1378 = vsel %vm204, %v1009, %v1357
  %v1379 = vsel %vm204, %v1033, %v1359
  %v1380 = vsel %vm668, %v1378, %v1365
  %v1381 = vsel %vm668, %v1379, %v1367
  %v1382 = vsel %vm671, %v1380, %v1373
  %v1383 = vsel %vm671, %v1381, %v1375
  %v1384 = vpack.c.bf16 %v1383, %v1382
  %1385 = vrot.lane.b32.xlu0 %v768, 32
  %v1386 = vpop.permute.xlu0 %1385
  %1387 = vrot.lane.b32.xlu0 %v769, 32
  %v1388 = vpop.permute.xlu0 %1387
  %v1392 = vsel %vm74, %v1384, 0
  %1394 = vmatpush.bf16.msra.mxu0 0
  %1395 = vmatpush.bf16.msra.mxu0 0
  %1396 = vmatpush.bf16.msra.mxu0 0
  %1397 = vmatpush.bf16.msra.mxu0 0
  %1398 = vmatpush.bf16.msra.mxu0 0
  %1399 = vmatpush.bf16.msra.mxu0 0
  %1400 = vmatpush.bf16.msra.mxu0 %v1388
  %1401 = vmatpush.bf16.msra.mxu0 %v1386
  %1402 = vmatmul.bf16.gmra.mxu0 %v1392
  %v1403 = vpop.f32.mrf.mxu0
  %v1404 = vadd.f32 0.0, %v1403
  %v1405 = vpop.f32.mrf.mxu0
  %v1406 = vadd.f32 0.0, %v1405
  %1407 = vdwg.mxu0
  %v1408 = vperm.slane %v56, 3
  %v1409 = vadd.f32 %v1404, %v1408
  %v1410 = vadd.f32 %v1406, %v1408
  %v1411 = vadd.f32 %v758, %v1409
  %v1412 = vadd.f32 %v759, %v1410
  %v1413 = vsel %vm74, %v1411, 0.0
  %1414 = vadd.xlane.f32.xlu0 %v1413
  %v1415 = vpop.xlane.xlu0 %1414
  %v1416 = vsel %vm74, %v1412, 0.0
  %1417 = vadd.xlane.f32.xlu0 %v1416
  %v1418 = vpop.xlane.xlu0 %1417
  %v1419 = vmul.f32 %v1415, %v715
  %v1420 = vmul.f32 %v1418, %v715
  %v1421 = vsub.f32 %v1411, %v1419
  %v1422 = vsub.f32 %v1412, %v1420
  %v1423 = vmul.f32 %v1421, %v1421
  %v1424 = vmul.f32 %v1422, %v1422
  %v1425 = vsel %vm74, %v1423, 0.0
  %1426 = vadd.xlane.f32.xlu0 %v1425
  %v1427 = vpop.xlane.xlu0 %1426
  %v1428 = vsel %vm74, %v1424, 0.0
  %1429 = vadd.xlane.f32.xlu0 %v1428
  %v1430 = vpop.xlane.xlu0 %1429
  %v1431 = vmul.f32 %v1427, %v715
  %v1432 = vmul.f32 %v1430, %v715
  %v1433 = vadd.f32 %v1431, 1e-05
  %v1434 = vadd.f32 %v1432, 1e-05
  %v1435 = vrsqrt.pop %v1433
  %v1436 = vmul.f32 %v1435, %v1433
  %v1437 = vmul.f32 %v1436, %v1435
  %v1438 = vmul.f32 0.5, %v1437
  %v1439 = vsub.f32 1.5, %v1438
  %v1440 = vmul.f32 %v1435, %v1439
  %vm1441 = vweird.f32 %v1433
  %vm1442 = vweird.f32 %v1435
  %vm1443 = vmor %vm1441, %vm1442
  %v1444 = vsel %vm1443, %v1435, %v1440
  %v1445 = vrsqrt.pop %v1434
  %v1446 = vmul.f32 %v1445, %v1434
  %v1447 = vmul.f32 %v1446, %v1445
  %v1448 = vmul.f32 0.5, %v1447
  %v1449 = vsub.f32 1.5, %v1448
  %v1450 = vmul.f32 %v1445, %v1449
  %vm1451 = vweird.f32 %v1434
  %vm1452 = vweird.f32 %v1445
  %vm1453 = vmor %vm1451, %vm1452
  %v1454 = vsel %vm1453, %v1445, %v1450
  %v1455 = vmul.f32 %v1421, %v1444
  %v1456 = vmul.f32 %v1422, %v1454
  %v1457 = vperm.slane %v57, 0
  %v1458 = vmul.f32 %v1455, %v1457
  %v1459 = vmul.f32 %v1456, %v1457
  %v1460 = vperm.slane %v57, 1
  %v1461 = vadd.f32 %v1458, %v1460
  %v1462 = vadd.f32 %v1459, %v1460
  %v1463 = vpack.c.bf16 %v1462, %v1461
  %v1464 = vperm.slane %v56, 4
  %v1469 = vunpack.c.l.b16 %v41
  %v1470 = vunpack.c.l.b16 %v43
  %v1471 = vunpack.c.l.b16 %v45
  %v1472 = vunpack.c.l.b16 %v47
  %v1473 = vpack.c.b16 %v1470, %v1469
  %v1474 = vpack.c.b16 %v1472, %v1471
  %v1478 = vsel %vm74, %v1463, 0
  %1480 = vmatpush.bf16.msra.mxu0 0
  %1481 = vmatpush.bf16.msra.mxu0 0
  %1482 = vmatpush.bf16.msra.mxu0 0
  %1483 = vmatpush.bf16.msra.mxu0 0
  %1484 = vmatpush.bf16.msra.mxu0 0
  %1485 = vmatpush.bf16.msra.mxu0 0
  %1486 = vmatpush.bf16.msra.mxu0 %v1474
  %1487 = vmatpush.bf16.msra.mxu0 %v1473
  %1488 = vmatmul.bf16.gmra.mxu0 %v1478
  %v1489 = vpop.f32.mrf.mxu0
  %v1490 = vadd.f32 %v1464, %v1489
  %v1491 = vpop.f32.mrf.mxu0
  %v1492 = vadd.f32 %v1464, %v1491
  %1493 = vdwg.mxu0
  %v1494 = vmax.f32 %v1490, 0.0
  %v1495 = vmax.f32 %v1492, 0.0
  %v1496 = vpack.c.bf16 %v1495, %v1494
  %v1497 = vperm.slane %v56, 5
  %v1506 = vunpack.c.l.b16 %v48
  %v1507 = vunpack.c.l.b16 %v49
  %v1508 = vunpack.c.l.b16 %v50
  %v1509 = vunpack.c.l.b16 %v51
  %v1510 = vunpack.c.l.b16 %v52
  %v1511 = vunpack.c.l.b16 %v53
  %v1512 = vunpack.c.l.b16 %v54
  %v1513 = vunpack.c.l.b16 %v55
  %v1514 = vpack.c.b16 %v1507, %v1506
  %v1515 = vpack.c.b16 %v1509, %v1508
  %v1516 = vpack.c.b16 %v1511, %v1510
  %v1517 = vpack.c.b16 %v1513, %v1512
  %vm1522 = vcmask 523264
  %v1524 = vsel %vm1522, %v1496, 0
  %1526 = vmatpush.bf16.msra.mxu0 0
  %1527 = vmatpush.bf16.msra.mxu0 0
  %1528 = vmatpush.bf16.msra.mxu0 0
  %1529 = vmatpush.bf16.msra.mxu0 0
  %1530 = vmatpush.bf16.msra.mxu0 %v1517
  %1531 = vmatpush.bf16.msra.mxu0 %v1516
  %1532 = vmatpush.bf16.msra.mxu0 %v1515
  %1533 = vmatpush.bf16.msra.mxu0 %v1514
  %1534 = vmatmul.bf16.gmra.mxu0 %v1524
  %v1535 = vpop.f32.mrf.mxu0
  %v1536 = vadd.f32 %v1497, %v1535
  %v1537 = vpop.f32.mrf.mxu0
  %v1538 = vadd.f32 %v1497, %v1537
  %1539 = vdwg.mxu0
  %v1540 = vadd.f32 %v1461, %v1536
  %v1541 = vadd.f32 %v1462, %v1538
  %v1542 = vsel %vm74, %v1540, 0.0
  %1543 = vadd.xlane.f32.xlu0 %v1542
  %v1544 = vpop.xlane.xlu0 %1543
  %v1545 = vsel %vm74, %v1541, 0.0
  %1546 = vadd.xlane.f32.xlu0 %v1545
  %v1547 = vpop.xlane.xlu0 %1546
  %v1548 = vmul.f32 %v1544, %v715
  %v1549 = vmul.f32 %v1547, %v715
  %v1550 = vsub.f32 %v1540, %v1548
  %v1551 = vsub.f32 %v1541, %v1549
  %v1552 = vmul.f32 %v1550, %v1550
  %v1553 = vmul.f32 %v1551, %v1551
  %v1554 = vsel %vm74, %v1552, 0.0
  %1555 = vadd.xlane.f32.xlu0 %v1554
  %v1556 = vpop.xlane.xlu0 %1555
  %v1557 = vsel %vm74, %v1553, 0.0
  %1558 = vadd.xlane.f32.xlu0 %v1557
  %v1559 = vpop.xlane.xlu0 %1558
  %v1560 = vmul.f32 %v1556, %v715
  %v1561 = vmul.f32 %v1559, %v715
  %v1562 = vadd.f32 %v1560, 1e-05
  %v1563 = vadd.f32 %v1561, 1e-05
  %v1564 = vrsqrt.pop %v1562
  %v1565 = vmul.f32 %v1564, %v1562
  %v1566 = vmul.f32 %v1565, %v1564
  %v1567 = vmul.f32 0.5, %v1566
  %v1568 = vsub.f32 1.5, %v1567
  %v1569 = vmul.f32 %v1564, %v1568
  %vm1570 = vweird.f32 %v1562
  %vm1571 = vweird.f32 %v1564
  %vm1572 = vmor %vm1570, %vm1571
  %v1573 = vsel %vm1572, %v1564, %v1569
  %v1574 = vrsqrt.pop %v1563
  %v1575 = vmul.f32 %v1574, %v1563
  %v1576 = vmul.f32 %v1575, %v1574
  %v1577 = vmul.f32 0.5, %v1576
  %v1578 = vsub.f32 1.5, %v1577
  %v1579 = vmul.f32 %v1574, %v1578
  %vm1580 = vweird.f32 %v1563
  %vm1581 = vweird.f32 %v1574
  %vm1582 = vmor %vm1580, %vm1581
  %v1583 = vsel %vm1582, %v1574, %v1579
  %v1584 = vmul.f32 %v1550, %v1573
  %v1585 = vmul.f32 %v1551, %v1583
  %v1586 = vperm.slane %v57, 2
  %v1587 = vmul.f32 %v1584, %v1586
  %v1588 = vmul.f32 %v1585, %v1586
  %v1589 = vperm.slane %v57, 3
  %v1590 = vadd.f32 %v1587, %v1589
  %v1591 = vadd.f32 %v1588, %v1589
  %1592 = vst.msk [vmem:[%s6] sm:$0xff] %vm74, %v1590
  %1593 = vst.msk [vmem:[%s6 + $0x8] sm:$0xff] %vm74, %v1591
  %s1594 = scalar_lea.vmem %s3, 48
  %v1595 = vld [vmem:[%s1594] sm:$0xff]
  %v1596 = vld [vmem:[%s1594 + $0x8] sm:$0xf]
  %v1597 = vld [vmem:[%s1594 + $0xc] sm:$0xff]
  %v1598 = vld [vmem:[%s1594 + $0x14] sm:$0xf]
  %v1599 = vld [vmem:[%s1594 + $0x18] sm:$0xff]
  %v1600 = vld [vmem:[%s1594 + $0x20] sm:$0xf]
  %v1601 = vld [vmem:[%s1594 + $0x24] sm:$0xff]
  %v1602 = vld [vmem:[%s1594 + $0x2c] sm:$0xf]
  %s1603 = scalar_lea.vmem %s4, 32
  %v1604 = vld [vmem:[%s1603] sm:$0xf]
  %v1605 = vld [vmem:[%s1603 + $0x4] sm:$0xf]
  %v1606 = vld [vmem:[%s1603 + $0x8] sm:$0xf]
  %v1607 = vld [vmem:[%s1603 + $0xc] sm:$0xf]
  %v1608 = vld [vmem:[%s1603 + $0x10] sm:$0xf]
  %v1609 = vld [vmem:[%s1603 + $0x14] sm:$0xf]
  %v1610 = vld [vmem:[%s1603 + $0x18] sm:$0xf]
  %v1611 = vld [vmem:[%s1603 + $0x1c] sm:$0xf]
  %s1612 = scalar_lea.vmem %s5, 16
  %v1613 = vld [vmem:[%s1612] sm:$0xff]
  %v1614 = vld [vmem:[%s1612 + $0x8] sm:$0xf]
  %v1615 = vadd.f32 %v1590, %v26
  %v1616 = vadd.f32 %v1591, %v27
  %v1617 = vpack.c.bf16 %v1616, %v1615
  %v1618 = vperm.slane %v1613, 0
  %v1623 = vunpack.c.l.b16 %v1595
  %v1624 = vunpack.c.l.b16 %v1597
  %v1625 = vunpack.c.l.b16 %v1599
  %v1626 = vunpack.c.l.b16 %v1601
  %v1627 = vpack.c.b16 %v1624, %v1623
  %v1628 = vpack.c.b16 %v1626, %v1625
  %v1632 = vsel %vm74, %v1617, 0
  %1634 = vmatpush.bf16.msra.mxu0 0
  %1635 = vmatpush.bf16.msra.mxu0 0
  %1636 = vmatpush.bf16.msra.mxu0 0
  %1637 = vmatpush.bf16.msra.mxu0 0
  %1638 = vmatpush.bf16.msra.mxu0 0
  %1639 = vmatpush.bf16.msra.mxu0 0
  %1640 = vmatpush.bf16.msra.mxu0 %v1628
  %1641 = vmatpush.bf16.msra.mxu0 %v1627
  %1642 = vmatmul.bf16.gmra.mxu0 %v1632
  %v1643 = vpop.f32.mrf.mxu0
  %v1644 = vadd.f32 %v1618, %v1643
  %v1645 = vpop.f32.mrf.mxu0
  %v1646 = vadd.f32 %v1618, %v1645
  %1647 = vdwg.mxu0
  %v1648 = vpack.c.bf16 %v1591, %v1590
  %1649 = vrot.lane.b32.xlu0 %v1627, 64
  %v1650 = vpop.permute.xlu0 %1649
  %1651 = vrot.lane.b32.xlu0 %v1628, 64
  %v1652 = vpop.permute.xlu0 %1651
  %1656 = vrot.lane.b32.xlu0 %v1618, 64
  %v1657 = vpop.permute.xlu0 %1656
  %v1660 = vsel %vm74, %v1648, 0
  %1662 = vmatpush.bf16.msra.mxu0 0
  %1663 = vmatpush.bf16.msra.mxu0 0
  %1664 = vmatpush.bf16.msra.mxu0 0
  %1665 = vmatpush.bf16.msra.mxu0 0
  %1666 = vmatpush.bf16.msra.mxu0 0
  %1667 = vmatpush.bf16.msra.mxu0 0
  %1668 = vmatpush.bf16.msra.mxu0 %v1652
  %1669 = vmatpush.bf16.msra.mxu0 %v1650
  %1670 = vmatmul.bf16.gmra.mxu0 %v1660
  %v1671 = vpop.f32.mrf.mxu0
  %v1672 = vadd.f32 %v1657, %v1671
  %v1673 = vpop.f32.mrf.mxu0
  %v1674 = vadd.f32 %v1657, %v1673
  %1675 = vdwg.mxu0
  %v1676 = vpack.c.bf16 %v1644, %v1644
  %v1677 = vpack.c.bf16 %v1646, %v1646
  %1680 = vrot.lane.b32.xlu0 %v1644, 96
  %v1681 = vpop.permute.xlu0 %1680
  %1682 = vrot.lane.b32.xlu0 %v1646, 96
  %v1683 = vpop.permute.xlu0 %1682
  %1686 = vxpose.xlu0.b32.start [1/16] %v1681, 128
  %1687 = vxpose.xlu0.b32.cont [2/16] 0.0, 128
  %1688 = vxpose.xlu0.b32.cont [3/16] 0.0, 128
  %1689 = vxpose.xlu0.b32.cont [4/16] 0.0, 128
  %1690 = vxpose.xlu0.b32.cont [5/16] 0.0, 128
  %1691 = vxpose.xlu0.b32.cont [6/16] 0.0, 128
  %1692 = vxpose.xlu0.b32.cont [7/16] 0.0, 128
  %1693 = vxpose.xlu0.b32.cont [8/16] 0.0, 128
  %1694 = vxpose.xlu0.b32.cont [9/16] 0.0, 128
  %1695 = vxpose.xlu0.b32.cont [10/16] 0.0, 128
  %1696 = vxpose.xlu0.b32.cont [11/16] 0.0, 128
  %1697 = vxpose.xlu0.b32.cont [12/16] 0.0, 128
  %1698 = vxpose.xlu0.b32.cont [13/16] 0.0, 128
  %1699 = vxpose.xlu0.b32.cont [14/16] 0.0, 128
  %1700 = vxpose.xlu0.b32.cont [15/16] 0.0, 128
  %1701 = vxpose.xlu0.b32.end [16/16] 0.0, 128
  %v1702 = vpop.trf.xlu0
  %v1703 = vpop.trf.xlu0
  %v1704 = vpop.trf.xlu0
  %v1705 = vpop.trf.xlu0
  %v1706 = vpop.trf.xlu0
  %v1707 = vpop.trf.xlu0
  %v1708 = vpop.trf.xlu0
  %v1709 = vpop.trf.xlu0
  %v1710 = vpop.trf.xlu0
  %v1711 = vpop.trf.xlu0
  %v1712 = vpop.trf.xlu0
  %v1713 = vpop.trf.xlu0
  %v1714 = vpop.trf.xlu0
  %v1715 = vpop.trf.xlu0
  %v1716 = vpop.trf.xlu0
  %v1717 = vpop.trf.xlu0
  %1718 = vxpose.xlu0.b32.start [1/16] %v1683, 128
  %1719 = vxpose.xlu0.b32.cont [2/16] 0.0, 128
  %1720 = vxpose.xlu0.b32.cont [3/16] 0.0, 128
  %1721 = vxpose.xlu0.b32.cont [4/16] 0.0, 128
  %1722 = vxpose.xlu0.b32.cont [5/16] 0.0, 128
  %1723 = vxpose.xlu0.b32.cont [6/16] 0.0, 128
  %1724 = vxpose.xlu0.b32.cont [7/16] 0.0, 128
  %1725 = vxpose.xlu0.b32.cont [8/16] 0.0, 128
  %1726 = vxpose.xlu0.b32.cont [9/16] 0.0, 128
  %1727 = vxpose.xlu0.b32.cont [10/16] 0.0, 128
  %1728 = vxpose.xlu0.b32.cont [11/16] 0.0, 128
  %1729 = vxpose.xlu0.b32.cont [12/16] 0.0, 128
  %1730 = vxpose.xlu0.b32.cont [13/16] 0.0, 128
  %1731 = vxpose.xlu0.b32.cont [14/16] 0.0, 128
  %1732 = vxpose.xlu0.b32.cont [15/16] 0.0, 128
  %1733 = vxpose.xlu0.b32.end [16/16] 0.0, 128
  %v1734 = vpop.trf.xlu0
  %v1735 = vpop.trf.xlu0
  %v1736 = vpop.trf.xlu0
  %v1737 = vpop.trf.xlu0
  %v1738 = vpop.trf.xlu0
  %v1739 = vpop.trf.xlu0
  %v1740 = vpop.trf.xlu0
  %v1741 = vpop.trf.xlu0
  %v1742 = vpop.trf.xlu0
  %v1743 = vpop.trf.xlu0
  %v1744 = vpop.trf.xlu0
  %v1745 = vpop.trf.xlu0
  %v1746 = vpop.trf.xlu0
  %v1747 = vpop.trf.xlu0
  %v1748 = vpop.trf.xlu0
  %v1749 = vpop.trf.xlu0
  %v1750 = vpack.c.bf16 %v1702, %v1702
  %v1751 = vpack.c.bf16 %v1703, %v1703
  %v1752 = vpack.c.bf16 %v1704, %v1704
  %v1753 = vpack.c.bf16 %v1705, %v1705
  %v1754 = vpack.c.bf16 %v1734, %v1734
  %v1755 = vpack.c.bf16 %v1735, %v1735
  %v1756 = vpack.c.bf16 %v1736, %v1736
  %v1757 = vpack.c.bf16 %v1737, %v1737
  %v1758 = vpack.c.bf16 %v1672, %v1672
  %v1759 = vpack.c.bf16 %v1674, %v1674
  %v1761 = vsel %vm204, %v1676, 0
  %v1764 = vsel %vm208, %v1750, 0
  %1766 = vmatpush.bf16.msra.mxu0 0
  %1767 = vmatpush.bf16.msra.mxu0 0
  %1768 = vmatpush.bf16.msra.mxu0 0
  %1769 = vmatpush.bf16.msra.mxu0 0
  %1770 = vmatpush.bf16.msra.mxu0 0
  %1771 = vmatpush.bf16.msra.mxu0 0
  %1772 = vmatpush.bf16.msra.mxu0 0
  %1773 = vmatpush.bf16.msra.mxu0 %v1764
  %1774 = vmatmul.bf16.gmra.mxu0 %v1761
  %v1775 = vpop.f32.mrf.mxu0
  %v1776 = vadd.f32 0.0, %v1775
  %v1777 = vpop.f32.mrf.mxu0
  %1778 = vdwg.mxu0
  %v1780 = vsel %vm204, %v1677, 0
  %v1783 = vsel %vm208, %v1754, 0
  %1785 = vmatpush.bf16.msra.mxu0 0
  %1786 = vmatpush.bf16.msra.mxu0 0
  %1787 = vmatpush.bf16.msra.mxu0 0
  %1788 = vmatpush.bf16.msra.mxu0 0
  %1789 = vmatpush.bf16.msra.mxu0 0
  %1790 = vmatpush.bf16.msra.mxu0 0
  %1791 = vmatpush.bf16.msra.mxu0 0
  %1792 = vmatpush.bf16.msra.mxu0 %v1783
  %1793 = vmatmul.bf16.gmra.mxu0 %v1780
  %v1794 = vpop.f32.mrf.mxu0
  %v1795 = vadd.f32 0.0, %v1794
  %v1796 = vpop.f32.mrf.mxu0
  %1797 = vdwg.mxu0
  %v1798 = vsel %vm204, %v1776, -inf
  %1799 = vmax.xlane.f32.xlu0 %v1798
  %v1800 = vpop.xlane.xlu0 %1799
  %v1801 = vsel %vm204, %v1795, -inf
  %1802 = vmax.xlane.f32.xlu0 %v1801
  %v1803 = vpop.xlane.xlu0 %1802
  %v1804 = vsub.f32 %v1776, %v1800
  %v1805 = vsub.f32 %v1795, %v1803
  %v1806 = vmul.f32 %v1804, 1.442695
  %v1807 = vpow.pop %v1806
  %v1808 = vmul.f32 %v1805, 1.442695
  %v1809 = vpow.pop %v1808
  %v1810 = vsel %vm204, %v1807, 0.0
  %1811 = vadd.xlane.f32.xlu0 %v1810
  %v1812 = vpop.xlane.xlu0 %1811
  %v1813 = vsel %vm204, %v1809, 0.0
  %1814 = vadd.xlane.f32.xlu0 %v1813
  %v1815 = vpop.xlane.xlu0 %1814
  %v1816 = vrcp.pop %v1812
  %v1817 = vrcp.pop %v1815
  %v1818 = vmul.f32 %v1807, %v1816
  %v1819 = vmul.f32 %v1809, %v1817
  %v1820 = vpack.c.bf16 %v1818, %v1818
  %v1821 = vpack.c.bf16 %v1819, %v1819
  %v1823 = vsel %vm204, %v1820, 0
  %v1826 = vsel %vm208, %v1758, 0
  %1828 = vmatpush.bf16.msra.mxu0 0
  %1829 = vmatpush.bf16.msra.mxu0 0
  %1830 = vmatpush.bf16.msra.mxu0 0
  %1831 = vmatpush.bf16.msra.mxu0 0
  %1832 = vmatpush.bf16.msra.mxu0 0
  %1833 = vmatpush.bf16.msra.mxu0 0
  %1834 = vmatpush.bf16.msra.mxu0 0
  %1835 = vmatpush.bf16.msra.mxu0 %v1826
  %1836 = vmatmul.bf16.gmra.mxu0 %v1823
  %v1837 = vpop.f32.mrf.mxu0
  %v1838 = vadd.f32 0.0, %v1837
  %v1839 = vpop.f32.mrf.mxu0
  %1840 = vdwg.mxu0
  %v1842 = vsel %vm204, %v1821, 0
  %v1845 = vsel %vm208, %v1759, 0
  %1847 = vmatpush.bf16.msra.mxu0 0
  %1848 = vmatpush.bf16.msra.mxu0 0
  %1849 = vmatpush.bf16.msra.mxu0 0
  %1850 = vmatpush.bf16.msra.mxu0 0
  %1851 = vmatpush.bf16.msra.mxu0 0
  %1852 = vmatpush.bf16.msra.mxu0 0
  %1853 = vmatpush.bf16.msra.mxu0 0
  %1854 = vmatpush.bf16.msra.mxu0 %v1845
  %1855 = vmatmul.bf16.gmra.mxu0 %v1842
  %v1856 = vpop.f32.mrf.mxu0
  %v1857 = vadd.f32 0.0, %v1856
  %v1858 = vpop.f32.mrf.mxu0
  %1859 = vdwg.mxu0
  %v1861 = vunpack.c.l.b16 %v1676
  %v1862 = vpack.c.b16 %v1861, %v1861
  %1863 = vrot.lane.b32.xlu0 %v1862, 120
  %v1864 = vpop.permute.xlu0 %1863
  %v1866 = vsel %vm204, %v1864, 0
  %v1869 = vsel %vm208, %v1751, 0
  %1871 = vmatpush.bf16.msra.mxu0 0
  %1872 = vmatpush.bf16.msra.mxu0 0
  %1873 = vmatpush.bf16.msra.mxu0 0
  %1874 = vmatpush.bf16.msra.mxu0 0
  %1875 = vmatpush.bf16.msra.mxu0 0
  %1876 = vmatpush.bf16.msra.mxu0 0
  %1877 = vmatpush.bf16.msra.mxu0 0
  %1878 = vmatpush.bf16.msra.mxu0 %v1869
  %1879 = vmatmul.bf16.gmra.mxu0 %v1866
  %v1880 = vpop.f32.mrf.mxu0
  %v1881 = vadd.f32 0.0, %v1880
  %v1882 = vpop.f32.mrf.mxu0
  %1883 = vdwg.mxu0
  %v1885 = vunpack.c.l.b16 %v1677
  %v1886 = vpack.c.b16 %v1885, %v1885
  %1887 = vrot.lane.b32.xlu0 %v1886, 120
  %v1888 = vpop.permute.xlu0 %1887
  %v1890 = vsel %vm204, %v1888, 0
  %v1893 = vsel %vm208, %v1755, 0
  %1895 = vmatpush.bf16.msra.mxu0 0
  %1896 = vmatpush.bf16.msra.mxu0 0
  %1897 = vmatpush.bf16.msra.mxu0 0
  %1898 = vmatpush.bf16.msra.mxu0 0
  %1899 = vmatpush.bf16.msra.mxu0 0
  %1900 = vmatpush.bf16.msra.mxu0 0
  %1901 = vmatpush.bf16.msra.mxu0 0
  %1902 = vmatpush.bf16.msra.mxu0 %v1893
  %1903 = vmatmul.bf16.gmra.mxu0 %v1890
  %v1904 = vpop.f32.mrf.mxu0
  %v1905 = vadd.f32 0.0, %v1904
  %v1906 = vpop.f32.mrf.mxu0
  %1907 = vdwg.mxu0
  %v1908 = vsel %vm204, %v1881, -inf
  %1909 = vmax.xlane.f32.xlu0 %v1908
  %v1910 = vpop.xlane.xlu0 %1909
  %v1911 = vsel %vm204, %v1905, -inf
  %1912 = vmax.xlane.f32.xlu0 %v1911
  %v1913 = vpop.xlane.xlu0 %1912
  %v1914 = vsub.f32 %v1881, %v1910
  %v1915 = vsub.f32 %v1905, %v1913
  %v1916 = vmul.f32 %v1914, 1.442695
  %v1917 = vpow.pop %v1916
  %v1918 = vmul.f32 %v1915, 1.442695
  %v1919 = vpow.pop %v1918
  %v1920 = vsel %vm204, %v1917, 0.0
  %1921 = vadd.xlane.f32.xlu0 %v1920
  %v1922 = vpop.xlane.xlu0 %1921
  %v1923 = vsel %vm204, %v1919, 0.0
  %1924 = vadd.xlane.f32.xlu0 %v1923
  %v1925 = vpop.xlane.xlu0 %1924
  %v1926 = vrcp.pop %v1922
  %v1927 = vrcp.pop %v1925
  %v1928 = vmul.f32 %v1917, %v1926
  %v1929 = vmul.f32 %v1919, %v1927
  %v1930 = vpack.c.bf16 %v1928, %v1928
  %v1931 = vpack.c.bf16 %v1929, %v1929
  %v1933 = vunpack.c.l.b16 %v1758
  %v1934 = vpack.c.b16 %v1933, %v1933
  %1935 = vrot.lane.b32.xlu0 %v1934, 120
  %v1936 = vpop.permute.xlu0 %1935
  %v1938 = vsel %vm204, %v1930, 0
  %v1941 = vsel %vm208, %v1936, 0
  %1943 = vmatpush.bf16.msra.mxu0 0
  %1944 = vmatpush.bf16.msra.mxu0 0
  %1945 = vmatpush.bf16.msra.mxu0 0
  %1946 = vmatpush.bf16.msra.mxu0 0
  %1947 = vmatpush.bf16.msra.mxu0 0
  %1948 = vmatpush.bf16.msra.mxu0 0
  %1949 = vmatpush.bf16.msra.mxu0 0
  %1950 = vmatpush.bf16.msra.mxu0 %v1941
  %1951 = vmatmul.bf16.gmra.mxu0 %v1938
  %v1952 = vpop.f32.mrf.mxu0
  %v1953 = vadd.f32 0.0, %v1952
  %v1954 = vpop.f32.mrf.mxu0
  %1955 = vdwg.mxu0
  %v1957 = vunpack.c.l.b16 %v1759
  %v1958 = vpack.c.b16 %v1957, %v1957
  %1959 = vrot.lane.b32.xlu0 %v1958, 120
  %v1960 = vpop.permute.xlu0 %1959
  %v1962 = vsel %vm204, %v1931, 0
  %v1965 = vsel %vm208, %v1960, 0
  %1967 = vmatpush.bf16.msra.mxu0 0
  %1968 = vmatpush.bf16.msra.mxu0 0
  %1969 = vmatpush.bf16.msra.mxu0 0
  %1970 = vmatpush.bf16.msra.mxu0 0
  %1971 = vmatpush.bf16.msra.mxu0 0
  %1972 = vmatpush.bf16.msra.mxu0 0
  %1973 = vmatpush.bf16.msra.mxu0 0
  %1974 = vmatpush.bf16.msra.mxu0 %v1965
  %1975 = vmatmul.bf16.gmra.mxu0 %v1962
  %v1976 = vpop.f32.mrf.mxu0
  %v1977 = vadd.f32 0.0, %v1976
  %v1978 = vpop.f32.mrf.mxu0
  %1979 = vdwg.mxu0
  %1980 = vrot.lane.b32.xlu0 %v1862, 112
  %v1981 = vpop.permute.xlu0 %1980
  %v1983 = vsel %vm204, %v1981, 0
  %v1986 = vsel %vm208, %v1752, 0
  %1988 = vmatpush.bf16.msra.mxu0 0
  %1989 = vmatpush.bf16.msra.mxu0 0
  %1990 = vmatpush.bf16.msra.mxu0 0
  %1991 = vmatpush.bf16.msra.mxu0 0
  %1992 = vmatpush.bf16.msra.mxu0 0
  %1993 = vmatpush.bf16.msra.mxu0 0
  %1994 = vmatpush.bf16.msra.mxu0 0
  %1995 = vmatpush.bf16.msra.mxu0 %v1986
  %1996 = vmatmul.bf16.gmra.mxu0 %v1983
  %v1997 = vpop.f32.mrf.mxu0
  %v1998 = vadd.f32 0.0, %v1997
  %v1999 = vpop.f32.mrf.mxu0
  %2000 = vdwg.mxu0
  %2001 = vrot.lane.b32.xlu0 %v1886, 112
  %v2002 = vpop.permute.xlu0 %2001
  %v2004 = vsel %vm204, %v2002, 0
  %v2007 = vsel %vm208, %v1756, 0
  %2009 = vmatpush.bf16.msra.mxu0 0
  %2010 = vmatpush.bf16.msra.mxu0 0
  %2011 = vmatpush.bf16.msra.mxu0 0
  %2012 = vmatpush.bf16.msra.mxu0 0
  %2013 = vmatpush.bf16.msra.mxu0 0
  %2014 = vmatpush.bf16.msra.mxu0 0
  %2015 = vmatpush.bf16.msra.mxu0 0
  %2016 = vmatpush.bf16.msra.mxu0 %v2007
  %2017 = vmatmul.bf16.gmra.mxu0 %v2004
  %v2018 = vpop.f32.mrf.mxu0
  %v2019 = vadd.f32 0.0, %v2018
  %v2020 = vpop.f32.mrf.mxu0
  %2021 = vdwg.mxu0
  %v2022 = vsel %vm204, %v1998, -inf
  %2023 = vmax.xlane.f32.xlu0 %v2022
  %v2024 = vpop.xlane.xlu0 %2023
  %v2025 = vsel %vm204, %v2019, -inf
  %2026 = vmax.xlane.f32.xlu0 %v2025
  %v2027 = vpop.xlane.xlu0 %2026
  %v2028 = vsub.f32 %v1998, %v2024
  %v2029 = vsub.f32 %v2019, %v2027
  %v2030 = vmul.f32 %v2028, 1.442695
  %v2031 = vpow.pop %v2030
  %v2032 = vmul.f32 %v2029, 1.442695
  %v2033 = vpow.pop %v2032
  %v2034 = vsel %vm204, %v2031, 0.0
  %2035 = vadd.xlane.f32.xlu0 %v2034
  %v2036 = vpop.xlane.xlu0 %2035
  %v2037 = vsel %vm204, %v2033, 0.0
  %2038 = vadd.xlane.f32.xlu0 %v2037
  %v2039 = vpop.xlane.xlu0 %2038
  %v2040 = vrcp.pop %v2036
  %v2041 = vrcp.pop %v2039
  %v2042 = vmul.f32 %v2031, %v2040
  %v2043 = vmul.f32 %v2033, %v2041
  %v2044 = vpack.c.bf16 %v2042, %v2042
  %v2045 = vpack.c.bf16 %v2043, %v2043
  %2046 = vrot.lane.b32.xlu0 %v1934, 112
  %v2047 = vpop.permute.xlu0 %2046
  %v2049 = vsel %vm204, %v2044, 0
  %v2052 = vsel %vm208, %v2047, 0
  %2054 = vmatpush.bf16.msra.mxu0 0
  %2055 = vmatpush.bf16.msra.mxu0 0
  %2056 = vmatpush.bf16.msra.mxu0 0
  %2057 = vmatpush.bf16.msra.mxu0 0
  %2058 = vmatpush.bf16.msra.mxu0 0
  %2059 = vmatpush.bf16.msra.mxu0 0
  %2060 = vmatpush.bf16.msra.mxu0 0
  %2061 = vmatpush.bf16.msra.mxu0 %v2052
  %2062 = vmatmul.bf16.gmra.mxu0 %v2049
  %v2063 = vpop.f32.mrf.mxu0
  %v2064 = vadd.f32 0.0, %v2063
  %v2065 = vpop.f32.mrf.mxu0
  %2066 = vdwg.mxu0
  %2067 = vrot.lane.b32.xlu0 %v1958, 112
  %v2068 = vpop.permute.xlu0 %2067
  %v2070 = vsel %vm204, %v2045, 0
  %v2073 = vsel %vm208, %v2068, 0
  %2075 = vmatpush.bf16.msra.mxu0 0
  %2076 = vmatpush.bf16.msra.mxu0 0
  %2077 = vmatpush.bf16.msra.mxu0 0
  %2078 = vmatpush.bf16.msra.mxu0 0
  %2079 = vmatpush.bf16.msra.mxu0 0
  %2080 = vmatpush.bf16.msra.mxu0 0
  %2081 = vmatpush.bf16.msra.mxu0 0
  %2082 = vmatpush.bf16.msra.mxu0 %v2073
  %2083 = vmatmul.bf16.gmra.mxu0 %v2070
  %v2084 = vpop.f32.mrf.mxu0
  %v2085 = vadd.f32 0.0, %v2084
  %v2086 = vpop.f32.mrf.mxu0
  %2087 = vdwg.mxu0
  %2088 = vrot.lane.b32.xlu0 %v1862, 104
  %v2089 = vpop.permute.xlu0 %2088
  %v2091 = vsel %vm204, %v2089, 0
  %v2094 = vsel %vm208, %v1753, 0
  %2096 = vmatpush.bf16.msra.mxu0 0
  %2097 = vmatpush.bf16.msra.mxu0 0
  %2098 = vmatpush.bf16.msra.mxu0 0
  %2099 = vmatpush.bf16.msra.mxu0 0
  %2100 = vmatpush.bf16.msra.mxu0 0
  %2101 = vmatpush.bf16.msra.mxu0 0
  %2102 = vmatpush.bf16.msra.mxu0 0
  %2103 = vmatpush.bf16.msra.mxu0 %v2094
  %2104 = vmatmul.bf16.gmra.mxu0 %v2091
  %v2105 = vpop.f32.mrf.mxu0
  %v2106 = vadd.f32 0.0, %v2105
  %v2107 = vpop.f32.mrf.mxu0
  %2108 = vdwg.mxu0
  %2109 = vrot.lane.b32.xlu0 %v1886, 104
  %v2110 = vpop.permute.xlu0 %2109
  %v2112 = vsel %vm204, %v2110, 0
  %v2115 = vsel %vm208, %v1757, 0
  %2117 = vmatpush.bf16.msra.mxu0 0
  %2118 = vmatpush.bf16.msra.mxu0 0
  %2119 = vmatpush.bf16.msra.mxu0 0
  %2120 = vmatpush.bf16.msra.mxu0 0
  %2121 = vmatpush.bf16.msra.mxu0 0
  %2122 = vmatpush.bf16.msra.mxu0 0
  %2123 = vmatpush.bf16.msra.mxu0 0
  %2124 = vmatpush.bf16.msra.mxu0 %v2115
  %2125 = vmatmul.bf16.gmra.mxu0 %v2112
  %v2126 = vpop.f32.mrf.mxu0
  %v2127 = vadd.f32 0.0, %v2126
  %v2128 = vpop.f32.mrf.mxu0
  %2129 = vdwg.mxu0
  %v2130 = vsel %vm204, %v2106, -inf
  %2131 = vmax.xlane.f32.xlu0 %v2130
  %v2132 = vpop.xlane.xlu0 %2131
  %v2133 = vsel %vm204, %v2127, -inf
  %2134 = vmax.xlane.f32.xlu0 %v2133
  %v2135 = vpop.xlane.xlu0 %2134
  %v2136 = vsub.f32 %v2106, %v2132
  %v2137 = vsub.f32 %v2127, %v2135
  %v2138 = vmul.f32 %v2136, 1.442695
  %v2139 = vpow.pop %v2138
  %v2140 = vmul.f32 %v2137, 1.442695
  %v2141 = vpow.pop %v2140
  %v2142 = vsel %vm204, %v2139, 0.0
  %2143 = vadd.xlane.f32.xlu0 %v2142
  %v2144 = vpop.xlane.xlu0 %2143
  %v2145 = vsel %vm204, %v2141, 0.0
  %2146 = vadd.xlane.f32.xlu0 %v2145
  %v2147 = vpop.xlane.xlu0 %2146
  %v2148 = vrcp.pop %v2144
  %v2149 = vrcp.pop %v2147
  %v2150 = vmul.f32 %v2139, %v2148
  %v2151 = vmul.f32 %v2141, %v2149
  %v2152 = vpack.c.bf16 %v2150, %v2150
  %v2153 = vpack.c.bf16 %v2151, %v2151
  %2154 = vrot.lane.b32.xlu0 %v1934, 104
  %v2155 = vpop.permute.xlu0 %2154
  %v2157 = vsel %vm204, %v2152, 0
  %v2160 = vsel %vm208, %v2155, 0
  %2162 = vmatpush.bf16.msra.mxu0 0
  %2163 = vmatpush.bf16.msra.mxu0 0
  %2164 = vmatpush.bf16.msra.mxu0 0
  %2165 = vmatpush.bf16.msra.mxu0 0
  %2166 = vmatpush.bf16.msra.mxu0 0
  %2167 = vmatpush.bf16.msra.mxu0 0
  %2168 = vmatpush.bf16.msra.mxu0 0
  %2169 = vmatpush.bf16.msra.mxu0 %v2160
  %2170 = vmatmul.bf16.gmra.mxu0 %v2157
  %v2171 = vpop.f32.mrf.mxu0
  %v2172 = vadd.f32 0.0, %v2171
  %v2173 = vpop.f32.mrf.mxu0
  %2174 = vdwg.mxu0
  %2175 = vrot.lane.b32.xlu0 %v1958, 104
  %v2176 = vpop.permute.xlu0 %2175
  %v2178 = vsel %vm204, %v2153, 0
  %v2181 = vsel %vm208, %v2176, 0
  %2183 = vmatpush.bf16.msra.mxu0 0
  %2184 = vmatpush.bf16.msra.mxu0 0
  %2185 = vmatpush.bf16.msra.mxu0 0
  %2186 = vmatpush.bf16.msra.mxu0 0
  %2187 = vmatpush.bf16.msra.mxu0 0
  %2188 = vmatpush.bf16.msra.mxu0 0
  %2189 = vmatpush.bf16.msra.mxu0 0
  %2190 = vmatpush.bf16.msra.mxu0 %v2181
  %2191 = vmatmul.bf16.gmra.mxu0 %v2178
  %v2192 = vpop.f32.mrf.mxu0
  %v2193 = vadd.f32 0.0, %v2192
  %v2194 = vpop.f32.mrf.mxu0
  %2195 = vdwg.mxu0
  %2198 = vrot.lane.b32.xlu0 %v1953, 8
  %v2199 = vpop.permute.xlu0 %2198
  %2200 = vrot.lane.b32.xlu0 %v1977, 8
  %v2201 = vpop.permute.xlu0 %2200
  %2206 = vrot.lane.b32.xlu0 %v2064, 16
  %v2207 = vpop.permute.xlu0 %2206
  %2208 = vrot.lane.b32.xlu0 %v2085, 16
  %v2209 = vpop.permute.xlu0 %2208
  %2214 = vrot.lane.b32.xlu0 %v2172, 24
  %v2215 = vpop.permute.xlu0 %2214
  %2216 = vrot.lane.b32.xlu0 %v2193, 24
  %v2217 = vpop.permute.xlu0 %2216
  %v2220 = vsel %vm204, %v1838, %v2199
  %v2221 = vsel %vm204, %v1857, %v2201
  %v2222 = vsel %vm668, %v2220, %v2207
  %v2223 = vsel %vm668, %v2221, %v2209
  %v2224 = vsel %vm671, %v2222, %v2215
  %v2225 = vsel %vm671, %v2223, %v2217
  %v2226 = vpack.c.bf16 %v2225, %v2224
  %2227 = vrot.lane.b32.xlu0 %v1627, 32
  %v2228 = vpop.permute.xlu0 %2227
  %2229 = vrot.lane.b32.xlu0 %v1628, 32
  %v2230 = vpop.permute.xlu0 %2229
  %v2234 = vsel %vm74, %v2226, 0
  %2236 = vmatpush.bf16.msra.mxu0 0
  %2237 = vmatpush.bf16.msra.mxu0 0
  %2238 = vmatpush.bf16.msra.mxu0 0
  %2239 = vmatpush.bf16.msra.mxu0 0
  %2240 = vmatpush.bf16.msra.mxu0 0
  %2241 = vmatpush.bf16.msra.mxu0 0
  %2242 = vmatpush.bf16.msra.mxu0 %v2230
  %2243 = vmatpush.bf16.msra.mxu0 %v2228
  %2244 = vmatmul.bf16.gmra.mxu0 %v2234
  %v2245 = vpop.f32.mrf.mxu0
  %v2246 = vadd.f32 0.0, %v2245
  %v2247 = vpop.f32.mrf.mxu0
  %v2248 = vadd.f32 0.0, %v2247
  %2249 = vdwg.mxu0
  %v2250 = vperm.slane %v1613, 1
  %v2251 = vadd.f32 %v2246, %v2250
  %v2252 = vadd.f32 %v2248, %v2250
  %v2253 = vadd.f32 %v1590, %v2251
  %v2254 = vadd.f32 %v1591, %v2252
  %v2255 = vsel %vm74, %v2253, 0.0
  %2256 = vadd.xlane.f32.xlu0 %v2255
  %v2257 = vpop.xlane.xlu0 %2256
  %v2258 = vsel %vm74, %v2254, 0.0
  %2259 = vadd.xlane.f32.xlu0 %v2258
  %v2260 = vpop.xlane.xlu0 %2259
  %v2261 = vmul.f32 %v2257, %v715
  %v2262 = vmul.f32 %v2260, %v715
  %v2263 = vsub.f32 %v2253, %v2261
  %v2264 = vsub.f32 %v2254, %v2262
  %v2265 = vmul.f32 %v2263, %v2263
  %v2266 = vmul.f32 %v2264, %v2264
  %v2267 = vsel %vm74, %v2265, 0.0
  %2268 = vadd.xlane.f32.xlu0 %v2267
  %v2269 = vpop.xlane.xlu0 %2268
  %v2270 = vsel %vm74, %v2266, 0.0
  %2271 = vadd.xlane.f32.xlu0 %v2270
  %v2272 = vpop.xlane.xlu0 %2271
  %v2273 = vmul.f32 %v2269, %v715
  %v2274 = vmul.f32 %v2272, %v715
  %v2275 = vadd.f32 %v2273, 1e-05
  %v2276 = vadd.f32 %v2274, 1e-05
  %v2277 = vrsqrt.pop %v2275
  %v2278 = vmul.f32 %v2277, %v2275
  %v2279 = vmul.f32 %v2278, %v2277
  %v2280 = vmul.f32 0.5, %v2279
  %v2281 = vsub.f32 1.5, %v2280
  %v2282 = vmul.f32 %v2277, %v2281
  %vm2283 = vweird.f32 %v2275
  %vm2284 = vweird.f32 %v2277
  %vm2285 = vmor %vm2283, %vm2284
  %v2286 = vsel %vm2285, %v2277, %v2282
  %v2287 = vrsqrt.pop %v2276
  %v2288 = vmul.f32 %v2287, %v2276
  %v2289 = vmul.f32 %v2288, %v2287
  %v2290 = vmul.f32 0.5, %v2289
  %v2291 = vsub.f32 1.5, %v2290
  %v2292 = vmul.f32 %v2287, %v2291
  %vm2293 = vweird.f32 %v2276
  %vm2294 = vweird.f32 %v2287
  %vm2295 = vmor %vm2293, %vm2294
  %v2296 = vsel %vm2295, %v2287, %v2292
  %v2297 = vmul.f32 %v2263, %v2286
  %v2298 = vmul.f32 %v2264, %v2296
  %v2299 = vperm.slane %v1613, 6
  %v2300 = vmul.f32 %v2297, %v2299
  %v2301 = vmul.f32 %v2298, %v2299
  %v2302 = vperm.slane %v1613, 7
  %v2303 = vadd.f32 %v2300, %v2302
  %v2304 = vadd.f32 %v2301, %v2302
  %v2305 = vadd.f32 %v2303, %v26
  %v2306 = vadd.f32 %v2304, %v27
  %v2307 = vpack.c.bf16 %v2306, %v2305
  %v2308 = vperm.slane %v1613, 2
  %v2309 = vunpack.c.h.b16 %v1595
  %v2310 = vunpack.c.h.b16 %v1597
  %v2311 = vunpack.c.h.b16 %v1599
  %v2312 = vunpack.c.h.b16 %v1601
  %v2313 = vpack.c.b16 %v2310, %v2309
  %v2314 = vpack.c.b16 %v2312, %v2311
  %v2318 = vsel %vm74, %v2307, 0
  %2320 = vmatpush.bf16.msra.mxu0 0
  %2321 = vmatpush.bf16.msra.mxu0 0
  %2322 = vmatpush.bf16.msra.mxu0 0
  %2323 = vmatpush.bf16.msra.mxu0 0
  %2324 = vmatpush.bf16.msra.mxu0 0
  %2325 = vmatpush.bf16.msra.mxu0 0
  %2326 = vmatpush.bf16.msra.mxu0 %v2314
  %2327 = vmatpush.bf16.msra.mxu0 %v2313
  %2328 = vmatmul.bf16.gmra.mxu0 %v2318
  %v2329 = vpop.f32.mrf.mxu0
  %v2330 = vadd.f32 %v2308, %v2329
  %v2331 = vpop.f32.mrf.mxu0
  %v2332 = vadd.f32 %v2308, %v2331
  %2333 = vdwg.mxu0
  %2334 = vrot.lane.b32.xlu0 %v2313, 96
  %v2335 = vpop.permute.xlu0 %2334
  %2336 = vrot.lane.b32.xlu0 %v2314, 96
  %v2337 = vpop.permute.xlu0 %2336
  %2340 = vmatpush.bf16.msra.mxu0 0
  %2341 = vmatpush.bf16.msra.mxu0 0
  %2342 = vmatpush.bf16.msra.mxu0 0
  %2343 = vmatpush.bf16.msra.mxu0 0
  %2344 = vmatpush.bf16.msra.mxu0 0
  %2345 = vmatpush.bf16.msra.mxu0 0
  %2346 = vmatpush.bf16.msra.mxu0 %v2337
  %2347 = vmatpush.bf16.msra.mxu0 %v2335
  %2348 = vmatmul.bf16.gmra.mxu0 %v796
  %v2349 = vpop.f32.mrf.mxu0
  %v2350 = vadd.f32 0.0, %v2349
  %v2351 = vpop.f32.mrf.mxu0
  %v2352 = vadd.f32 0.0, %v2351
  %2353 = vmatmul.bf16.gmra.mxu0 %v799
  %v2354 = vpop.f32.mrf.mxu0
  %v2355 = vadd.f32 0.0, %v2354
  %v2356 = vpop.f32.mrf.mxu0
  %v2357 = vadd.f32 0.0, %v2356
  %2358 = vmatmul.bf16.gmra.mxu0 %v802
  %v2359 = vpop.f32.mrf.mxu0
  %v2360 = vadd.f32 0.0, %v2359
  %v2361 = vpop.f32.mrf.mxu0
  %v2362 = vadd.f32 0.0, %v2361
  %2363 = vmatmul.bf16.gmra.mxu0 %v805
  %v2364 = vpop.f32.mrf.mxu0
  %v2365 = vadd.f32 0.0, %v2364
  %v2366 = vpop.f32.mrf.mxu0
  %v2367 = vadd.f32 0.0, %v2366
  %2368 = vdwg.mxu0
  %2370 = vrot.lane.b32.xlu0 %v2308, 96
  %v2371 = vpop.permute.xlu0 %2370
  %v2373 = vadd.f32 %v2350, %v2371
  %v2374 = vadd.f32 %v2352, %v2371
  %v2375 = vadd.f32 %v2360, %v2371
  %v2376 = vadd.f32 %v2362, %v2371
  %v2377 = vadd.f32 %v2355, %v2371
  %v2378 = vadd.f32 %v2357, %v2371
  %v2379 = vadd.f32 %v2365, %v2371
  %v2380 = vadd.f32 %v2367, %v2371
  %v2381 = vpack.c.bf16 %v2330, %v2330
  %v2382 = vpack.c.bf16 %v2332, %v2332
  %2383 = vxpose.xlu0.b32.start [1/16] %v2373, 128
  %2384 = vxpose.xlu0.b32.cont [2/16] %v2374, 128
  %2385 = vxpose.xlu0.b32.cont [3/16] 0.0, 128
  %2386 = vxpose.xlu0.b32.cont [4/16] 0.0, 128
  %2387 = vxpose.xlu0.b32.cont [5/16] 0.0, 128
  %2388 = vxpose.xlu0.b32.cont [6/16] 0.0, 128
  %2389 = vxpose.xlu0.b32.cont [7/16] 0.0, 128
  %2390 = vxpose.xlu0.b32.cont [8/16] 0.0, 128
  %2391 = vxpose.xlu0.b32.cont [9/16] 0.0, 128
  %2392 = vxpose.xlu0.b32.cont [10/16] 0.0, 128
  %2393 = vxpose.xlu0.b32.cont [11/16] 0.0, 128
  %2394 = vxpose.xlu0.b32.cont [12/16] 0.0, 128
  %2395 = vxpose.xlu0.b32.cont [13/16] 0.0, 128
  %2396 = vxpose.xlu0.b32.cont [14/16] 0.0, 128
  %2397 = vxpose.xlu0.b32.cont [15/16] 0.0, 128
  %2398 = vxpose.xlu0.b32.end [16/16] 0.0, 128
  %v2399 = vpop.trf.xlu0
  %v2400 = vpop.trf.xlu0
  %v2401 = vpop.trf.xlu0
  %v2402 = vpop.trf.xlu0
  %v2403 = vpop.trf.xlu0
  %v2404 = vpop.trf.xlu0
  %v2405 = vpop.trf.xlu0
  %v2406 = vpop.trf.xlu0
  %v2407 = vpop.trf.xlu0
  %v2408 = vpop.trf.xlu0
  %v2409 = vpop.trf.xlu0
  %v2410 = vpop.trf.xlu0
  %v2411 = vpop.trf.xlu0
  %v2412 = vpop.trf.xlu0
  %v2413 = vpop.trf.xlu0
  %v2414 = vpop.trf.xlu0
  %2415 = vxpose.xlu0.b32.start [1/16] %v2375, 128
  %2416 = vxpose.xlu0.b32.cont [2/16] %v2376, 128
  %2417 = vxpose.xlu0.b32.cont [3/16] 0.0, 128
  %2418 = vxpose.xlu0.b32.cont [4/16] 0.0, 128
  %2419 = vxpose.xlu0.b32.cont [5/16] 0.0, 128
  %2420 = vxpose.xlu0.b32.cont [6/16] 0.0, 128
  %2421 = vxpose.xlu0.b32.cont [7/16] 0.0, 128
  %2422 = vxpose.xlu0.b32.cont [8/16] 0.0, 128
  %2423 = vxpose.xlu0.b32.cont [9/16] 0.0, 128
  %2424 = vxpose.xlu0.b32.cont [10/16] 0.0, 128
  %2425 = vxpose.xlu0.b32.cont [11/16] 0.0, 128
  %2426 = vxpose.xlu0.b32.cont [12/16] 0.0, 128
  %2427 = vxpose.xlu0.b32.cont [13/16] 0.0, 128
  %2428 = vxpose.xlu0.b32.cont [14/16] 0.0, 128
  %2429 = vxpose.xlu0.b32.cont [15/16] 0.0, 128
  %2430 = vxpose.xlu0.b32.end [16/16] 0.0, 128
  %v2431 = vpop.trf.xlu0
  %v2432 = vpop.trf.xlu0
  %v2433 = vpop.trf.xlu0
  %v2434 = vpop.trf.xlu0
  %v2435 = vpop.trf.xlu0
  %v2436 = vpop.trf.xlu0
  %v2437 = vpop.trf.xlu0
  %v2438 = vpop.trf.xlu0
  %v2439 = vpop.trf.xlu0
  %v2440 = vpop.trf.xlu0
  %v2441 = vpop.trf.xlu0
  %v2442 = vpop.trf.xlu0
  %v2443 = vpop.trf.xlu0
  %v2444 = vpop.trf.xlu0
  %v2445 = vpop.trf.xlu0
  %v2446 = vpop.trf.xlu0
  %v2447 = vpack.c.bf16 %v2399, %v2399
  %v2448 = vpack.c.bf16 %v2400, %v2400
  %v2449 = vpack.c.bf16 %v2401, %v2401
  %v2450 = vpack.c.bf16 %v2402, %v2402
  %v2451 = vpack.c.bf16 %v2431, %v2431
  %v2452 = vpack.c.bf16 %v2432, %v2432
  %v2453 = vpack.c.bf16 %v2433, %v2433
  %v2454 = vpack.c.bf16 %v2434, %v2434
  %v2455 = vpack.c.bf16 %v2377, %v2377
  %v2456 = vpack.c.bf16 %v2378, %v2378
  %v2457 = vpack.c.bf16 %v2379, %v2379
  %v2458 = vpack.c.bf16 %v2380, %v2380
  %v2460 = vsel %vm204, %v2381, 0
  %v2463 = vsel %vm208, %v2447, 0
  %2465 = vmatpush.bf16.msra.mxu0 0
  %2466 = vmatpush.bf16.msra.mxu0 0
  %2467 = vmatpush.bf16.msra.mxu0 0
  %2468 = vmatpush.bf16.msra.mxu0 0
  %2469 = vmatpush.bf16.msra.mxu0 0
  %2470 = vmatpush.bf16.msra.mxu0 0
  %2471 = vmatpush.bf16.msra.mxu0 0
  %2472 = vmatpush.bf16.msra.mxu0 %v2463
  %2473 = vmatmul.bf16.gmra.mxu0 %v2460
  %v2474 = vpop.f32.mrf.mxu0
  %v2475 = vadd.f32 0.0, %v2474
  %v2476 = vpop.f32.mrf.mxu0
  %2477 = vdwg.mxu0
  %v2479 = vsel %vm204, %v2382, 0
  %v2482 = vsel %vm208, %v2451, 0
  %2484 = vmatpush.bf16.msra.mxu0 0
  %2485 = vmatpush.bf16.msra.mxu0 0
  %2486 = vmatpush.bf16.msra.mxu0 0
  %2487 = vmatpush.bf16.msra.mxu0 0
  %2488 = vmatpush.bf16.msra.mxu0 0
  %2489 = vmatpush.bf16.msra.mxu0 0
  %2490 = vmatpush.bf16.msra.mxu0 0
  %2491 = vmatpush.bf16.msra.mxu0 %v2482
  %2492 = vmatmul.bf16.gmra.mxu0 %v2479
  %v2493 = vpop.f32.mrf.mxu0
  %v2494 = vadd.f32 0.0, %v2493
  %v2495 = vpop.f32.mrf.mxu0
  %2496 = vdwg.mxu0
  %v2497 = vsel %vm668, %v2475, -inf
  %2498 = vmax.xlane.f32.xlu0 %v2497
  %v2499 = vpop.xlane.xlu0 %2498
  %v2500 = vsel %vm668, %v2494, -inf
  %2501 = vmax.xlane.f32.xlu0 %v2500
  %v2502 = vpop.xlane.xlu0 %2501
  %v2503 = vsub.f32 %v2475, %v2499
  %v2504 = vsub.f32 %v2494, %v2502
  %v2505 = vmul.f32 %v2503, 1.442695
  %v2506 = vpow.pop %v2505
  %v2507 = vmul.f32 %v2504, 1.442695
  %v2508 = vpow.pop %v2507
  %v2509 = vsel %vm668, %v2506, 0.0
  %2510 = vadd.xlane.f32.xlu0 %v2509
  %v2511 = vpop.xlane.xlu0 %2510
  %v2512 = vsel %vm668, %v2508, 0.0
  %2513 = vadd.xlane.f32.xlu0 %v2512
  %v2514 = vpop.xlane.xlu0 %2513
  %v2515 = vrcp.pop %v2511
  %v2516 = vrcp.pop %v2514
  %v2517 = vmul.f32 %v2506, %v2515
  %v2518 = vmul.f32 %v2508, %v2516
  %v2519 = vpack.c.bf16 %v2517, %v2517
  %v2520 = vpack.c.bf16 %v2518, %v2518
  %v2523 = vunpack.c.l.b16 %v2455
  %v2524 = vunpack.c.l.b16 %v2456
  %v2525 = vpack.c.b16 %v2524, %v2523
  %2526 = vrot.lane.b32.xlu0 %v2525, 96
  %v2527 = vpop.permute.xlu0 %2526
  %v2530 = vsel %vm668, %v2519, 0
  %2532 = vmatpush.bf16.msra.mxu0 0
  %2533 = vmatpush.bf16.msra.mxu0 0
  %2534 = vmatpush.bf16.msra.mxu0 0
  %2535 = vmatpush.bf16.msra.mxu0 0
  %2536 = vmatpush.bf16.msra.mxu0 0
  %2537 = vmatpush.bf16.msra.mxu0 0
  %2538 = vmatpush.bf16.msra.mxu0 0
  %2539 = vmatpush.bf16.msra.mxu0 %v2527
  %2540 = vmatmul.bf16.gmra.mxu0 %v2530
  %v2541 = vpop.f32.mrf.mxu0
  %v2542 = vadd.f32 0.0, %v2541
  %v2543 = vpop.f32.mrf.mxu0
  %2544 = vdwg.mxu0
  %v2547 = vunpack.c.l.b16 %v2457
  %v2548 = vunpack.c.l.b16 %v2458
  %v2549 = vpack.c.b16 %v2548, %v2547
  %2550 = vrot.lane.b32.xlu0 %v2549, 96
  %v2551 = vpop.permute.xlu0 %2550
  %v2554 = vsel %vm668, %v2520, 0
  %2556 = vmatpush.bf16.msra.mxu0 0
  %2557 = vmatpush.bf16.msra.mxu0 0
  %2558 = vmatpush.bf16.msra.mxu0 0
  %2559 = vmatpush.bf16.msra.mxu0 0
  %2560 = vmatpush.bf16.msra.mxu0 0
  %2561 = vmatpush.bf16.msra.mxu0 0
  %2562 = vmatpush.bf16.msra.mxu0 0
  %2563 = vmatpush.bf16.msra.mxu0 %v2551
  %2564 = vmatmul.bf16.gmra.mxu0 %v2554
  %v2565 = vpop.f32.mrf.mxu0
  %v2566 = vadd.f32 0.0, %v2565
  %v2567 = vpop.f32.mrf.mxu0
  %2568 = vdwg.mxu0
  %v2570 = vunpack.c.l.b16 %v2381
  %v2571 = vpack.c.b16 %v2570, %v2570
  %2572 = vrot.lane.b32.xlu0 %v2571, 120
  %v2573 = vpop.permute.xlu0 %2572
  %v2575 = vsel %vm204, %v2573, 0
  %v2578 = vsel %vm208, %v2448, 0
  %2580 = vmatpush.bf16.msra.mxu0 0
  %2581 = vmatpush.bf16.msra.mxu0 0
  %2582 = vmatpush.bf16.msra.mxu0 0
  %2583 = vmatpush.bf16.msra.mxu0 0
  %2584 = vmatpush.bf16.msra.mxu0 0
  %2585 = vmatpush.bf16.msra.mxu0 0
  %2586 = vmatpush.bf16.msra.mxu0 0
  %2587 = vmatpush.bf16.msra.mxu0 %v2578
  %2588 = vmatmul.bf16.gmra.mxu0 %v2575
  %v2589 = vpop.f32.mrf.mxu0
  %v2590 = vadd.f32 0.0, %v2589
  %v2591 = vpop.f32.mrf.mxu0
  %2592 = vdwg.mxu0
  %v2594 = vunpack.c.l.b16 %v2382
  %v2595 = vpack.c.b16 %v2594, %v2594
  %2596 = vrot.lane.b32.xlu0 %v2595, 120
  %v2597 = vpop.permute.xlu0 %2596
  %v2599 = vsel %vm204, %v2597, 0
  %v2602 = vsel %vm208, %v2452, 0
  %2604 = vmatpush.bf16.msra.mxu0 0
  %2605 = vmatpush.bf16.msra.mxu0 0
  %2606 = vmatpush.bf16.msra.mxu0 0
  %2607 = vmatpush.bf16.msra.mxu0 0
  %2608 = vmatpush.bf16.msra.mxu0 0
  %2609 = vmatpush.bf16.msra.mxu0 0
  %2610 = vmatpush.bf16.msra.mxu0 0
  %2611 = vmatpush.bf16.msra.mxu0 %v2602
  %2612 = vmatmul.bf16.gmra.mxu0 %v2599
  %v2613 = vpop.f32.mrf.mxu0
  %v2614 = vadd.f32 0.0, %v2613
  %v2615 = vpop.f32.mrf.mxu0
  %2616 = vdwg.mxu0
  %v2617 = vsel %vm668, %v2590, -inf
  %2618 = vmax.xlane.f32.xlu0 %v2617
  %v2619 = vpop.xlane.xlu0 %2618
  %v2620 = vsel %vm668, %v2614, -inf
  %2621 = vmax.xlane.f32.xlu0 %v2620
  %v2622 = vpop.xlane.xlu0 %2621
  %v2623 = vsub.f32 %v2590, %v2619
  %v2624 = vsub.f32 %v2614, %v2622
  %v2625 = vmul.f32 %v2623, 1.442695
  %v2626 = vpow.pop %v2625
  %v2627 = vmul.f32 %v2624, 1.442695
  %v2628 = vpow.pop %v2627
  %v2629 = vsel %vm668, %v2626, 0.0
  %2630 = vadd.xlane.f32.xlu0 %v2629
  %v2631 = vpop.xlane.xlu0 %2630
  %v2632 = vsel %vm668, %v2628, 0.0
  %2633 = vadd.xlane.f32.xlu0 %v2632
  %v2634 = vpop.xlane.xlu0 %2633
  %v2635 = vrcp.pop %v2631
  %v2636 = vrcp.pop %v2634
  %v2637 = vmul.f32 %v2626, %v2635
  %v2638 = vmul.f32 %v2628, %v2636
  %v2639 = vpack.c.bf16 %v2637, %v2637
  %v2640 = vpack.c.bf16 %v2638, %v2638
  %2641 = vrot.lane.b32.xlu0 %v2525, 88
  %v2642 = vpop.permute.xlu0 %2641
  %v2645 = vsel %vm668, %v2639, 0
  %2647 = vmatpush.bf16.msra.mxu0 0
  %2648 = vmatpush.bf16.msra.mxu0 0
  %2649 = vmatpush.bf16.msra.mxu0 0
  %2650 = vmatpush.bf16.msra.mxu0 0
  %2651 = vmatpush.bf16.msra.mxu0 0
  %2652 = vmatpush.bf16.msra.mxu0 0
  %2653 = vmatpush.bf16.msra.mxu0 0
  %2654 = vmatpush.bf16.msra.mxu0 %v2642
  %2655 = vmatmul.bf16.gmra.mxu0 %v2645
  %v2656 = vpop.f32.mrf.mxu0
  %v2657 = vadd.f32 0.0, %v2656
  %v2658 = vpop.f32.mrf.mxu0
  %2659 = vdwg.mxu0
  %2660 = vrot.lane.b32.xlu0 %v2549, 88
  %v2661 = vpop.permute.xlu0 %2660
  %v2664 = vsel %vm668, %v2640, 0
  %2666 = vmatpush.bf16.msra.mxu0 0
  %2667 = vmatpush.bf16.msra.mxu0 0
  %2668 = vmatpush.bf16.msra.mxu0 0
  %2669 = vmatpush.bf16.msra.mxu0 0
  %2670 = vmatpush.bf16.msra.mxu0 0
  %2671 = vmatpush.bf16.msra.mxu0 0
  %2672 = vmatpush.bf16.msra.mxu0 0
  %2673 = vmatpush.bf16.msra.mxu0 %v2661
  %2674 = vmatmul.bf16.gmra.mxu0 %v2664
  %v2675 = vpop.f32.mrf.mxu0
  %v2676 = vadd.f32 0.0, %v2675
  %v2677 = vpop.f32.mrf.mxu0
  %2678 = vdwg.mxu0
  %2679 = vrot.lane.b32.xlu0 %v2571, 112
  %v2680 = vpop.permute.xlu0 %2679
  %v2682 = vsel %vm204, %v2680, 0
  %v2685 = vsel %vm208, %v2449, 0
  %2687 = vmatpush.bf16.msra.mxu0 0
  %2688 = vmatpush.bf16.msra.mxu0 0
  %2689 = vmatpush.bf16.msra.mxu0 0
  %2690 = vmatpush.bf16.msra.mxu0 0
  %2691 = vmatpush.bf16.msra.mxu0 0
  %2692 = vmatpush.bf16.msra.mxu0 0
  %2693 = vmatpush.bf16.msra.mxu0 0
  %2694 = vmatpush.bf16.msra.mxu0 %v2685
  %2695 = vmatmul.bf16.gmra.mxu0 %v2682
  %v2696 = vpop.f32.mrf.mxu0
  %v2697 = vadd.f32 0.0, %v2696
  %v2698 = vpop.f32.mrf.mxu0
  %2699 = vdwg.mxu0
  %2700 = vrot.lane.b32.xlu0 %v2595, 112
  %v2701 = vpop.permute.xlu0 %2700
  %v2703 = vsel %vm204, %v2701, 0
  %v2706 = vsel %vm208, %v2453, 0
  %2708 = vmatpush.bf16.msra.mxu0 0
  %2709 = vmatpush.bf16.msra.mxu0 0
  %2710 = vmatpush.bf16.msra.mxu0 0
  %2711 = vmatpush.bf16.msra.mxu0 0
  %2712 = vmatpush.bf16.msra.mxu0 0
  %2713 = vmatpush.bf16.msra.mxu0 0
  %2714 = vmatpush.bf16.msra.mxu0 0
  %2715 = vmatpush.bf16.msra.mxu0 %v2706
  %2716 = vmatmul.bf16.gmra.mxu0 %v2703
  %v2717 = vpop.f32.mrf.mxu0
  %v2718 = vadd.f32 0.0, %v2717
  %v2719 = vpop.f32.mrf.mxu0
  %2720 = vdwg.mxu0
  %v2721 = vsel %vm668, %v2697, -inf
  %2722 = vmax.xlane.f32.xlu0 %v2721
  %v2723 = vpop.xlane.xlu0 %2722
  %v2724 = vsel %vm668, %v2718, -inf
  %2725 = vmax.xlane.f32.xlu0 %v2724
  %v2726 = vpop.xlane.xlu0 %2725
  %v2727 = vsub.f32 %v2697, %v2723
  %v2728 = vsub.f32 %v2718, %v2726
  %v2729 = vmul.f32 %v2727, 1.442695
  %v2730 = vpow.pop %v2729
  %v2731 = vmul.f32 %v2728, 1.442695
  %v2732 = vpow.pop %v2731
  %v2733 = vsel %vm668, %v2730, 0.0
  %2734 = vadd.xlane.f32.xlu0 %v2733
  %v2735 = vpop.xlane.xlu0 %2734
  %v2736 = vsel %vm668, %v2732, 0.0
  %2737 = vadd.xlane.f32.xlu0 %v2736
  %v2738 = vpop.xlane.xlu0 %2737
  %v2739 = vrcp.pop %v2735
  %v2740 = vrcp.pop %v2738
  %v2741 = vmul.f32 %v2730, %v2739
  %v2742 = vmul.f32 %v2732, %v2740
  %v2743 = vpack.c.bf16 %v2741, %v2741
  %v2744 = vpack.c.bf16 %v2742, %v2742
  %2745 = vrot.lane.b32.xlu0 %v2525, 80
  %v2746 = vpop.permute.xlu0 %2745
  %v2749 = vsel %vm668, %v2743, 0
  %2751 = vmatpush.bf16.msra.mxu0 0
  %2752 = vmatpush.bf16.msra.mxu0 0
  %2753 = vmatpush.bf16.msra.mxu0 0
  %2754 = vmatpush.bf16.msra.mxu0 0
  %2755 = vmatpush.bf16.msra.mxu0 0
  %2756 = vmatpush.bf16.msra.mxu0 0
  %2757 = vmatpush.bf16.msra.mxu0 0
  %2758 = vmatpush.bf16.msra.mxu0 %v2746
  %2759 = vmatmul.bf16.gmra.mxu0 %v2749
  %v2760 = vpop.f32.mrf.mxu0
  %v2761 = vadd.f32 0.0, %v2760
  %v2762 = vpop.f32.mrf.mxu0
  %2763 = vdwg.mxu0
  %2764 = vrot.lane.b32.xlu0 %v2549, 80
  %v2765 = vpop.permute.xlu0 %2764
  %v2768 = vsel %vm668, %v2744, 0
  %2770 = vmatpush.bf16.msra.mxu0 0
  %2771 = vmatpush.bf16.msra.mxu0 0
  %2772 = vmatpush.bf16.msra.mxu0 0
  %2773 = vmatpush.bf16.msra.mxu0 0
  %2774 = vmatpush.bf16.msra.mxu0 0
  %2775 = vmatpush.bf16.msra.mxu0 0
  %2776 = vmatpush.bf16.msra.mxu0 0
  %2777 = vmatpush.bf16.msra.mxu0 %v2765
  %2778 = vmatmul.bf16.gmra.mxu0 %v2768
  %v2779 = vpop.f32.mrf.mxu0
  %v2780 = vadd.f32 0.0, %v2779
  %v2781 = vpop.f32.mrf.mxu0
  %2782 = vdwg.mxu0
  %2783 = vrot.lane.b32.xlu0 %v2571, 104
  %v2784 = vpop.permute.xlu0 %2783
  %v2786 = vsel %vm204, %v2784, 0
  %v2789 = vsel %vm208, %v2450, 0
  %2791 = vmatpush.bf16.msra.mxu0 0
  %2792 = vmatpush.bf16.msra.mxu0 0
  %2793 = vmatpush.bf16.msra.mxu0 0
  %2794 = vmatpush.bf16.msra.mxu0 0
  %2795 = vmatpush.bf16.msra.mxu0 0
  %2796 = vmatpush.bf16.msra.mxu0 0
  %2797 = vmatpush.bf16.msra.mxu0 0
  %2798 = vmatpush.bf16.msra.mxu0 %v2789
  %2799 = vmatmul.bf16.gmra.mxu0 %v2786
  %v2800 = vpop.f32.mrf.mxu0
  %v2801 = vadd.f32 0.0, %v2800
  %v2802 = vpop.f32.mrf.mxu0
  %2803 = vdwg.mxu0
  %2804 = vrot.lane.b32.xlu0 %v2595, 104
  %v2805 = vpop.permute.xlu0 %2804
  %v2807 = vsel %vm204, %v2805, 0
  %v2810 = vsel %vm208, %v2454, 0
  %2812 = vmatpush.bf16.msra.mxu0 0
  %2813 = vmatpush.bf16.msra.mxu0 0
  %2814 = vmatpush.bf16.msra.mxu0 0
  %2815 = vmatpush.bf16.msra.mxu0 0
  %2816 = vmatpush.bf16.msra.mxu0 0
  %2817 = vmatpush.bf16.msra.mxu0 0
  %2818 = vmatpush.bf16.msra.mxu0 0
  %2819 = vmatpush.bf16.msra.mxu0 %v2810
  %2820 = vmatmul.bf16.gmra.mxu0 %v2807
  %v2821 = vpop.f32.mrf.mxu0
  %v2822 = vadd.f32 0.0, %v2821
  %v2823 = vpop.f32.mrf.mxu0
  %2824 = vdwg.mxu0
  %v2825 = vsel %vm668, %v2801, -inf
  %2826 = vmax.xlane.f32.xlu0 %v2825
  %v2827 = vpop.xlane.xlu0 %2826
  %v2828 = vsel %vm668, %v2822, -inf
  %2829 = vmax.xlane.f32.xlu0 %v2828
  %v2830 = vpop.xlane.xlu0 %2829
  %v2831 = vsub.f32 %v2801, %v2827
  %v2832 = vsub.f32 %v2822, %v2830
  %v2833 = vmul.f32 %v2831, 1.442695
  %v2834 = vpow.pop %v2833
  %v2835 = vmul.f32 %v2832, 1.442695
  %v2836 = vpow.pop %v2835
  %v2837 = vsel %vm668, %v2834, 0.0
  %2838 = vadd.xlane.f32.xlu0 %v2837
  %v2839 = vpop.xlane.xlu0 %2838
  %v2840 = vsel %vm668, %v2836, 0.0
  %2841 = vadd.xlane.f32.xlu0 %v2840
  %v2842 = vpop.xlane.xlu0 %2841
  %v2843 = vrcp.pop %v2839
  %v2844 = vrcp.pop %v2842
  %v2845 = vmul.f32 %v2834, %v2843
  %v2846 = vmul.f32 %v2836, %v2844
  %v2847 = vpack.c.bf16 %v2845, %v2845
  %v2848 = vpack.c.bf16 %v2846, %v2846
  %2849 = vrot.lane.b32.xlu0 %v2525, 72
  %v2850 = vpop.permute.xlu0 %2849
  %v2853 = vsel %vm668, %v2847, 0
  %2855 = vmatpush.bf16.msra.mxu0 0
  %2856 = vmatpush.bf16.msra.mxu0 0
  %2857 = vmatpush.bf16.msra.mxu0 0
  %2858 = vmatpush.bf16.msra.mxu0 0
  %2859 = vmatpush.bf16.msra.mxu0 0
  %2860 = vmatpush.bf16.msra.mxu0 0
  %2861 = vmatpush.bf16.msra.mxu0 0
  %2862 = vmatpush.bf16.msra.mxu0 %v2850
  %2863 = vmatmul.bf16.gmra.mxu0 %v2853
  %v2864 = vpop.f32.mrf.mxu0
  %v2865 = vadd.f32 0.0, %v2864
  %v2866 = vpop.f32.mrf.mxu0
  %2867 = vdwg.mxu0
  %2868 = vrot.lane.b32.xlu0 %v2549, 72
  %v2869 = vpop.permute.xlu0 %2868
  %v2872 = vsel %vm668, %v2848, 0
  %2874 = vmatpush.bf16.msra.mxu0 0
  %2875 = vmatpush.bf16.msra.mxu0 0
  %2876 = vmatpush.bf16.msra.mxu0 0
  %2877 = vmatpush.bf16.msra.mxu0 0
  %2878 = vmatpush.bf16.msra.mxu0 0
  %2879 = vmatpush.bf16.msra.mxu0 0
  %2880 = vmatpush.bf16.msra.mxu0 0
  %2881 = vmatpush.bf16.msra.mxu0 %v2869
  %2882 = vmatmul.bf16.gmra.mxu0 %v2872
  %v2883 = vpop.f32.mrf.mxu0
  %v2884 = vadd.f32 0.0, %v2883
  %v2885 = vpop.f32.mrf.mxu0
  %2886 = vdwg.mxu0
  %2889 = vrot.lane.b32.xlu0 %v2657, 8
  %v2890 = vpop.permute.xlu0 %2889
  %2891 = vrot.lane.b32.xlu0 %v2676, 8
  %v2892 = vpop.permute.xlu0 %2891
  %2897 = vrot.lane.b32.xlu0 %v2761, 16
  %v2898 = vpop.permute.xlu0 %2897
  %2899 = vrot.lane.b32.xlu0 %v2780, 16
  %v2900 = vpop.permute.xlu0 %2899
  %2905 = vrot.lane.b32.xlu0 %v2865, 24
  %v2906 = vpop.permute.xlu0 %2905
  %2907 = vrot.lane.b32.xlu0 %v2884, 24
  %v2908 = vpop.permute.xlu0 %2907
  %v2911 = vsel %vm204, %v2542, %v2890
  %v2912 = vsel %vm204, %v2566, %v2892
  %v2913 = vsel %vm668, %v2911, %v2898
  %v2914 = vsel %vm668, %v2912, %v2900
  %v2915 = vsel %vm671, %v2913, %v2906
  %v2916 = vsel %vm671, %v2914, %v2908
  %v2917 = vpack.c.bf16 %v2916, %v2915
  %2918 = vrot.lane.b32.xlu0 %v2313, 32
  %v2919 = vpop.permute.xlu0 %2918
  %2920 = vrot.lane.b32.xlu0 %v2314, 32
  %v2921 = vpop.permute.xlu0 %2920
  %v2925 = vsel %vm74, %v2917, 0
  %2927 = vmatpush.bf16.msra.mxu0 0
  %2928 = vmatpush.bf16.msra.mxu0 0
  %2929 = vmatpush.bf16.msra.mxu0 0
  %2930 = vmatpush.bf16.msra.mxu0 0
  %2931 = vmatpush.bf16.msra.mxu0 0
  %2932 = vmatpush.bf16.msra.mxu0 0
  %2933 = vmatpush.bf16.msra.mxu0 %v2921
  %2934 = vmatpush.bf16.msra.mxu0 %v2919
  %2935 = vmatmul.bf16.gmra.mxu0 %v2925
  %v2936 = vpop.f32.mrf.mxu0
  %v2937 = vadd.f32 0.0, %v2936
  %v2938 = vpop.f32.mrf.mxu0
  %v2939 = vadd.f32 0.0, %v2938
  %2940 = vdwg.mxu0
  %v2941 = vperm.slane %v1613, 3
  %v2942 = vadd.f32 %v2937, %v2941
  %v2943 = vadd.f32 %v2939, %v2941
  %v2944 = vadd.f32 %v2303, %v2942
  %v2945 = vadd.f32 %v2304, %v2943
  %v2946 = vsel %vm74, %v2944, 0.0
  %2947 = vadd.xlane.f32.xlu0 %v2946
  %v2948 = vpop.xlane.xlu0 %2947
  %v2949 = vsel %vm74, %v2945, 0.0
  %2950 = vadd.xlane.f32.xlu0 %v2949
  %v2951 = vpop.xlane.xlu0 %2950
  %v2952 = vmul.f32 %v2948, %v715
  %v2953 = vmul.f32 %v2951, %v715
  %v2954 = vsub.f32 %v2944, %v2952
  %v2955 = vsub.f32 %v2945, %v2953
  %v2956 = vmul.f32 %v2954, %v2954
  %v2957 = vmul.f32 %v2955, %v2955
  %v2958 = vsel %vm74, %v2956, 0.0
  %2959 = vadd.xlane.f32.xlu0 %v2958
  %v2960 = vpop.xlane.xlu0 %2959
  %v2961 = vsel %vm74, %v2957, 0.0
  %2962 = vadd.xlane.f32.xlu0 %v2961
  %v2963 = vpop.xlane.xlu0 %2962
  %v2964 = vmul.f32 %v2960, %v715
  %v2965 = vmul.f32 %v2963, %v715
  %v2966 = vadd.f32 %v2964, 1e-05
  %v2967 = vadd.f32 %v2965, 1e-05
  %v2968 = vrsqrt.pop %v2966
  %v2969 = vmul.f32 %v2968, %v2966
  %v2970 = vmul.f32 %v2969, %v2968
  %v2971 = vmul.f32 0.5, %v2970
  %v2972 = vsub.f32 1.5, %v2971
  %v2973 = vmul.f32 %v2968, %v2972
  %vm2974 = vweird.f32 %v2966
  %vm2975 = vweird.f32 %v2968
  %vm2976 = vmor %vm2974, %vm2975
  %v2977 = vsel %vm2976, %v2968, %v2973
  %v2978 = vrsqrt.pop %v2967
  %v2979 = vmul.f32 %v2978, %v2967
  %v2980 = vmul.f32 %v2979, %v2978
  %v2981 = vmul.f32 0.5, %v2980
  %v2982 = vsub.f32 1.5, %v2981
  %v2983 = vmul.f32 %v2978, %v2982
  %vm2984 = vweird.f32 %v2967
  %vm2985 = vweird.f32 %v2978
  %vm2986 = vmor %vm2984, %vm2985
  %v2987 = vsel %vm2986, %v2978, %v2983
  %v2988 = vmul.f32 %v2954, %v2977
  %v2989 = vmul.f32 %v2955, %v2987
  %v2990 = vperm.slane %v1614, 0
  %v2991 = vmul.f32 %v2988, %v2990
  %v2992 = vmul.f32 %v2989, %v2990
  %v2993 = vperm.slane %v1614, 1
  %v2994 = vadd.f32 %v2991, %v2993
  %v2995 = vadd.f32 %v2992, %v2993
  %v2996 = vpack.c.bf16 %v2995, %v2994
  %v2997 = vperm.slane %v1613, 4
  %v3002 = vunpack.c.l.b16 %v1596
  %v3003 = vunpack.c.l.b16 %v1598
  %v3004 = vunpack.c.l.b16 %v1600
  %v3005 = vunpack.c.l.b16 %v1602
  %v3006 = vpack.c.b16 %v3003, %v3002
  %v3007 = vpack.c.b16 %v3005, %v3004
  %v3011 = vsel %vm74, %v2996, 0
  %3013 = vmatpush.bf16.msra.mxu0 0
  %3014 = vmatpush.bf16.msra.mxu0 0
  %3015 = vmatpush.bf16.msra.mxu0 0
  %3016 = vmatpush.bf16.msra.mxu0 0
  %3017 = vmatpush.bf16.msra.mxu0 0
  %3018 = vmatpush.bf16.msra.mxu0 0
  %3019 = vmatpush.bf16.msra.mxu0 %v3007
  %3020 = vmatpush.bf16.msra.mxu0 %v3006
  %3021 = vmatmul.bf16.gmra.mxu0 %v3011
  %v3022 = vpop.f32.mrf.mxu0
  %v3023 = vadd.f32 %v2997, %v3022
  %v3024 = vpop.f32.mrf.mxu0
  %v3025 = vadd.f32 %v2997, %v3024
  %3026 = vdwg.mxu0
  %v3027 = vmax.f32 %v3023, 0.0
  %v3028 = vmax.f32 %v3025, 0.0
  %v3029 = vpack.c.bf16 %v3028, %v3027
  %v3030 = vperm.slane %v1613, 5
  %v3039 = vunpack.c.l.b16 %v1604
  %v3040 = vunpack.c.l.b16 %v1605
  %v3041 = vunpack.c.l.b16 %v1606
  %v3042 = vunpack.c.l.b16 %v1607
  %v3043 = vunpack.c.l.b16 %v1608
  %v3044 = vunpack.c.l.b16 %v1609
  %v3045 = vunpack.c.l.b16 %v1610
  %v3046 = vunpack.c.l.b16 %v1611
  %v3047 = vpack.c.b16 %v3040, %v3039
  %v3048 = vpack.c.b16 %v3042, %v3041
  %v3049 = vpack.c.b16 %v3044, %v3043
  %v3050 = vpack.c.b16 %v3046, %v3045
  %v3056 = vsel %vm1522, %v3029, 0
  %3058 = vmatpush.bf16.msra.mxu0 0
  %3059 = vmatpush.bf16.msra.mxu0 0
  %3060 = vmatpush.bf16.msra.mxu0 0
  %3061 = vmatpush.bf16.msra.mxu0 0
  %3062 = vmatpush.bf16.msra.mxu0 %v3050
  %3063 = vmatpush.bf16.msra.mxu0 %v3049
  %3064 = vmatpush.bf16.msra.mxu0 %v3048
  %3065 = vmatpush.bf16.msra.mxu0 %v3047
  %3066 = vmatmul.bf16.gmra.mxu0 %v3056
  %v3067 = vpop.f32.mrf.mxu0
  %v3068 = vadd.f32 %v3030, %v3067
  %v3069 = vpop.f32.mrf.mxu0
  %v3070 = vadd.f32 %v3030, %v3069
  %3071 = vdwg.mxu0
  %v3072 = vadd.f32 %v2994, %v3068
  %v3073 = vadd.f32 %v2995, %v3070
  %v3074 = vsel %vm74, %v3072, 0.0
  %3075 = vadd.xlane.f32.xlu0 %v3074
  %v3076 = vpop.xlane.xlu0 %3075
  %v3077 = vsel %vm74, %v3073, 0.0
  %3078 = vadd.xlane.f32.xlu0 %v3077
  %v3079 = vpop.xlane.xlu0 %3078
  %v3080 = vmul.f32 %v3076, %v715
  %v3081 = vmul.f32 %v3079, %v715
  %v3082 = vsub.f32 %v3072, %v3080
  %v3083 = vsub.f32 %v3073, %v3081
  %v3084 = vmul.f32 %v3082, %v3082
  %v3085 = vmul.f32 %v3083, %v3083
  %v3086 = vsel %vm74, %v3084, 0.0
  %3087 = vadd.xlane.f32.xlu0 %v3086
  %v3088 = vpop.xlane.xlu0 %3087
  %v3089 = vsel %vm74, %v3085, 0.0
  %3090 = vadd.xlane.f32.xlu0 %v3089
  %v3091 = vpop.xlane.xlu0 %3090
  %v3092 = vmul.f32 %v3088, %v715
  %v3093 = vmul.f32 %v3091, %v715
  %v3094 = vadd.f32 %v3092, 1e-05
  %v3095 = vadd.f32 %v3093, 1e-05
  %v3096 = vrsqrt.pop %v3094
  %v3097 = vmul.f32 %v3096, %v3094
  %v3098 = vmul.f32 %v3097, %v3096
  %v3099 = vmul.f32 0.5, %v3098
  %v3100 = vsub.f32 1.5, %v3099
  %v3101 = vmul.f32 %v3096, %v3100
  %vm3102 = vweird.f32 %v3094
  %vm3103 = vweird.f32 %v3096
  %vm3104 = vmor %vm3102, %vm3103
  %v3105 = vsel %vm3104, %v3096, %v3101
  %v3106 = vrsqrt.pop %v3095
  %v3107 = vmul.f32 %v3106, %v3095
  %v3108 = vmul.f32 %v3107, %v3106
  %v3109 = vmul.f32 0.5, %v3108
  %v3110 = vsub.f32 1.5, %v3109
  %v3111 = vmul.f32 %v3106, %v3110
  %vm3112 = vweird.f32 %v3095
  %vm3113 = vweird.f32 %v3106
  %vm3114 = vmor %vm3112, %vm3113
  %v3115 = vsel %vm3114, %v3106, %v3111
  %v3116 = vmul.f32 %v3082, %v3105
  %v3117 = vmul.f32 %v3083, %v3115
  %v3118 = vperm.slane %v1614, 2
  %v3119 = vmul.f32 %v3116, %v3118
  %v3120 = vmul.f32 %v3117, %v3118
  %v3121 = vperm.slane %v1614, 3
  %v3122 = vadd.f32 %v3119, %v3121
  %v3123 = vadd.f32 %v3120, %v3121
  %s3124 = scalar_lea.vmem %s6, 16
  %3125 = vst.msk [vmem:[%s3124] sm:$0xff] %vm74, %v3122
  %3126 = vst.msk [vmem:[%s3124 + $0x8] sm:$0xff] %vm74, %v3123
  // Predicated region
  $region26: #{transformer_decoder.1} parent=0 // pred_check
    _
  $region27: #{transformer_decoder.1} parent=0 // pred_check_branch
    %3128 = sbr.rel (0) target = $region29
  $region28: #{transformer_decoder.1} parent=0 // pred_region
    _
  $region29: #{transformer_decoder.1} parent=0 // pred_fallthru
    _
  // Predicated region
  $region30: #{transformer_decoder.1} parent=0 // pred_check
    _
  $region31: #{transformer_decoder.1} parent=0 // pred_check_branch
    %3130 = sbr.rel (0) target = $region33
  $region32: #{transformer_decoder.1} parent=0 // pred_region
    _
  $region33: #{transformer_decoder.1} parent=0 // pred_fallthru
    _

</llo_original>
